<compile_context>
chip_gen: v6e
topology: v6e:2x2x1
jax: 0.10.0
libtpu: 0.0.40
codegen_flags: <defaults>
</compile_context>

<pallas_src>
import jax
import jax.numpy as jnp
from jax.experimental import pallas as pl
from jax.experimental.pallas import tpu as pltpu

K_IN = 28 * 28      # 784 logical input features
K_PAD = 896         # 7 * 128, lane-aligned K for fc1
H = 512             # hidden width
N_OUT = 10          # logical logits
N_PAD = 128         # lane-dense padded output width
TM = 256            # batch tile (multiple of 8, fills MXU M dim, amortizes grid-step cost)


def mlp_kernel(x_ref, w1_ref, b1_ref, w2_ref, b2_ref, w3_ref, b3_ref, o_ref):
    # x_ref: (TM, K_PAD) bf16; w*: bf16; b*: f32; o_ref: (TM, N_PAD) f32.
    x = x_ref[...]
    h1 = jnp.dot(x, w1_ref[...], preferred_element_type=jnp.float32) + b1_ref[...]
    h1 = jnp.maximum(h1, 0.0).astype(jnp.bfloat16)
    # dropout (p=0.2) -> identity in eval mode
    h2 = jnp.dot(h1, w2_ref[...], preferred_element_type=jnp.float32) + b2_ref[...]
    h2 = jnp.maximum(h2, 0.0).astype(jnp.bfloat16)
    # dropout (p=0.2) -> identity in eval mode
    out = jnp.dot(h2, w3_ref[...], preferred_element_type=jnp.float32) + b3_ref[...]
    o_ref[...] = out


def chota_forward(x, packed_params):
    """x: [B, 1, 28, 28] or [B, 784]; returns logits [B, 10] (f32)."""
    w1, b1, w2, b2, w3, b3 = packed_params
    xb = x.reshape(-1, K_IN)
    B = xb.shape[0]
    B_pad = ((B + TM - 1) // TM) * TM

    # Pad batch up to a multiple of TM and K up to 896; cast to bf16 (halves HBM bytes).
    xp = jnp.zeros((B_pad, K_PAD), jnp.bfloat16)
    xp = xp.at[:B, :K_IN].set(xb.astype(jnp.bfloat16))

    grid = (B_pad // TM,)
    flops = 2 * B_pad * (K_PAD * H + H * H + H * N_PAD)
    bytes_accessed = (
        xp.size * 2
        + (w1.size + w2.size + w3.size) * 2
        + (b1.size + b2.size + b3.size) * 4
        + B_pad * N_PAD * 4
    )

    out = pl.pallas_call(
        mlp_kernel,
        out_shape=jax.ShapeDtypeStruct((B_pad, N_PAD), jnp.float32),
        grid=grid,
        in_specs=[
            pl.BlockSpec((TM, K_PAD), lambda i: (i, 0)),     # x: streamed per grid step
            pl.BlockSpec((K_PAD, H), lambda i: (0, 0)),      # w1: resident
            pl.BlockSpec((1, H), lambda i: (0, 0)),          # b1: resident
            pl.BlockSpec((H, H), lambda i: (0, 0)),          # w2: resident
            pl.BlockSpec((1, H), lambda i: (0, 0)),          # b2: resident
            pl.BlockSpec((H, N_PAD), lambda i: (0, 0)),      # w3 (padded): resident
            pl.BlockSpec((1, N_PAD), lambda i: (0, 0)),      # b3 (padded): resident
        ],
        out_specs=pl.BlockSpec((TM, N_PAD), lambda i: (i, 0)),  # lane-dense 128-wide store
        compiler_params=pltpu.CompilerParams(
            dimension_semantics=("parallel",),               # shard batch across TCs on v7x
            vmem_limit_bytes=32 * 1024 * 1024,               # explicit budget, safe on v5e/v6e/v7x
        ),
        cost_estimate=pl.CostEstimate(
            flops=flops, transcendentals=0, bytes_accessed=bytes_accessed
        ),
    )(xp, w1, b1, w2, b2, w3, b3)

    return out[:B, :N_OUT]


def init_params(key):
    """Deterministic init matching nn.Linear shapes (weights stored as [in, out], f32)."""
    ks = jax.random.split(key, 6)

    def linear(kw, kb, fan_in, fan_out):
        bound = 1.0 / jnp.sqrt(fan_in)
        w = jax.random.uniform(kw, (fan_in, fan_out), jnp.float32, -bound, bound)
        b = jax.random.uniform(kb, (1, fan_out), jnp.float32, -bound, bound)
        return w, b

    w1, b1 = linear(ks[0], ks[1], K_IN, H)
    w2, b2 = linear(ks[2], ks[3], H, H)
    w3, b3 = linear(ks[4], ks[5], H, N_OUT)
    return (w1, b1, w2, b2, w3, b3)


def pack_params(params):
    """Pad K of w1 (784->896) and N of w3/b3 (10->128) with zeros; cast weights to bf16."""
    w1, b1, w2, b2, w3, b3 = params
    w1p = jnp.zeros((K_PAD, H), jnp.float32).at[:K_IN, :].set(w1).astype(jnp.bfloat16)
    w2p = w2.astype(jnp.bfloat16)
    w3p = jnp.zeros((H, N_PAD), jnp.float32).at[:, :N_OUT].set(w3).astype(jnp.bfloat16)
    b3p = jnp.zeros((1, N_PAD), jnp.float32).at[:, :N_OUT].set(b3)
    return (w1p, b1, w2p, b2, w3p, b3p)


def chota_reference(x, packed_params):
    """Pure-JAX reference mirroring the kernel's bf16-in / f32-accumulate math."""
    w1, b1, w2, b2, w3, b3 = packed_params
    xb = x.reshape(-1, K_IN)
    xp = jnp.zeros((xb.shape[0], K_PAD), jnp.bfloat16).at[:, :K_IN].set(
        xb.astype(jnp.bfloat16)
    )
    h1 = jnp.maximum(jnp.dot(xp, w1, preferred_element_type=jnp.float32) + b1, 0.0)
    h1 = h1.astype(jnp.bfloat16)
    h2 = jnp.maximum(jnp.dot(h1, w2, preferred_element_type=jnp.float32) + b2, 0.0)
    h2 = h2.astype(jnp.bfloat16)
    out = jnp.dot(h2, w3, preferred_element_type=jnp.float32) + b3
    return out[:, :N_OUT]


if __name__ == "__main__":
    key = jax.random.PRNGKey(0)
    k_x, k_p = jax.random.split(key)

    # Small MNIST-like batch: [B, 1, 28, 28]
    x = jax.random.normal(k_x, (8, 1, 28, 28), jnp.float32)
    params = init_params(k_p)
    packed = pack_params(params)

    out = chota_forward(x, packed)
    out = jax.block_until_ready(out)

    ref = chota_reference(x, packed)
    assert out.shape == (8, 10)
    assert jnp.allclose(out, ref, atol=2e-2, rtol=2e-2), (
        float(jnp.max(jnp.abs(out - ref)))
    )

    print("KERNEL_OK")
</pallas_src>

<mosaic_0001>
module attributes {stable_mosaic.version = 11 : i64} {
  func.func @mlp_kernel(%arg0: i32, %arg1: memref<256x896xbf16, #tpu.memory_space<vmem>>, %arg2: memref<896x512xbf16, #tpu.memory_space<vmem>>, %arg3: memref<1x512xf32, #tpu.memory_space<vmem>>, %arg4: memref<512x512xbf16, #tpu.memory_space<vmem>>, %arg5: memref<1x512xf32, #tpu.memory_space<vmem>>, %arg6: memref<512x128xbf16, #tpu.memory_space<vmem>>, %arg7: memref<1x128xf32, #tpu.memory_space<vmem>>, %arg8: memref<256x128xf32, #tpu.memory_space<vmem>>) attributes {dimension_semantics = [#tpu.dimension_semantics<parallel>], iteration_bounds = array<i64: 1>, scalar_prefetch = 0 : i64, scratch_operands = 0 : i64, tpu.core_type = #tpu.core_type<tc>, window_params = [{transform_indices = @transform_0, window_bounds = array<i64: 256, 896>}, {pipeline_mode = #tpu.pipeline_mode<synchronous>, transform_indices = @transform_1, window_bounds = array<i64: 896, 512>}, {pipeline_mode = #tpu.pipeline_mode<synchronous>, transform_indices = @transform_2, window_bounds = array<i64: 1, 512>}, {pipeline_mode = #tpu.pipeline_mode<synchronous>, transform_indices = @transform_3, window_bounds = array<i64: 512, 512>}, {pipeline_mode = #tpu.pipeline_mode<synchronous>, transform_indices = @transform_4, window_bounds = array<i64: 1, 512>}, {pipeline_mode = #tpu.pipeline_mode<synchronous>, transform_indices = @transform_5, window_bounds = array<i64: 512, 128>}, {pipeline_mode = #tpu.pipeline_mode<synchronous>, transform_indices = @transform_6, window_bounds = array<i64: 1, 128>}, {transform_indices = @transform_7, window_bounds = array<i64: 256, 128>}]} {
    %c0 = arith.constant 0 : index
    %c0_0 = arith.constant 0 : index
    %0 = vector.load %arg1[%c0, %c0_0] : memref<256x896xbf16, #tpu.memory_space<vmem>>, vector<256x896xbf16>
    %c0_1 = arith.constant 0 : index
    %c0_2 = arith.constant 0 : index
    %1 = vector.load %arg2[%c0_1, %c0_2] : memref<896x512xbf16, #tpu.memory_space<vmem>>, vector<896x512xbf16>
    %cst = arith.constant dense<0.000000e+00> : vector<256x512xf32>
    %2 = tpu.matmul %0, %1, %cst {dimension_numbers = #tpu.dot_dimension_numbers<[1], [0], [0], [1], [0, 0, 1, 1], [], []>} : vector<256x896xbf16>, vector<896x512xbf16>, vector<256x512xf32> -> vector<256x512xf32>
    %c0_3 = arith.constant 0 : index
    %c0_4 = arith.constant 0 : index
    %3 = vector.load %arg3[%c0_3, %c0_4] : memref<1x512xf32, #tpu.memory_space<vmem>>, vector<1x512xf32>
    %4 = vector.broadcast %3 : vector<1x512xf32> to vector<256x512xf32>
    %5 = arith.addf %2, %4 : vector<256x512xf32>
    %cst_5 = arith.constant 0.000000e+00 : f32
    %6 = vector.broadcast %cst_5 : f32 to vector<256x512xf32>
    %7 = arith.maximumf %5, %6 : vector<256x512xf32>
    %8 = arith.truncf %7 : vector<256x512xf32> to vector<256x512xbf16>
    %c0_6 = arith.constant 0 : index
    %c0_7 = arith.constant 0 : index
    %9 = vector.load %arg4[%c0_6, %c0_7] : memref<512x512xbf16, #tpu.memory_space<vmem>>, vector<512x512xbf16>
    %cst_8 = arith.constant dense<0.000000e+00> : vector<256x512xf32>
    %10 = tpu.matmul %8, %9, %cst_8 {dimension_numbers = #tpu.dot_dimension_numbers<[1], [0], [0], [1], [0, 0, 1, 1], [], []>} : vector<256x512xbf16>, vector<512x512xbf16>, vector<256x512xf32> -> vector<256x512xf32>
    %c0_9 = arith.constant 0 : index
    %c0_10 = arith.constant 0 : index
    %11 = vector.load %arg5[%c0_9, %c0_10] : memref<1x512xf32, #tpu.memory_space<vmem>>, vector<1x512xf32>
    %12 = vector.broadcast %11 : vector<1x512xf32> to vector<256x512xf32>
    %13 = arith.addf %10, %12 : vector<256x512xf32>
    %cst_11 = arith.constant 0.000000e+00 : f32
    %14 = vector.broadcast %cst_11 : f32 to vector<256x512xf32>
    %15 = arith.maximumf %13, %14 : vector<256x512xf32>
    %16 = arith.truncf %15 : vector<256x512xf32> to vector<256x512xbf16>
    %c0_12 = arith.constant 0 : index
    %c0_13 = arith.constant 0 : index
    %17 = vector.load %arg6[%c0_12, %c0_13] : memref<512x128xbf16, #tpu.memory_space<vmem>>, vector<512x128xbf16>
    %cst_14 = arith.constant dense<0.000000e+00> : vector<256x128xf32>
    %18 = tpu.matmul %16, %17, %cst_14 {dimension_numbers = #tpu.dot_dimension_numbers<[1], [0], [0], [1], [0, 0, 1, 1], [], []>} : vector<256x512xbf16>, vector<512x128xbf16>, vector<256x128xf32> -> vector<256x128xf32>
    %c0_15 = arith.constant 0 : index
    %c0_16 = arith.constant 0 : index
    %19 = vector.load %arg7[%c0_15, %c0_16] : memref<1x128xf32, #tpu.memory_space<vmem>>, vector<1x128xf32>
    %20 = vector.broadcast %19 : vector<1x128xf32> to vector<256x128xf32>
    %21 = arith.addf %18, %20 : vector<256x128xf32>
    %c0_17 = arith.constant 0 : index
    %c0_18 = arith.constant 0 : index
    %22 = vector.load %arg8[%c0_17, %c0_18] : memref<256x128xf32, #tpu.memory_space<vmem>>, vector<256x128xf32>
    tpu.vector_store %arg8[%c0_17, %c0_18], %21 {strides = array<i32>} : memref<256x128xf32, #tpu.memory_space<vmem>>, vector<256x128xf32>,
    return
  }
  func.func @transform_0(%arg0: i32) -> (i32, i32) {
    %c0_i32 = arith.constant 0 : i32
    %c0_i32_0 = arith.constant 0 : i32
    return %arg0, %c0_i32 : i32, i32
  }
  func.func @transform_1(%arg0: i32) -> (i32, i32) {
    %c0_i32 = arith.constant 0 : i32
    %c0_i32_0 = arith.constant 0 : i32
    %c0_i32_1 = arith.constant 0 : i32
    return %c0_i32, %c0_i32_0 : i32, i32
  }
  func.func @transform_2(%arg0: i32) -> (i32, i32) {
    %c0_i32 = arith.constant 0 : i32
    %c0_i32_0 = arith.constant 0 : i32
    %c0_i32_1 = arith.constant 0 : i32
    return %c0_i32, %c0_i32_0 : i32, i32
  }
  func.func @transform_3(%arg0: i32) -> (i32, i32) {
    %c0_i32 = arith.constant 0 : i32
    %c0_i32_0 = arith.constant 0 : i32
    %c0_i32_1 = arith.constant 0 : i32
    return %c0_i32, %c0_i32_0 : i32, i32
  }
  func.func @transform_4(%arg0: i32) -> (i32, i32) {
    %c0_i32 = arith.constant 0 : i32
    %c0_i32_0 = arith.constant 0 : i32
    %c0_i32_1 = arith.constant 0 : i32
    return %c0_i32, %c0_i32_0 : i32, i32
  }
  func.func @transform_5(%arg0: i32) -> (i32, i32) {
    %c0_i32 = arith.constant 0 : i32
    %c0_i32_0 = arith.constant 0 : i32
    %c0_i32_1 = arith.constant 0 : i32
    return %c0_i32, %c0_i32_0 : i32, i32
  }
  func.func @transform_6(%arg0: i32) -> (i32, i32) {
    %c0_i32 = arith.constant 0 : i32
    %c0_i32_0 = arith.constant 0 : i32
    %c0_i32_1 = arith.constant 0 : i32
    return %c0_i32, %c0_i32_0 : i32, i32
  }
  func.func @transform_7(%arg0: i32) -> (i32, i32) {
    %c0_i32 = arith.constant 0 : i32
    %c0_i32_0 = arith.constant 0 : i32
    return %arg0, %c0_i32 : i32, i32
  }
}

</mosaic_0001>

<llo_original>
// kernel: tpu_custom_call.1
$region0: #{tpu_custom_call.1}
  #allocation0 [shape = 'u32[]', space=smem, size = 0x4, offset = 0x4, fixed_abs, tag = 'smem constant byte address 0x4 - core index']
  #allocation1 [shape = 'u32[144,128]{1,0:T(1,128)}', space=vmem, size = 0x12000, scoped, tag = 'internal scratch']
  %s0 = inlined_call_operand.hbm [shape: bf16[256,896], index: 0, kind: input, shape index: {}]
  %s1 = inlined_call_operand.hbm [shape: bf16[896,512], index: 1, kind: input, shape index: {}]
  %s2 = inlined_call_operand.hbm [shape: f32[1,512], index: 2, kind: input, shape index: {}]
  %s3 = inlined_call_operand.hbm [shape: bf16[512,512], index: 3, kind: input, shape index: {}]
  %s4 = inlined_call_operand.vmem [shape: f32[1,512], index: 4, kind: input, shape index: {}]
  %s5 = inlined_call_operand.hbm [shape: bf16[512,128], index: 5, kind: input, shape index: {}]
  %s6 = inlined_call_operand.vmem [shape: f32[1,128], index: 6, kind: input, shape index: {}]
  %s7 = inlined_call_operand.hbm [shape: f32[256,128], index: 7, kind: output, shape index: {}]
  %s8 = sld [smem:[#allocation0]]
  $region58: #{tpu_custom_call.1} parent=0
    _
  %s10 = ssub.s32 1, %s8
  %s11 = scalar_select 0, %s10, %s8
  $region1: #{tpu_custom_call.1} parent=0
    #allocation2 [shape = 'u8[458752]{0}', space=vmem, size = 0x70000, scoped, tag = 'input window, operand 0, single buffered']
    #allocation3 [shape = 's32[1]{0}', space=sflag, size = 0x4, scoped, tag = 'scoped memory for tpu_custom_call.1']
    #allocation4 [shape = 's32[1]{0}', space=sflag, size = 0x4, scoped, tag = 'scoped memory for tpu_custom_call.1']
    #allocation5 [shape = 'u8[917504]{0}', space=vmem, size = 0xe0000, scoped, tag = 'input window, operand 1, single buffered']
    #allocation6 [shape = 's32[1]{0}', space=sflag, size = 0x4, scoped, tag = 'scoped memory for tpu_custom_call.1']
    #allocation7 [shape = 'u8[2048]{0}', space=vmem, size = 0x800, scoped, tag = 'input window, operand 2, single buffered']
    #allocation8 [shape = 'u8[524288]{0}', space=vmem, size = 0x80000, scoped, tag = 'input window, operand 3, single buffered']
    #allocation9 [shape = 's32[1]{0}', space=sflag, size = 0x4, scoped, tag = 'scoped memory for tpu_custom_call.1']
    #allocation10 [shape = 'u8[131072]{0}', space=vmem, size = 0x20000, scoped, tag = 'input window, operand 5, single buffered']
    #allocation11 [shape = 'u8[131072]{0}', space=vmem, size = 0x20000, scoped, tag = 'output window, operand 0, single buffered']
    %12 = vsyncpa [#allocation3], 0
    %13 = vsyncpa [#allocation6], 0
    %14 = vsyncpa [#allocation9], 0
    %15 = vsyncpa [#allocation4], 0
    // Predicated region
    $region2: #{tpu_custom_call.1} parent=1 // pred_check
      _
    $region3: #{tpu_custom_call.1} parent=1 // pred_check_branch
      %17 = sbr.rel (0) target = $region5
    $region4: #{tpu_custom_call.1} parent=1 // pred_region
      %s19 = ssub.s32 14336, 14336
      %20 = vsyncadd [#allocation3], %s19
      %s21 = sshll.u32 [#allocation2], 4
      %s22 = int_to_ptr.vmem [resolvable:$true] %s21
      %27 = dma.hbm_to_vmem [thread:$0]  %s0, 14336, %s22, [#allocation3], 448, 448, 28
    $region5: #{tpu_custom_call.1} parent=1 // pred_fallthru
      _
    // Predicated region
    $region6: #{tpu_custom_call.1} parent=1 // pred_check
      _
    $region7: #{tpu_custom_call.1} parent=1 // pred_check_branch
      %29 = sbr.rel (0) target = $region9
    $region8: #{tpu_custom_call.1} parent=1 // pred_region
      %s31 = ssub.s32 28672, 28672
      %32 = vsyncadd [#allocation6], %s31
      %s33 = sshll.u32 [#allocation5], 4
      %s34 = int_to_ptr.vmem [resolvable:$true] %s33
      %39 = dma.hbm_to_vmem [thread:$0]  %s1, 28672, %s34, [#allocation6], 256, 256, 16
    $region9: #{tpu_custom_call.1} parent=1 // pred_fallthru
      _
    // Predicated region
    $region10: #{tpu_custom_call.1} parent=1 // pred_check
      _
    $region11: #{tpu_custom_call.1} parent=1 // pred_check_branch
      %41 = sbr.rel (0) target = $region13
    $region12: #{tpu_custom_call.1} parent=1 // pred_region
      %s43 = ssub.s32 64, 64
      %44 = vsyncadd [#allocation6], %s43
      %s46 = sshll.u32 [#allocation7], 4
      %s47 = int_to_ptr.vmem [resolvable:$true] %s46
      %49 = dma.hbm_to_vmem [thread:$0]  %s2, 64, %s47, [#allocation6]
    $region13: #{tpu_custom_call.1} parent=1 // pred_fallthru
      _
    // Predicated region
    $region14: #{tpu_custom_call.1} parent=1 // pred_check
      _
    $region15: #{tpu_custom_call.1} parent=1 // pred_check_branch
      %51 = sbr.rel (0) target = $region17
    $region16: #{tpu_custom_call.1} parent=1 // pred_region
      %s53 = ssub.s32 16384, 16384
      %54 = vsyncadd [#allocation9], %s53
      %s55 = sshll.u32 [#allocation8], 4
      %s56 = int_to_ptr.vmem [resolvable:$true] %s55
      %61 = dma.hbm_to_vmem [thread:$0]  %s3, 16384, %s56, [#allocation9], 256, 256, 16
    $region17: #{tpu_custom_call.1} parent=1 // pred_fallthru
      _
    // Predicated region
    $region18: #{tpu_custom_call.1} parent=1 // pred_check
      _
    $region19: #{tpu_custom_call.1} parent=1 // pred_check_branch
      %63 = sbr.rel (0) target = $region21
    $region20: #{tpu_custom_call.1} parent=1 // pred_region
      _
    $region21: #{tpu_custom_call.1} parent=1 // pred_fallthru
      _
    // Predicated region
    $region22: #{tpu_custom_call.1} parent=1 // pred_check
      _
    $region23: #{tpu_custom_call.1} parent=1 // pred_check_branch
      %65 = sbr.rel (0) target = $region25
    $region24: #{tpu_custom_call.1} parent=1 // pred_region
      %s67 = ssub.s32 4096, 4096
      %68 = vsyncadd [#allocation9], %s67
      %s69 = sshll.u32 [#allocation10], 4
      %s70 = int_to_ptr.vmem [resolvable:$true] %s69
      %75 = dma.hbm_to_vmem [thread:$0]  %s5, 4096, %s70, [#allocation9], 64, 64, 4
    $region25: #{tpu_custom_call.1} parent=1 // pred_fallthru
      _
    // Predicated region
    $region26: #{tpu_custom_call.1} parent=1 // pred_check
      _
    $region27: #{tpu_custom_call.1} parent=1 // pred_check_branch
      %77 = sbr.rel (0) target = $region29
    $region28: #{tpu_custom_call.1} parent=1 // pred_region
      _
    $region29: #{tpu_custom_call.1} parent=1 // pred_fallthru
      _
    // Predicated region
    $region30: #{tpu_custom_call.1} parent=1 // pred_check
      _
    $region31: #{tpu_custom_call.1} parent=1 // pred_check_branch
      %79 = sbr.rel (0) target = $region33
    $region32: #{tpu_custom_call.1} parent=1 // pred_region
      %80 = dma.done [#allocation3], 14336
    $region33: #{tpu_custom_call.1} parent=1 // pred_fallthru
      _
    // Predicated region
    $region34: #{tpu_custom_call.1} parent=1 // pred_check
      _
    $region35: #{tpu_custom_call.1} parent=1 // pred_check_branch
      %82 = sbr.rel (0) target = $region37
    $region36: #{tpu_custom_call.1} parent=1 // pred_region
      %83 = dma.done [#allocation6], 28672
    $region37: #{tpu_custom_call.1} parent=1 // pred_fallthru
      _
    // Predicated region
    $region38: #{tpu_custom_call.1} parent=1 // pred_check
      _
    $region39: #{tpu_custom_call.1} parent=1 // pred_check_branch
      %85 = sbr.rel (0) target = $region41
    $region40: #{tpu_custom_call.1} parent=1 // pred_region
      %86 = dma.done [#allocation6], 64
    $region41: #{tpu_custom_call.1} parent=1 // pred_fallthru
      _
    // Predicated region
    $region42: #{tpu_custom_call.1} parent=1 // pred_check
      _
    $region43: #{tpu_custom_call.1} parent=1 // pred_check_branch
      %88 = sbr.rel (0) target = $region45
    $region44: #{tpu_custom_call.1} parent=1 // pred_region
      %89 = dma.done [#allocation9], 16384
    $region45: #{tpu_custom_call.1} parent=1 // pred_fallthru
      _
    // Predicated region
    $region46: #{tpu_custom_call.1} parent=1 // pred_check
      _
    $region47: #{tpu_custom_call.1} parent=1 // pred_check_branch
      %91 = sbr.rel (0) target = $region49
    $region48: #{tpu_custom_call.1} parent=1 // pred_region
      %92 = dma.done [#allocation9], 4096
    $region49: #{tpu_custom_call.1} parent=1 // pred_fallthru
      _
    %v94 = vld [vmem:[#allocation2] sm:$0xff]
    %v95 = vld [vmem:[#allocation2 + $0x8] sm:$0xff]
    %v96 = vld [vmem:[#allocation2 + $0x10] sm:$0xff]
    %v97 = vld [vmem:[#allocation2 + $0x18] sm:$0xf]
    %v98 = vld [vmem:[#allocation2 + $0x1c] sm:$0xff]
    %v99 = vld [vmem:[#allocation2 + $0x24] sm:$0xff]
    %v100 = vld [vmem:[#allocation2 + $0x2c] sm:$0xff]
    %v101 = vld [vmem:[#allocation2 + $0x34] sm:$0xf]
    %v102 = vld [vmem:[#allocation2 + $0x38] sm:$0xff]
    %v103 = vld [vmem:[#allocation2 + $0x40] sm:$0xff]
    %v104 = vld [vmem:[#allocation2 + $0x48] sm:$0xff]
    %v105 = vld [vmem:[#allocation2 + $0x50] sm:$0xf]
    %v106 = vld [vmem:[#allocation2 + $0x54] sm:$0xff]
    %v107 = vld [vmem:[#allocation2 + $0x5c] sm:$0xff]
    %v108 = vld [vmem:[#allocation2 + $0x64] sm:$0xff]
    %v109 = vld [vmem:[#allocation2 + $0x6c] sm:$0xf]
    %v110 = vld [vmem:[#allocation2 + $0x70] sm:$0xff]
    %v111 = vld [vmem:[#allocation2 + $0x78] sm:$0xff]
    %v112 = vld [vmem:[#allocation2 + $0x80] sm:$0xff]
    %v113 = vld [vmem:[#allocation2 + $0x88] sm:$0xf]
    %v114 = vld [vmem:[#allocation2 + $0x8c] sm:$0xff]
    %v115 = vld [vmem:[#allocation2 + $0x94] sm:$0xff]
    %v116 = vld [vmem:[#allocation2 + $0x9c] sm:$0xff]
    %v117 = vld [vmem:[#allocation2 + $0xa4] sm:$0xf]
    %v118 = vld [vmem:[#allocation2 + $0xa8] sm:$0xff]
    %v119 = vld [vmem:[#allocation2 + $0xb0] sm:$0xff]
    %v120 = vld [vmem:[#allocation2 + $0xb8] sm:$0xff]
    %v121 = vld [vmem:[#allocation2 + $0xc0] sm:$0xf]
    %v122 = vld [vmem:[#allocation2 + $0xc4] sm:$0xff]
    %v123 = vld [vmem:[#allocation2 + $0xcc] sm:$0xff]
    %v124 = vld [vmem:[#allocation2 + $0xd4] sm:$0xff]
    %v125 = vld [vmem:[#allocation2 + $0xdc] sm:$0xf]
    %v126 = vld [vmem:[#allocation2 + $0xe0] sm:$0xff]
    %v127 = vld [vmem:[#allocation2 + $0xe8] sm:$0xff]
    %v128 = vld [vmem:[#allocation2 + $0xf0] sm:$0xff]
    %v129 = vld [vmem:[#allocation2 + $0xf8] sm:$0xf]
    %v130 = vld [vmem:[#allocation2 + $0xfc] sm:$0xff]
    %v131 = vld [vmem:[#allocation2 + $0x104] sm:$0xff]
    %v132 = vld [vmem:[#allocation2 + $0x10c] sm:$0xff]
    %v133 = vld [vmem:[#allocation2 + $0x114] sm:$0xf]
    %v134 = vld [vmem:[#allocation2 + $0x118] sm:$0xff]
    %v135 = vld [vmem:[#allocation2 + $0x120] sm:$0xff]
    %v136 = vld [vmem:[#allocation2 + $0x128] sm:$0xff]
    %v137 = vld [vmem:[#allocation2 + $0x130] sm:$0xf]
    %v138 = vld [vmem:[#allocation2 + $0x134] sm:$0xff]
    %v139 = vld [vmem:[#allocation2 + $0x13c] sm:$0xff]
    %v140 = vld [vmem:[#allocation2 + $0x144] sm:$0xff]
    %v141 = vld [vmem:[#allocation2 + $0x14c] sm:$0xf]
    %v142 = vld [vmem:[#allocation2 + $0x150] sm:$0xff]
    %v143 = vld [vmem:[#allocation2 + $0x158] sm:$0xff]
    %v144 = vld [vmem:[#allocation2 + $0x160] sm:$0xff]
    %v145 = vld [vmem:[#allocation2 + $0x168] sm:$0xf]
    %v146 = vld [vmem:[#allocation2 + $0x16c] sm:$0xff]
    %v147 = vld [vmem:[#allocation2 + $0x174] sm:$0xff]
    %v148 = vld [vmem:[#allocation2 + $0x17c] sm:$0xff]
    %v149 = vld [vmem:[#allocation2 + $0x184] sm:$0xf]
    %v150 = vld [vmem:[#allocation2 + $0x188] sm:$0xff]
    %v151 = vld [vmem:[#allocation2 + $0x190] sm:$0xff]
    %v152 = vld [vmem:[#allocation2 + $0x198] sm:$0xff]
    %v153 = vld [vmem:[#allocation2 + $0x1a0] sm:$0xf]
    %v154 = vld [vmem:[#allocation2 + $0x1a4] sm:$0xff]
    %v155 = vld [vmem:[#allocation2 + $0x1ac] sm:$0xff]
    %v156 = vld [vmem:[#allocation2 + $0x1b4] sm:$0xff]
    %v157 = vld [vmem:[#allocation2 + $0x1bc] sm:$0xf]
    %v158 = vld [vmem:[#allocation2 + $0x1c0] sm:$0xff]
    %v159 = vld [vmem:[#allocation2 + $0x1c8] sm:$0xff]
    %v160 = vld [vmem:[#allocation2 + $0x1d0] sm:$0xff]
    %v161 = vld [vmem:[#allocation2 + $0x1d8] sm:$0xf]
    %v162 = vld [vmem:[#allocation2 + $0x1dc] sm:$0xff]
    %v163 = vld [vmem:[#allocation2 + $0x1e4] sm:$0xff]
    %v164 = vld [vmem:[#allocation2 + $0x1ec] sm:$0xff]
    %v165 = vld [vmem:[#allocation2 + $0x1f4] sm:$0xf]
    %v166 = vld [vmem:[#allocation2 + $0x1f8] sm:$0xff]
    %v167 = vld [vmem:[#allocation2 + $0x200] sm:$0xff]
    %v168 = vld [vmem:[#allocation2 + $0x208] sm:$0xff]
    %v169 = vld [vmem:[#allocation2 + $0x210] sm:$0xf]
    %v170 = vld [vmem:[#allocation2 + $0x214] sm:$0xff]
    %v171 = vld [vmem:[#allocation2 + $0x21c] sm:$0xff]
    %v172 = vld [vmem:[#allocation2 + $0x224] sm:$0xff]
    %v173 = vld [vmem:[#allocation2 + $0x22c] sm:$0xf]
    %v174 = vld [vmem:[#allocation2 + $0x230] sm:$0xff]
    %v175 = vld [vmem:[#allocation2 + $0x238] sm:$0xff]
    %v176 = vld [vmem:[#allocation2 + $0x240] sm:$0xff]
    %v177 = vld [vmem:[#allocation2 + $0x248] sm:$0xf]
    %v178 = vld [vmem:[#allocation2 + $0x24c] sm:$0xff]
    %v179 = vld [vmem:[#allocation2 + $0x254] sm:$0xff]
    %v180 = vld [vmem:[#allocation2 + $0x25c] sm:$0xff]
    %v181 = vld [vmem:[#allocation2 + $0x264] sm:$0xf]
    %v182 = vld [vmem:[#allocation2 + $0x268] sm:$0xff]
    %v183 = vld [vmem:[#allocation2 + $0x270] sm:$0xff]
    %v184 = vld [vmem:[#allocation2 + $0x278] sm:$0xff]
    %v185 = vld [vmem:[#allocation2 + $0x280] sm:$0xf]
    %v186 = vld [vmem:[#allocation2 + $0x284] sm:$0xff]
    %v187 = vld [vmem:[#allocation2 + $0x28c] sm:$0xff]
    %v188 = vld [vmem:[#allocation2 + $0x294] sm:$0xff]
    %v189 = vld [vmem:[#allocation2 + $0x29c] sm:$0xf]
    %v190 = vld [vmem:[#allocation2 + $0x2a0] sm:$0xff]
    %v191 = vld [vmem:[#allocation2 + $0x2a8] sm:$0xff]
    %v192 = vld [vmem:[#allocation2 + $0x2b0] sm:$0xff]
    %v193 = vld [vmem:[#allocation2 + $0x2b8] sm:$0xf]
    %v194 = vld [vmem:[#allocation2 + $0x2bc] sm:$0xff]
    %v195 = vld [vmem:[#allocation2 + $0x2c4] sm:$0xff]
    %v196 = vld [vmem:[#allocation2 + $0x2cc] sm:$0xff]
    %v197 = vld [vmem:[#allocation2 + $0x2d4] sm:$0xf]
    %v198 = vld [vmem:[#allocation2 + $0x2d8] sm:$0xff]
    %v199 = vld [vmem:[#allocation2 + $0x2e0] sm:$0xff]
    %v200 = vld [vmem:[#allocation2 + $0x2e8] sm:$0xff]
    %v201 = vld [vmem:[#allocation2 + $0x2f0] sm:$0xf]
    %v202 = vld [vmem:[#allocation2 + $0x2f4] sm:$0xff]
    %v203 = vld [vmem:[#allocation2 + $0x2fc] sm:$0xff]
    %v204 = vld [vmem:[#allocation2 + $0x304] sm:$0xff]
    %v205 = vld [vmem:[#allocation2 + $0x30c] sm:$0xf]
    %v206 = vld [vmem:[#allocation2 + $0x310] sm:$0xff]
    %v207 = vld [vmem:[#allocation2 + $0x318] sm:$0xff]
    %v208 = vld [vmem:[#allocation2 + $0x320] sm:$0xff]
    %v209 = vld [vmem:[#allocation2 + $0x328] sm:$0xf]
    %v210 = vld [vmem:[#allocation2 + $0x32c] sm:$0xff]
    %v211 = vld [vmem:[#allocation2 + $0x334] sm:$0xff]
    %v212 = vld [vmem:[#allocation2 + $0x33c] sm:$0xff]
    %v213 = vld [vmem:[#allocation2 + $0x344] sm:$0xf]
    %v214 = vld [vmem:[#allocation2 + $0x348] sm:$0xff]
    %v215 = vld [vmem:[#allocation2 + $0x350] sm:$0xff]
    %v216 = vld [vmem:[#allocation2 + $0x358] sm:$0xff]
    %v217 = vld [vmem:[#allocation2 + $0x360] sm:$0xf]
    %v218 = vld [vmem:[#allocation2 + $0x364] sm:$0xff]
    %v219 = vld [vmem:[#allocation2 + $0x36c] sm:$0xff]
    %v220 = vld [vmem:[#allocation2 + $0x374] sm:$0xff]
    %v221 = vld [vmem:[#allocation2 + $0x37c] sm:$0xf]
    %v222 = vld [vmem:[#allocation5] sm:$0xff]
    %v223 = vld [vmem:[#allocation5 + $0x8] sm:$0xff]
    %v224 = vld [vmem:[#allocation5 + $0x10] sm:$0xff]
    %v225 = vld [vmem:[#allocation5 + $0x18] sm:$0xff]
    %v226 = vld [vmem:[#allocation5 + $0x20] sm:$0xff]
    %v227 = vld [vmem:[#allocation5 + $0x28] sm:$0xff]
    %v228 = vld [vmem:[#allocation5 + $0x30] sm:$0xff]
    %v229 = vld [vmem:[#allocation5 + $0x38] sm:$0xff]
    %v230 = vld [vmem:[#allocation5 + $0x40] sm:$0xff]
    %v231 = vld [vmem:[#allocation5 + $0x48] sm:$0xff]
    %v232 = vld [vmem:[#allocation5 + $0x50] sm:$0xff]
    %v233 = vld [vmem:[#allocation5 + $0x58] sm:$0xff]
    %v234 = vld [vmem:[#allocation5 + $0x60] sm:$0xff]
    %v235 = vld [vmem:[#allocation5 + $0x68] sm:$0xff]
    %v236 = vld [vmem:[#allocation5 + $0x70] sm:$0xff]
    %v237 = vld [vmem:[#allocation5 + $0x78] sm:$0xff]
    %v238 = vld [vmem:[#allocation5 + $0x80] sm:$0xff]
    %v239 = vld [vmem:[#allocation5 + $0x88] sm:$0xff]
    %v240 = vld [vmem:[#allocation5 + $0x90] sm:$0xff]
    %v241 = vld [vmem:[#allocation5 + $0x98] sm:$0xff]
    %v242 = vld [vmem:[#allocation5 + $0xa0] sm:$0xff]
    %v243 = vld [vmem:[#allocation5 + $0xa8] sm:$0xff]
    %v244 = vld [vmem:[#allocation5 + $0xb0] sm:$0xff]
    %v245 = vld [vmem:[#allocation5 + $0xb8] sm:$0xff]
    %v246 = vld [vmem:[#allocation5 + $0xc0] sm:$0xff]
    %v247 = vld [vmem:[#allocation5 + $0xc8] sm:$0xff]
    %v248 = vld [vmem:[#allocation5 + $0xd0] sm:$0xff]
    %v249 = vld [vmem:[#allocation5 + $0xd8] sm:$0xff]
    %v250 = vld [vmem:[#allocation5 + $0xe0] sm:$0xff]
    %v251 = vld [vmem:[#allocation5 + $0xe8] sm:$0xff]
    %v252 = vld [vmem:[#allocation5 + $0xf0] sm:$0xff]
    %v253 = vld [vmem:[#allocation5 + $0xf8] sm:$0xff]
    %v254 = vld [vmem:[#allocation5 + $0x100] sm:$0xff]
    %v255 = vld [vmem:[#allocation5 + $0x108] sm:$0xff]
    %v256 = vld [vmem:[#allocation5 + $0x110] sm:$0xff]
    %v257 = vld [vmem:[#allocation5 + $0x118] sm:$0xff]
    %v258 = vld [vmem:[#allocation5 + $0x120] sm:$0xff]
    %v259 = vld [vmem:[#allocation5 + $0x128] sm:$0xff]
    %v260 = vld [vmem:[#allocation5 + $0x130] sm:$0xff]
    %v261 = vld [vmem:[#allocation5 + $0x138] sm:$0xff]
    %v262 = vld [vmem:[#allocation5 + $0x140] sm:$0xff]
    %v263 = vld [vmem:[#allocation5 + $0x148] sm:$0xff]
    %v264 = vld [vmem:[#allocation5 + $0x150] sm:$0xff]
    %v265 = vld [vmem:[#allocation5 + $0x158] sm:$0xff]
    %v266 = vld [vmem:[#allocation5 + $0x160] sm:$0xff]
    %v267 = vld [vmem:[#allocation5 + $0x168] sm:$0xff]
    %v268 = vld [vmem:[#allocation5 + $0x170] sm:$0xff]
    %v269 = vld [vmem:[#allocation5 + $0x178] sm:$0xff]
    %v270 = vld [vmem:[#allocation5 + $0x180] sm:$0xff]
    %v271 = vld [vmem:[#allocation5 + $0x188] sm:$0xff]
    %v272 = vld [vmem:[#allocation5 + $0x190] sm:$0xff]
    %v273 = vld [vmem:[#allocation5 + $0x198] sm:$0xff]
    %v274 = vld [vmem:[#allocation5 + $0x1a0] sm:$0xff]
    %v275 = vld [vmem:[#allocation5 + $0x1a8] sm:$0xff]
    %v276 = vld [vmem:[#allocation5 + $0x1b0] sm:$0xff]
    %v277 = vld [vmem:[#allocation5 + $0x1b8] sm:$0xff]
    %v278 = vld [vmem:[#allocation5 + $0x1c0] sm:$0xff]
    %v279 = vld [vmem:[#allocation5 + $0x1c8] sm:$0xff]
    %v280 = vld [vmem:[#allocation5 + $0x1d0] sm:$0xff]
    %v281 = vld [vmem:[#allocation5 + $0x1d8] sm:$0xff]
    %v282 = vld [vmem:[#allocation5 + $0x1e0] sm:$0xff]
    %v283 = vld [vmem:[#allocation5 + $0x1e8] sm:$0xff]
    %v284 = vld [vmem:[#allocation5 + $0x1f0] sm:$0xff]
    %v285 = vld [vmem:[#allocation5 + $0x1f8] sm:$0xff]
    %v286 = vld [vmem:[#allocation5 + $0x200] sm:$0xff]
    %v287 = vld [vmem:[#allocation5 + $0x208] sm:$0xff]
    %v288 = vld [vmem:[#allocation5 + $0x210] sm:$0xff]
    %v289 = vld [vmem:[#allocation5 + $0x218] sm:$0xff]
    %v290 = vld [vmem:[#allocation5 + $0x220] sm:$0xff]
    %v291 = vld [vmem:[#allocation5 + $0x228] sm:$0xff]
    %v292 = vld [vmem:[#allocation5 + $0x230] sm:$0xff]
    %v293 = vld [vmem:[#allocation5 + $0x238] sm:$0xff]
    %v294 = vld [vmem:[#allocation5 + $0x240] sm:$0xff]
    %v295 = vld [vmem:[#allocation5 + $0x248] sm:$0xff]
    %v296 = vld [vmem:[#allocation5 + $0x250] sm:$0xff]
    %v297 = vld [vmem:[#allocation5 + $0x258] sm:$0xff]
    %v298 = vld [vmem:[#allocation5 + $0x260] sm:$0xff]
    %v299 = vld [vmem:[#allocation5 + $0x268] sm:$0xff]
    %v300 = vld [vmem:[#allocation5 + $0x270] sm:$0xff]
    %v301 = vld [vmem:[#allocation5 + $0x278] sm:$0xff]
    %v302 = vld [vmem:[#allocation5 + $0x280] sm:$0xff]
    %v303 = vld [vmem:[#allocation5 + $0x288] sm:$0xff]
    %v304 = vld [vmem:[#allocation5 + $0x290] sm:$0xff]
    %v305 = vld [vmem:[#allocation5 + $0x298] sm:$0xff]
    %v306 = vld [vmem:[#allocation5 + $0x2a0] sm:$0xff]
    %v307 = vld [vmem:[#allocation5 + $0x2a8] sm:$0xff]
    %v308 = vld [vmem:[#allocation5 + $0x2b0] sm:$0xff]
    %v309 = vld [vmem:[#allocation5 + $0x2b8] sm:$0xff]
    %v310 = vld [vmem:[#allocation5 + $0x2c0] sm:$0xff]
    %v311 = vld [vmem:[#allocation5 + $0x2c8] sm:$0xff]
    %v312 = vld [vmem:[#allocation5 + $0x2d0] sm:$0xff]
    %v313 = vld [vmem:[#allocation5 + $0x2d8] sm:$0xff]
    %v314 = vld [vmem:[#allocation5 + $0x2e0] sm:$0xff]
    %v315 = vld [vmem:[#allocation5 + $0x2e8] sm:$0xff]
    %v316 = vld [vmem:[#allocation5 + $0x2f0] sm:$0xff]
    %v317 = vld [vmem:[#allocation5 + $0x2f8] sm:$0xff]
    %v318 = vld [vmem:[#allocation5 + $0x300] sm:$0xff]
    %v319 = vld [vmem:[#allocation5 + $0x308] sm:$0xff]
    %v320 = vld [vmem:[#allocation5 + $0x310] sm:$0xff]
    %v321 = vld [vmem:[#allocation5 + $0x318] sm:$0xff]
    %v322 = vld [vmem:[#allocation5 + $0x320] sm:$0xff]
    %v323 = vld [vmem:[#allocation5 + $0x328] sm:$0xff]
    %v324 = vld [vmem:[#allocation5 + $0x330] sm:$0xff]
    %v325 = vld [vmem:[#allocation5 + $0x338] sm:$0xff]
    %v326 = vld [vmem:[#allocation5 + $0x340] sm:$0xff]
    %v327 = vld [vmem:[#allocation5 + $0x348] sm:$0xff]
    %v328 = vld [vmem:[#allocation5 + $0x350] sm:$0xff]
    %v329 = vld [vmem:[#allocation5 + $0x358] sm:$0xff]
    %v330 = vld [vmem:[#allocation5 + $0x360] sm:$0xff]
    %v331 = vld [vmem:[#allocation5 + $0x368] sm:$0xff]
    %v332 = vld [vmem:[#allocation5 + $0x370] sm:$0xff]
    %v333 = vld [vmem:[#allocation5 + $0x378] sm:$0xff]
    %v334 = vld [vmem:[#allocation5 + $0x380] sm:$0xff]
    %v335 = vld [vmem:[#allocation5 + $0x388] sm:$0xff]
    %v336 = vld [vmem:[#allocation5 + $0x390] sm:$0xff]
    %v337 = vld [vmem:[#allocation5 + $0x398] sm:$0xff]
    %v338 = vld [vmem:[#allocation5 + $0x3a0] sm:$0xff]
    %v339 = vld [vmem:[#allocation5 + $0x3a8] sm:$0xff]
    %v340 = vld [vmem:[#allocation5 + $0x3b0] sm:$0xff]
    %v341 = vld [vmem:[#allocation5 + $0x3b8] sm:$0xff]
    %v342 = vld [vmem:[#allocation5 + $0x3c0] sm:$0xff]
    %v343 = vld [vmem:[#allocation5 + $0x3c8] sm:$0xff]
    %v344 = vld [vmem:[#allocation5 + $0x3d0] sm:$0xff]
    %v345 = vld [vmem:[#allocation5 + $0x3d8] sm:$0xff]
    %v346 = vld [vmem:[#allocation5 + $0x3e0] sm:$0xff]
    %v347 = vld [vmem:[#allocation5 + $0x3e8] sm:$0xff]
    %v348 = vld [vmem:[#allocation5 + $0x3f0] sm:$0xff]
    %v349 = vld [vmem:[#allocation5 + $0x3f8] sm:$0xff]
    %v350 = vld [vmem:[#allocation5 + $0x400] sm:$0xff]
    %v351 = vld [vmem:[#allocation5 + $0x408] sm:$0xff]
    %v352 = vld [vmem:[#allocation5 + $0x410] sm:$0xff]
    %v353 = vld [vmem:[#allocation5 + $0x418] sm:$0xff]
    %v354 = vld [vmem:[#allocation5 + $0x420] sm:$0xff]
    %v355 = vld [vmem:[#allocation5 + $0x428] sm:$0xff]
    %v356 = vld [vmem:[#allocation5 + $0x430] sm:$0xff]
    %v357 = vld [vmem:[#allocation5 + $0x438] sm:$0xff]
    %v358 = vld [vmem:[#allocation5 + $0x440] sm:$0xff]
    %v359 = vld [vmem:[#allocation5 + $0x448] sm:$0xff]
    %v360 = vld [vmem:[#allocation5 + $0x450] sm:$0xff]
    %v361 = vld [vmem:[#allocation5 + $0x458] sm:$0xff]
    %v362 = vld [vmem:[#allocation5 + $0x460] sm:$0xff]
    %v363 = vld [vmem:[#allocation5 + $0x468] sm:$0xff]
    %v364 = vld [vmem:[#allocation5 + $0x470] sm:$0xff]
    %v365 = vld [vmem:[#allocation5 + $0x478] sm:$0xff]
    %v366 = vld [vmem:[#allocation5 + $0x480] sm:$0xff]
    %v367 = vld [vmem:[#allocation5 + $0x488] sm:$0xff]
    %v368 = vld [vmem:[#allocation5 + $0x490] sm:$0xff]
    %v369 = vld [vmem:[#allocation5 + $0x498] sm:$0xff]
    %v370 = vld [vmem:[#allocation5 + $0x4a0] sm:$0xff]
    %v371 = vld [vmem:[#allocation5 + $0x4a8] sm:$0xff]
    %v372 = vld [vmem:[#allocation5 + $0x4b0] sm:$0xff]
    %v373 = vld [vmem:[#allocation5 + $0x4b8] sm:$0xff]
    %v374 = vld [vmem:[#allocation5 + $0x4c0] sm:$0xff]
    %v375 = vld [vmem:[#allocation5 + $0x4c8] sm:$0xff]
    %v376 = vld [vmem:[#allocation5 + $0x4d0] sm:$0xff]
    %v377 = vld [vmem:[#allocation5 + $0x4d8] sm:$0xff]
    %v378 = vld [vmem:[#allocation5 + $0x4e0] sm:$0xff]
    %v379 = vld [vmem:[#allocation5 + $0x4e8] sm:$0xff]
    %v380 = vld [vmem:[#allocation5 + $0x4f0] sm:$0xff]
    %v381 = vld [vmem:[#allocation5 + $0x4f8] sm:$0xff]
    %v382 = vld [vmem:[#allocation5 + $0x500] sm:$0xff]
    %v383 = vld [vmem:[#allocation5 + $0x508] sm:$0xff]
    %v384 = vld [vmem:[#allocation5 + $0x510] sm:$0xff]
    %v385 = vld [vmem:[#allocation5 + $0x518] sm:$0xff]
    %v386 = vld [vmem:[#allocation5 + $0x520] sm:$0xff]
    %v387 = vld [vmem:[#allocation5 + $0x528] sm:$0xff]
    %v388 = vld [vmem:[#allocation5 + $0x530] sm:$0xff]
    %v389 = vld [vmem:[#allocation5 + $0x538] sm:$0xff]
    %v390 = vld [vmem:[#allocation5 + $0x540] sm:$0xff]
    %v391 = vld [vmem:[#allocation5 + $0x548] sm:$0xff]
    %v392 = vld [vmem:[#allocation5 + $0x550] sm:$0xff]
    %v393 = vld [vmem:[#allocation5 + $0x558] sm:$0xff]
    %v394 = vld [vmem:[#allocation5 + $0x560] sm:$0xff]
    %v395 = vld [vmem:[#allocation5 + $0x568] sm:$0xff]
    %v396 = vld [vmem:[#allocation5 + $0x570] sm:$0xff]
    %v397 = vld [vmem:[#allocation5 + $0x578] sm:$0xff]
    %v398 = vld [vmem:[#allocation5 + $0x580] sm:$0xff]
    %v399 = vld [vmem:[#allocation5 + $0x588] sm:$0xff]
    %v400 = vld [vmem:[#allocation5 + $0x590] sm:$0xff]
    %v401 = vld [vmem:[#allocation5 + $0x598] sm:$0xff]
    %v402 = vld [vmem:[#allocation5 + $0x5a0] sm:$0xff]
    %v403 = vld [vmem:[#allocation5 + $0x5a8] sm:$0xff]
    %v404 = vld [vmem:[#allocation5 + $0x5b0] sm:$0xff]
    %v405 = vld [vmem:[#allocation5 + $0x5b8] sm:$0xff]
    %v406 = vld [vmem:[#allocation5 + $0x5c0] sm:$0xff]
    %v407 = vld [vmem:[#allocation5 + $0x5c8] sm:$0xff]
    %v408 = vld [vmem:[#allocation5 + $0x5d0] sm:$0xff]
    %v409 = vld [vmem:[#allocation5 + $0x5d8] sm:$0xff]
    %v410 = vld [vmem:[#allocation5 + $0x5e0] sm:$0xff]
    %v411 = vld [vmem:[#allocation5 + $0x5e8] sm:$0xff]
    %v412 = vld [vmem:[#allocation5 + $0x5f0] sm:$0xff]
    %v413 = vld [vmem:[#allocation5 + $0x5f8] sm:$0xff]
    %v414 = vld [vmem:[#allocation5 + $0x600] sm:$0xff]
    %v415 = vld [vmem:[#allocation5 + $0x608] sm:$0xff]
    %v416 = vld [vmem:[#allocation5 + $0x610] sm:$0xff]
    %v417 = vld [vmem:[#allocation5 + $0x618] sm:$0xff]
    %v418 = vld [vmem:[#allocation5 + $0x620] sm:$0xff]
    %v419 = vld [vmem:[#allocation5 + $0x628] sm:$0xff]
    %v420 = vld [vmem:[#allocation5 + $0x630] sm:$0xff]
    %v421 = vld [vmem:[#allocation5 + $0x638] sm:$0xff]
    %v422 = vld [vmem:[#allocation5 + $0x640] sm:$0xff]
    %v423 = vld [vmem:[#allocation5 + $0x648] sm:$0xff]
    %v424 = vld [vmem:[#allocation5 + $0x650] sm:$0xff]
    %v425 = vld [vmem:[#allocation5 + $0x658] sm:$0xff]
    %v426 = vld [vmem:[#allocation5 + $0x660] sm:$0xff]
    %v427 = vld [vmem:[#allocation5 + $0x668] sm:$0xff]
    %v428 = vld [vmem:[#allocation5 + $0x670] sm:$0xff]
    %v429 = vld [vmem:[#allocation5 + $0x678] sm:$0xff]
    %v430 = vld [vmem:[#allocation5 + $0x680] sm:$0xff]
    %v431 = vld [vmem:[#allocation5 + $0x688] sm:$0xff]
    %v432 = vld [vmem:[#allocation5 + $0x690] sm:$0xff]
    %v433 = vld [vmem:[#allocation5 + $0x698] sm:$0xff]
    %v434 = vld [vmem:[#allocation5 + $0x6a0] sm:$0xff]
    %v435 = vld [vmem:[#allocation5 + $0x6a8] sm:$0xff]
    %v436 = vld [vmem:[#allocation5 + $0x6b0] sm:$0xff]
    %v437 = vld [vmem:[#allocation5 + $0x6b8] sm:$0xff]
    %v438 = vld [vmem:[#allocation5 + $0x6c0] sm:$0xff]
    %v439 = vld [vmem:[#allocation5 + $0x6c8] sm:$0xff]
    %v440 = vld [vmem:[#allocation5 + $0x6d0] sm:$0xff]
    %v441 = vld [vmem:[#allocation5 + $0x6d8] sm:$0xff]
    %v442 = vld [vmem:[#allocation5 + $0x6e0] sm:$0xff]
    %v443 = vld [vmem:[#allocation5 + $0x6e8] sm:$0xff]
    %v444 = vld [vmem:[#allocation5 + $0x6f0] sm:$0xff]
    %v445 = vld [vmem:[#allocation5 + $0x6f8] sm:$0xff]
    %v446 = vld [vmem:[#allocation7] sm:$0xf]
    %v448 = vlaneseq
    %v449 = vshrl.u32 %v448, 7
    %v450 = vsub.s32 0, %v449
    %v451 = vrot.slane %v446, %v450
    %v452 = vlaneseq
    %v453 = vshrl.u32 %v452, 7
    %v454 = vsub.s32 1, %v453
    %v455 = vrot.slane %v446, %v454
    %v456 = vlaneseq
    %v457 = vshrl.u32 %v456, 7
    %v458 = vsub.s32 2, %v457
    %v459 = vrot.slane %v446, %v458
    %v460 = vlaneseq
    %v461 = vshrl.u32 %v460, 7
    %v462 = vsub.s32 3, %v461
    %v463 = vrot.slane %v446, %v462
    %v596 = vunpack.c.l.b16 %v94
    %v597 = vunpack.c.h.b16 %v94
    %v598 = vunpack.c.l.b16 %v95
    %v599 = vunpack.c.h.b16 %v95
    %v600 = vunpack.c.l.b16 %v96
    %v601 = vunpack.c.h.b16 %v96
    %v602 = vunpack.c.l.b16 %v97
    %v603 = vunpack.c.l.b16 %v98
    %v604 = vunpack.c.h.b16 %v98
    %v605 = vunpack.c.l.b16 %v99
    %v606 = vunpack.c.h.b16 %v99
    %v607 = vunpack.c.l.b16 %v100
    %v608 = vunpack.c.h.b16 %v100
    %v609 = vunpack.c.l.b16 %v101
    %v610 = vunpack.c.l.b16 %v102
    %v611 = vunpack.c.h.b16 %v102
    %v612 = vunpack.c.l.b16 %v103
    %v613 = vunpack.c.h.b16 %v103
    %v614 = vunpack.c.l.b16 %v104
    %v615 = vunpack.c.h.b16 %v104
    %v616 = vunpack.c.l.b16 %v105
    %v617 = vunpack.c.l.b16 %v106
    %v618 = vunpack.c.h.b16 %v106
    %v619 = vunpack.c.l.b16 %v107
    %v620 = vunpack.c.h.b16 %v107
    %v621 = vunpack.c.l.b16 %v108
    %v622 = vunpack.c.h.b16 %v108
    %v623 = vunpack.c.l.b16 %v109
    %v624 = vunpack.c.l.b16 %v110
    %v625 = vunpack.c.h.b16 %v110
    %v626 = vunpack.c.l.b16 %v111
    %v627 = vunpack.c.h.b16 %v111
    %v628 = vunpack.c.l.b16 %v112
    %v629 = vunpack.c.h.b16 %v112
    %v630 = vunpack.c.l.b16 %v113
    %v631 = vunpack.c.l.b16 %v114
    %v632 = vunpack.c.h.b16 %v114
    %v633 = vunpack.c.l.b16 %v115
    %v634 = vunpack.c.h.b16 %v115
    %v635 = vunpack.c.l.b16 %v116
    %v636 = vunpack.c.h.b16 %v116
    %v637 = vunpack.c.l.b16 %v117
    %v638 = vunpack.c.l.b16 %v118
    %v639 = vunpack.c.h.b16 %v118
    %v640 = vunpack.c.l.b16 %v119
    %v641 = vunpack.c.h.b16 %v119
    %v642 = vunpack.c.l.b16 %v120
    %v643 = vunpack.c.h.b16 %v120
    %v644 = vunpack.c.l.b16 %v121
    %v645 = vunpack.c.l.b16 %v122
    %v646 = vunpack.c.h.b16 %v122
    %v647 = vunpack.c.l.b16 %v123
    %v648 = vunpack.c.h.b16 %v123
    %v649 = vunpack.c.l.b16 %v124
    %v650 = vunpack.c.h.b16 %v124
    %v651 = vunpack.c.l.b16 %v125
    %v652 = vunpack.c.l.b16 %v126
    %v653 = vunpack.c.h.b16 %v126
    %v654 = vunpack.c.l.b16 %v127
    %v655 = vunpack.c.h.b16 %v127
    %v656 = vunpack.c.l.b16 %v128
    %v657 = vunpack.c.h.b16 %v128
    %v658 = vunpack.c.l.b16 %v129
    %v659 = vunpack.c.l.b16 %v130
    %v660 = vunpack.c.h.b16 %v130
    %v661 = vunpack.c.l.b16 %v131
    %v662 = vunpack.c.h.b16 %v131
    %v663 = vunpack.c.l.b16 %v132
    %v664 = vunpack.c.h.b16 %v132
    %v665 = vunpack.c.l.b16 %v133
    %v666 = vunpack.c.l.b16 %v134
    %v667 = vunpack.c.h.b16 %v134
    %v668 = vunpack.c.l.b16 %v135
    %v669 = vunpack.c.h.b16 %v135
    %v670 = vunpack.c.l.b16 %v136
    %v671 = vunpack.c.h.b16 %v136
    %v672 = vunpack.c.l.b16 %v137
    %v673 = vunpack.c.l.b16 %v138
    %v674 = vunpack.c.h.b16 %v138
    %v675 = vunpack.c.l.b16 %v139
    %v676 = vunpack.c.h.b16 %v139
    %v677 = vunpack.c.l.b16 %v140
    %v678 = vunpack.c.h.b16 %v140
    %v679 = vunpack.c.l.b16 %v141
    %v680 = vunpack.c.l.b16 %v142
    %v681 = vunpack.c.h.b16 %v142
    %v682 = vunpack.c.l.b16 %v143
    %v683 = vunpack.c.h.b16 %v143
    %v684 = vunpack.c.l.b16 %v144
    %v685 = vunpack.c.h.b16 %v144
    %v686 = vunpack.c.l.b16 %v145
    %v687 = vunpack.c.l.b16 %v146
    %v688 = vunpack.c.h.b16 %v146
    %v689 = vunpack.c.l.b16 %v147
    %v690 = vunpack.c.h.b16 %v147
    %v691 = vunpack.c.l.b16 %v148
    %v692 = vunpack.c.h.b16 %v148
    %v693 = vunpack.c.l.b16 %v149
    %v694 = vunpack.c.l.b16 %v150
    %v695 = vunpack.c.h.b16 %v150
    %v696 = vunpack.c.l.b16 %v151
    %v697 = vunpack.c.h.b16 %v151
    %v698 = vunpack.c.l.b16 %v152
    %v699 = vunpack.c.h.b16 %v152
    %v700 = vunpack.c.l.b16 %v153
    %v701 = vunpack.c.l.b16 %v154
    %v702 = vunpack.c.h.b16 %v154
    %v703 = vunpack.c.l.b16 %v155
    %v704 = vunpack.c.h.b16 %v155
    %v705 = vunpack.c.l.b16 %v156
    %v706 = vunpack.c.h.b16 %v156
    %v707 = vunpack.c.l.b16 %v157
    %v708 = vunpack.c.l.b16 %v158
    %v709 = vunpack.c.h.b16 %v158
    %v710 = vunpack.c.l.b16 %v159
    %v711 = vunpack.c.h.b16 %v159
    %v712 = vunpack.c.l.b16 %v160
    %v713 = vunpack.c.h.b16 %v160
    %v714 = vunpack.c.l.b16 %v161
    %v715 = vunpack.c.l.b16 %v162
    %v716 = vunpack.c.h.b16 %v162
    %v717 = vunpack.c.l.b16 %v163
    %v718 = vunpack.c.h.b16 %v163
    %v719 = vunpack.c.l.b16 %v164
    %v720 = vunpack.c.h.b16 %v164
    %v721 = vunpack.c.l.b16 %v165
    %v722 = vunpack.c.l.b16 %v166
    %v723 = vunpack.c.h.b16 %v166
    %v724 = vunpack.c.l.b16 %v167
    %v725 = vunpack.c.h.b16 %v167
    %v726 = vunpack.c.l.b16 %v168
    %v727 = vunpack.c.h.b16 %v168
    %v728 = vunpack.c.l.b16 %v169
    %v729 = vunpack.c.l.b16 %v170
    %v730 = vunpack.c.h.b16 %v170
    %v731 = vunpack.c.l.b16 %v171
    %v732 = vunpack.c.h.b16 %v171
    %v733 = vunpack.c.l.b16 %v172
    %v734 = vunpack.c.h.b16 %v172
    %v735 = vunpack.c.l.b16 %v173
    %v736 = vunpack.c.l.b16 %v174
    %v737 = vunpack.c.h.b16 %v174
    %v738 = vunpack.c.l.b16 %v175
    %v739 = vunpack.c.h.b16 %v175
    %v740 = vunpack.c.l.b16 %v176
    %v741 = vunpack.c.h.b16 %v176
    %v742 = vunpack.c.l.b16 %v177
    %v743 = vunpack.c.l.b16 %v178
    %v744 = vunpack.c.h.b16 %v178
    %v745 = vunpack.c.l.b16 %v179
    %v746 = vunpack.c.h.b16 %v179
    %v747 = vunpack.c.l.b16 %v180
    %v748 = vunpack.c.h.b16 %v180
    %v749 = vunpack.c.l.b16 %v181
    %v750 = vunpack.c.l.b16 %v182
    %v751 = vunpack.c.h.b16 %v182
    %v752 = vunpack.c.l.b16 %v183
    %v753 = vunpack.c.h.b16 %v183
    %v754 = vunpack.c.l.b16 %v184
    %v755 = vunpack.c.h.b16 %v184
    %v756 = vunpack.c.l.b16 %v185
    %v757 = vunpack.c.l.b16 %v186
    %v758 = vunpack.c.h.b16 %v186
    %v759 = vunpack.c.l.b16 %v187
    %v760 = vunpack.c.h.b16 %v187
    %v761 = vunpack.c.l.b16 %v188
    %v762 = vunpack.c.h.b16 %v188
    %v763 = vunpack.c.l.b16 %v189
    %v764 = vunpack.c.l.b16 %v190
    %v765 = vunpack.c.h.b16 %v190
    %v766 = vunpack.c.l.b16 %v191
    %v767 = vunpack.c.h.b16 %v191
    %v768 = vunpack.c.l.b16 %v192
    %v769 = vunpack.c.h.b16 %v192
    %v770 = vunpack.c.l.b16 %v193
    %v771 = vunpack.c.l.b16 %v194
    %v772 = vunpack.c.h.b16 %v194
    %v773 = vunpack.c.l.b16 %v195
    %v774 = vunpack.c.h.b16 %v195
    %v775 = vunpack.c.l.b16 %v196
    %v776 = vunpack.c.h.b16 %v196
    %v777 = vunpack.c.l.b16 %v197
    %v778 = vunpack.c.l.b16 %v198
    %v779 = vunpack.c.h.b16 %v198
    %v780 = vunpack.c.l.b16 %v199
    %v781 = vunpack.c.h.b16 %v199
    %v782 = vunpack.c.l.b16 %v200
    %v783 = vunpack.c.h.b16 %v200
    %v784 = vunpack.c.l.b16 %v201
    %v785 = vunpack.c.l.b16 %v202
    %v786 = vunpack.c.h.b16 %v202
    %v787 = vunpack.c.l.b16 %v203
    %v788 = vunpack.c.h.b16 %v203
    %v789 = vunpack.c.l.b16 %v204
    %v790 = vunpack.c.h.b16 %v204
    %v791 = vunpack.c.l.b16 %v205
    %v792 = vunpack.c.l.b16 %v206
    %v793 = vunpack.c.h.b16 %v206
    %v794 = vunpack.c.l.b16 %v207
    %v795 = vunpack.c.h.b16 %v207
    %v796 = vunpack.c.l.b16 %v208
    %v797 = vunpack.c.h.b16 %v208
    %v798 = vunpack.c.l.b16 %v209
    %v799 = vunpack.c.l.b16 %v210
    %v800 = vunpack.c.h.b16 %v210
    %v801 = vunpack.c.l.b16 %v211
    %v802 = vunpack.c.h.b16 %v211
    %v803 = vunpack.c.l.b16 %v212
    %v804 = vunpack.c.h.b16 %v212
    %v805 = vunpack.c.l.b16 %v213
    %v806 = vunpack.c.l.b16 %v214
    %v807 = vunpack.c.h.b16 %v214
    %v808 = vunpack.c.l.b16 %v215
    %v809 = vunpack.c.h.b16 %v215
    %v810 = vunpack.c.l.b16 %v216
    %v811 = vunpack.c.h.b16 %v216
    %v812 = vunpack.c.l.b16 %v217
    %v813 = vunpack.c.l.b16 %v218
    %v814 = vunpack.c.h.b16 %v218
    %v815 = vunpack.c.l.b16 %v219
    %v816 = vunpack.c.h.b16 %v219
    %v817 = vunpack.c.l.b16 %v220
    %v818 = vunpack.c.h.b16 %v220
    %v819 = vunpack.c.l.b16 %v221
    %v820 = vpack.c.b16 %v603, %v596
    %v821 = vpack.c.b16 %v604, %v597
    %v822 = vpack.c.b16 %v605, %v598
    %v823 = vpack.c.b16 %v606, %v599
    %v824 = vpack.c.b16 %v607, %v600
    %v825 = vpack.c.b16 %v608, %v601
    %v826 = vpack.c.b16 %v609, %v602
    %v827 = vpack.c.b16 %v617, %v610
    %v828 = vpack.c.b16 %v618, %v611
    %v829 = vpack.c.b16 %v619, %v612
    %v830 = vpack.c.b16 %v620, %v613
    %v831 = vpack.c.b16 %v621, %v614
    %v832 = vpack.c.b16 %v622, %v615
    %v833 = vpack.c.b16 %v623, %v616
    %v834 = vpack.c.b16 %v631, %v624
    %v835 = vpack.c.b16 %v632, %v625
    %v836 = vpack.c.b16 %v633, %v626
    %v837 = vpack.c.b16 %v634, %v627
    %v838 = vpack.c.b16 %v635, %v628
    %v839 = vpack.c.b16 %v636, %v629
    %v840 = vpack.c.b16 %v637, %v630
    %v841 = vpack.c.b16 %v645, %v638
    %v842 = vpack.c.b16 %v646, %v639
    %v843 = vpack.c.b16 %v647, %v640
    %v844 = vpack.c.b16 %v648, %v641
    %v845 = vpack.c.b16 %v649, %v642
    %v846 = vpack.c.b16 %v650, %v643
    %v847 = vpack.c.b16 %v651, %v644
    %v848 = vpack.c.b16 %v659, %v652
    %v849 = vpack.c.b16 %v660, %v653
    %v850 = vpack.c.b16 %v661, %v654
    %v851 = vpack.c.b16 %v662, %v655
    %v852 = vpack.c.b16 %v663, %v656
    %v853 = vpack.c.b16 %v664, %v657
    %v854 = vpack.c.b16 %v665, %v658
    %v855 = vpack.c.b16 %v673, %v666
    %v856 = vpack.c.b16 %v674, %v667
    %v857 = vpack.c.b16 %v675, %v668
    %v858 = vpack.c.b16 %v676, %v669
    %v859 = vpack.c.b16 %v677, %v670
    %v860 = vpack.c.b16 %v678, %v671
    %v861 = vpack.c.b16 %v679, %v672
    %v862 = vpack.c.b16 %v687, %v680
    %v863 = vpack.c.b16 %v688, %v681
    %v864 = vpack.c.b16 %v689, %v682
    %v865 = vpack.c.b16 %v690, %v683
    %v866 = vpack.c.b16 %v691, %v684
    %v867 = vpack.c.b16 %v692, %v685
    %v868 = vpack.c.b16 %v693, %v686
    %v869 = vpack.c.b16 %v701, %v694
    %v870 = vpack.c.b16 %v702, %v695
    %v871 = vpack.c.b16 %v703, %v696
    %v872 = vpack.c.b16 %v704, %v697
    %v873 = vpack.c.b16 %v705, %v698
    %v874 = vpack.c.b16 %v706, %v699
    %v875 = vpack.c.b16 %v707, %v700
    %v876 = vpack.c.b16 %v715, %v708
    %v877 = vpack.c.b16 %v716, %v709
    %v878 = vpack.c.b16 %v717, %v710
    %v879 = vpack.c.b16 %v718, %v711
    %v880 = vpack.c.b16 %v719, %v712
    %v881 = vpack.c.b16 %v720, %v713
    %v882 = vpack.c.b16 %v721, %v714
    %v883 = vpack.c.b16 %v729, %v722
    %v884 = vpack.c.b16 %v730, %v723
    %v885 = vpack.c.b16 %v731, %v724
    %v886 = vpack.c.b16 %v732, %v725
    %v887 = vpack.c.b16 %v733, %v726
    %v888 = vpack.c.b16 %v734, %v727
    %v889 = vpack.c.b16 %v735, %v728
    %v890 = vpack.c.b16 %v743, %v736
    %v891 = vpack.c.b16 %v744, %v737
    %v892 = vpack.c.b16 %v745, %v738
    %v893 = vpack.c.b16 %v746, %v739
    %v894 = vpack.c.b16 %v747, %v740
    %v895 = vpack.c.b16 %v748, %v741
    %v896 = vpack.c.b16 %v749, %v742
    %v897 = vpack.c.b16 %v757, %v750
    %v898 = vpack.c.b16 %v758, %v751
    %v899 = vpack.c.b16 %v759, %v752
    %v900 = vpack.c.b16 %v760, %v753
    %v901 = vpack.c.b16 %v761, %v754
    %v902 = vpack.c.b16 %v762, %v755
    %v903 = vpack.c.b16 %v763, %v756
    %v904 = vpack.c.b16 %v771, %v764
    %v905 = vpack.c.b16 %v772, %v765
    %v906 = vpack.c.b16 %v773, %v766
    %v907 = vpack.c.b16 %v774, %v767
    %v908 = vpack.c.b16 %v775, %v768
    %v909 = vpack.c.b16 %v776, %v769
    %v910 = vpack.c.b16 %v777, %v770
    %v911 = vpack.c.b16 %v785, %v778
    %v912 = vpack.c.b16 %v786, %v779
    %v913 = vpack.c.b16 %v787, %v780
    %v914 = vpack.c.b16 %v788, %v781
    %v915 = vpack.c.b16 %v789, %v782
    %v916 = vpack.c.b16 %v790, %v783
    %v917 = vpack.c.b16 %v791, %v784
    %v918 = vpack.c.b16 %v799, %v792
    %v919 = vpack.c.b16 %v800, %v793
    %v920 = vpack.c.b16 %v801, %v794
    %v921 = vpack.c.b16 %v802, %v795
    %v922 = vpack.c.b16 %v803, %v796
    %v923 = vpack.c.b16 %v804, %v797
    %v924 = vpack.c.b16 %v805, %v798
    %v925 = vpack.c.b16 %v813, %v806
    %v926 = vpack.c.b16 %v814, %v807
    %v927 = vpack.c.b16 %v815, %v808
    %v928 = vpack.c.b16 %v816, %v809
    %v929 = vpack.c.b16 %v817, %v810
    %v930 = vpack.c.b16 %v818, %v811
    %v931 = vpack.c.b16 %v819, %v812
    %v1268 = vunpack.c.l.b16 %v222
    %v1269 = vunpack.c.h.b16 %v222
    %v1270 = vunpack.c.l.b16 %v223
    %v1271 = vunpack.c.h.b16 %v223
    %v1272 = vunpack.c.l.b16 %v224
    %v1273 = vunpack.c.h.b16 %v224
    %v1274 = vunpack.c.l.b16 %v225
    %v1275 = vunpack.c.h.b16 %v225
    %v1276 = vunpack.c.l.b16 %v226
    %v1277 = vunpack.c.h.b16 %v226
    %v1278 = vunpack.c.l.b16 %v227
    %v1279 = vunpack.c.h.b16 %v227
    %v1280 = vunpack.c.l.b16 %v228
    %v1281 = vunpack.c.h.b16 %v228
    %v1282 = vunpack.c.l.b16 %v229
    %v1283 = vunpack.c.h.b16 %v229
    %v1284 = vunpack.c.l.b16 %v230
    %v1285 = vunpack.c.h.b16 %v230
    %v1286 = vunpack.c.l.b16 %v231
    %v1287 = vunpack.c.h.b16 %v231
    %v1288 = vunpack.c.l.b16 %v232
    %v1289 = vunpack.c.h.b16 %v232
    %v1290 = vunpack.c.l.b16 %v233
    %v1291 = vunpack.c.h.b16 %v233
    %v1292 = vunpack.c.l.b16 %v234
    %v1293 = vunpack.c.h.b16 %v234
    %v1294 = vunpack.c.l.b16 %v235
    %v1295 = vunpack.c.h.b16 %v235
    %v1296 = vunpack.c.l.b16 %v236
    %v1297 = vunpack.c.h.b16 %v236
    %v1298 = vunpack.c.l.b16 %v237
    %v1299 = vunpack.c.h.b16 %v237
    %v1300 = vunpack.c.l.b16 %v238
    %v1301 = vunpack.c.h.b16 %v238
    %v1302 = vunpack.c.l.b16 %v239
    %v1303 = vunpack.c.h.b16 %v239
    %v1304 = vunpack.c.l.b16 %v240
    %v1305 = vunpack.c.h.b16 %v240
    %v1306 = vunpack.c.l.b16 %v241
    %v1307 = vunpack.c.h.b16 %v241
    %v1308 = vunpack.c.l.b16 %v242
    %v1309 = vunpack.c.h.b16 %v242
    %v1310 = vunpack.c.l.b16 %v243
    %v1311 = vunpack.c.h.b16 %v243
    %v1312 = vunpack.c.l.b16 %v244
    %v1313 = vunpack.c.h.b16 %v244
    %v1314 = vunpack.c.l.b16 %v245
    %v1315 = vunpack.c.h.b16 %v245
    %v1316 = vunpack.c.l.b16 %v246
    %v1317 = vunpack.c.h.b16 %v246
    %v1318 = vunpack.c.l.b16 %v247
    %v1319 = vunpack.c.h.b16 %v247
    %v1320 = vunpack.c.l.b16 %v248
    %v1321 = vunpack.c.h.b16 %v248
    %v1322 = vunpack.c.l.b16 %v249
    %v1323 = vunpack.c.h.b16 %v249
    %v1324 = vunpack.c.l.b16 %v250
    %v1325 = vunpack.c.h.b16 %v250
    %v1326 = vunpack.c.l.b16 %v251
    %v1327 = vunpack.c.h.b16 %v251
    %v1328 = vunpack.c.l.b16 %v252
    %v1329 = vunpack.c.h.b16 %v252
    %v1330 = vunpack.c.l.b16 %v253
    %v1331 = vunpack.c.h.b16 %v253
    %v1332 = vunpack.c.l.b16 %v254
    %v1333 = vunpack.c.h.b16 %v254
    %v1334 = vunpack.c.l.b16 %v255
    %v1335 = vunpack.c.h.b16 %v255
    %v1336 = vunpack.c.l.b16 %v256
    %v1337 = vunpack.c.h.b16 %v256
    %v1338 = vunpack.c.l.b16 %v257
    %v1339 = vunpack.c.h.b16 %v257
    %v1340 = vunpack.c.l.b16 %v258
    %v1341 = vunpack.c.h.b16 %v258
    %v1342 = vunpack.c.l.b16 %v259
    %v1343 = vunpack.c.h.b16 %v259
    %v1344 = vunpack.c.l.b16 %v260
    %v1345 = vunpack.c.h.b16 %v260
    %v1346 = vunpack.c.l.b16 %v261
    %v1347 = vunpack.c.h.b16 %v261
    %v1348 = vunpack.c.l.b16 %v262
    %v1349 = vunpack.c.h.b16 %v262
    %v1350 = vunpack.c.l.b16 %v263
    %v1351 = vunpack.c.h.b16 %v263
    %v1352 = vunpack.c.l.b16 %v264
    %v1353 = vunpack.c.h.b16 %v264
    %v1354 = vunpack.c.l.b16 %v265
    %v1355 = vunpack.c.h.b16 %v265
    %v1356 = vunpack.c.l.b16 %v266
    %v1357 = vunpack.c.h.b16 %v266
    %v1358 = vunpack.c.l.b16 %v267
    %v1359 = vunpack.c.h.b16 %v267
    %v1360 = vunpack.c.l.b16 %v268
    %v1361 = vunpack.c.h.b16 %v268
    %v1362 = vunpack.c.l.b16 %v269
    %v1363 = vunpack.c.h.b16 %v269
    %v1364 = vunpack.c.l.b16 %v270
    %v1365 = vunpack.c.h.b16 %v270
    %v1366 = vunpack.c.l.b16 %v271
    %v1367 = vunpack.c.h.b16 %v271
    %v1368 = vunpack.c.l.b16 %v272
    %v1369 = vunpack.c.h.b16 %v272
    %v1370 = vunpack.c.l.b16 %v273
    %v1371 = vunpack.c.h.b16 %v273
    %v1372 = vunpack.c.l.b16 %v274
    %v1373 = vunpack.c.h.b16 %v274
    %v1374 = vunpack.c.l.b16 %v275
    %v1375 = vunpack.c.h.b16 %v275
    %v1376 = vunpack.c.l.b16 %v276
    %v1377 = vunpack.c.h.b16 %v276
    %v1378 = vunpack.c.l.b16 %v277
    %v1379 = vunpack.c.h.b16 %v277
    %v1380 = vunpack.c.l.b16 %v278
    %v1381 = vunpack.c.h.b16 %v278
    %v1382 = vunpack.c.l.b16 %v279
    %v1383 = vunpack.c.h.b16 %v279
    %v1384 = vunpack.c.l.b16 %v280
    %v1385 = vunpack.c.h.b16 %v280
    %v1386 = vunpack.c.l.b16 %v281
    %v1387 = vunpack.c.h.b16 %v281
    %v1388 = vunpack.c.l.b16 %v282
    %v1389 = vunpack.c.h.b16 %v282
    %v1390 = vunpack.c.l.b16 %v283
    %v1391 = vunpack.c.h.b16 %v283
    %v1392 = vunpack.c.l.b16 %v284
    %v1393 = vunpack.c.h.b16 %v284
    %v1394 = vunpack.c.l.b16 %v285
    %v1395 = vunpack.c.h.b16 %v285
    %v1396 = vunpack.c.l.b16 %v286
    %v1397 = vunpack.c.h.b16 %v286
    %v1398 = vunpack.c.l.b16 %v287
    %v1399 = vunpack.c.h.b16 %v287
    %v1400 = vunpack.c.l.b16 %v288
    %v1401 = vunpack.c.h.b16 %v288
    %v1402 = vunpack.c.l.b16 %v289
    %v1403 = vunpack.c.h.b16 %v289
    %v1404 = vunpack.c.l.b16 %v290
    %v1405 = vunpack.c.h.b16 %v290
    %v1406 = vunpack.c.l.b16 %v291
    %v1407 = vunpack.c.h.b16 %v291
    %v1408 = vunpack.c.l.b16 %v292
    %v1409 = vunpack.c.h.b16 %v292
    %v1410 = vunpack.c.l.b16 %v293
    %v1411 = vunpack.c.h.b16 %v293
    %v1412 = vunpack.c.l.b16 %v294
    %v1413 = vunpack.c.h.b16 %v294
    %v1414 = vunpack.c.l.b16 %v295
    %v1415 = vunpack.c.h.b16 %v295
    %v1416 = vunpack.c.l.b16 %v296
    %v1417 = vunpack.c.h.b16 %v296
    %v1418 = vunpack.c.l.b16 %v297
    %v1419 = vunpack.c.h.b16 %v297
    %v1420 = vunpack.c.l.b16 %v298
    %v1421 = vunpack.c.h.b16 %v298
    %v1422 = vunpack.c.l.b16 %v299
    %v1423 = vunpack.c.h.b16 %v299
    %v1424 = vunpack.c.l.b16 %v300
    %v1425 = vunpack.c.h.b16 %v300
    %v1426 = vunpack.c.l.b16 %v301
    %v1427 = vunpack.c.h.b16 %v301
    %v1428 = vunpack.c.l.b16 %v302
    %v1429 = vunpack.c.h.b16 %v302
    %v1430 = vunpack.c.l.b16 %v303
    %v1431 = vunpack.c.h.b16 %v303
    %v1432 = vunpack.c.l.b16 %v304
    %v1433 = vunpack.c.h.b16 %v304
    %v1434 = vunpack.c.l.b16 %v305
    %v1435 = vunpack.c.h.b16 %v305
    %v1436 = vunpack.c.l.b16 %v306
    %v1437 = vunpack.c.h.b16 %v306
    %v1438 = vunpack.c.l.b16 %v307
    %v1439 = vunpack.c.h.b16 %v307
    %v1440 = vunpack.c.l.b16 %v308
    %v1441 = vunpack.c.h.b16 %v308
    %v1442 = vunpack.c.l.b16 %v309
    %v1443 = vunpack.c.h.b16 %v309
    %v1444 = vunpack.c.l.b16 %v310
    %v1445 = vunpack.c.h.b16 %v310
    %v1446 = vunpack.c.l.b16 %v311
    %v1447 = vunpack.c.h.b16 %v311
    %v1448 = vunpack.c.l.b16 %v312
    %v1449 = vunpack.c.h.b16 %v312
    %v1450 = vunpack.c.l.b16 %v313
    %v1451 = vunpack.c.h.b16 %v313
    %v1452 = vunpack.c.l.b16 %v314
    %v1453 = vunpack.c.h.b16 %v314
    %v1454 = vunpack.c.l.b16 %v315
    %v1455 = vunpack.c.h.b16 %v315
    %v1456 = vunpack.c.l.b16 %v316
    %v1457 = vunpack.c.h.b16 %v316
    %v1458 = vunpack.c.l.b16 %v317
    %v1459 = vunpack.c.h.b16 %v317
    %v1460 = vunpack.c.l.b16 %v318
    %v1461 = vunpack.c.h.b16 %v318
    %v1462 = vunpack.c.l.b16 %v319
    %v1463 = vunpack.c.h.b16 %v319
    %v1464 = vunpack.c.l.b16 %v320
    %v1465 = vunpack.c.h.b16 %v320
    %v1466 = vunpack.c.l.b16 %v321
    %v1467 = vunpack.c.h.b16 %v321
    %v1468 = vunpack.c.l.b16 %v322
    %v1469 = vunpack.c.h.b16 %v322
    %v1470 = vunpack.c.l.b16 %v323
    %v1471 = vunpack.c.h.b16 %v323
    %v1472 = vunpack.c.l.b16 %v324
    %v1473 = vunpack.c.h.b16 %v324
    %v1474 = vunpack.c.l.b16 %v325
    %v1475 = vunpack.c.h.b16 %v325
    %v1476 = vunpack.c.l.b16 %v326
    %v1477 = vunpack.c.h.b16 %v326
    %v1478 = vunpack.c.l.b16 %v327
    %v1479 = vunpack.c.h.b16 %v327
    %v1480 = vunpack.c.l.b16 %v328
    %v1481 = vunpack.c.h.b16 %v328
    %v1482 = vunpack.c.l.b16 %v329
    %v1483 = vunpack.c.h.b16 %v329
    %v1484 = vunpack.c.l.b16 %v330
    %v1485 = vunpack.c.h.b16 %v330
    %v1486 = vunpack.c.l.b16 %v331
    %v1487 = vunpack.c.h.b16 %v331
    %v1488 = vunpack.c.l.b16 %v332
    %v1489 = vunpack.c.h.b16 %v332
    %v1490 = vunpack.c.l.b16 %v333
    %v1491 = vunpack.c.h.b16 %v333
    %v1492 = vunpack.c.l.b16 %v334
    %v1493 = vunpack.c.h.b16 %v334
    %v1494 = vunpack.c.l.b16 %v335
    %v1495 = vunpack.c.h.b16 %v335
    %v1496 = vunpack.c.l.b16 %v336
    %v1497 = vunpack.c.h.b16 %v336
    %v1498 = vunpack.c.l.b16 %v337
    %v1499 = vunpack.c.h.b16 %v337
    %v1500 = vunpack.c.l.b16 %v338
    %v1501 = vunpack.c.h.b16 %v338
    %v1502 = vunpack.c.l.b16 %v339
    %v1503 = vunpack.c.h.b16 %v339
    %v1504 = vunpack.c.l.b16 %v340
    %v1505 = vunpack.c.h.b16 %v340
    %v1506 = vunpack.c.l.b16 %v341
    %v1507 = vunpack.c.h.b16 %v341
    %v1508 = vunpack.c.l.b16 %v342
    %v1509 = vunpack.c.h.b16 %v342
    %v1510 = vunpack.c.l.b16 %v343
    %v1511 = vunpack.c.h.b16 %v343
    %v1512 = vunpack.c.l.b16 %v344
    %v1513 = vunpack.c.h.b16 %v344
    %v1514 = vunpack.c.l.b16 %v345
    %v1515 = vunpack.c.h.b16 %v345
    %v1516 = vunpack.c.l.b16 %v346
    %v1517 = vunpack.c.h.b16 %v346
    %v1518 = vunpack.c.l.b16 %v347
    %v1519 = vunpack.c.h.b16 %v347
    %v1520 = vunpack.c.l.b16 %v348
    %v1521 = vunpack.c.h.b16 %v348
    %v1522 = vunpack.c.l.b16 %v349
    %v1523 = vunpack.c.h.b16 %v349
    %v1524 = vunpack.c.l.b16 %v350
    %v1525 = vunpack.c.h.b16 %v350
    %v1526 = vunpack.c.l.b16 %v351
    %v1527 = vunpack.c.h.b16 %v351
    %v1528 = vunpack.c.l.b16 %v352
    %v1529 = vunpack.c.h.b16 %v352
    %v1530 = vunpack.c.l.b16 %v353
    %v1531 = vunpack.c.h.b16 %v353
    %v1532 = vunpack.c.l.b16 %v354
    %v1533 = vunpack.c.h.b16 %v354
    %v1534 = vunpack.c.l.b16 %v355
    %v1535 = vunpack.c.h.b16 %v355
    %v1536 = vunpack.c.l.b16 %v356
    %v1537 = vunpack.c.h.b16 %v356
    %v1538 = vunpack.c.l.b16 %v357
    %v1539 = vunpack.c.h.b16 %v357
    %v1540 = vunpack.c.l.b16 %v358
    %v1541 = vunpack.c.h.b16 %v358
    %v1542 = vunpack.c.l.b16 %v359
    %v1543 = vunpack.c.h.b16 %v359
    %v1544 = vunpack.c.l.b16 %v360
    %v1545 = vunpack.c.h.b16 %v360
    %v1546 = vunpack.c.l.b16 %v361
    %v1547 = vunpack.c.h.b16 %v361
    %v1548 = vunpack.c.l.b16 %v362
    %v1549 = vunpack.c.h.b16 %v362
    %v1550 = vunpack.c.l.b16 %v363
    %v1551 = vunpack.c.h.b16 %v363
    %v1552 = vunpack.c.l.b16 %v364
    %v1553 = vunpack.c.h.b16 %v364
    %v1554 = vunpack.c.l.b16 %v365
    %v1555 = vunpack.c.h.b16 %v365
    %v1556 = vunpack.c.l.b16 %v366
    %v1557 = vunpack.c.h.b16 %v366
    %v1558 = vunpack.c.l.b16 %v367
    %v1559 = vunpack.c.h.b16 %v367
    %v1560 = vunpack.c.l.b16 %v368
    %v1561 = vunpack.c.h.b16 %v368
    %v1562 = vunpack.c.l.b16 %v369
    %v1563 = vunpack.c.h.b16 %v369
    %v1564 = vunpack.c.l.b16 %v370
    %v1565 = vunpack.c.h.b16 %v370
    %v1566 = vunpack.c.l.b16 %v371
    %v1567 = vunpack.c.h.b16 %v371
    %v1568 = vunpack.c.l.b16 %v372
    %v1569 = vunpack.c.h.b16 %v372
    %v1570 = vunpack.c.l.b16 %v373
    %v1571 = vunpack.c.h.b16 %v373
    %v1572 = vunpack.c.l.b16 %v374
    %v1573 = vunpack.c.h.b16 %v374
    %v1574 = vunpack.c.l.b16 %v375
    %v1575 = vunpack.c.h.b16 %v375
    %v1576 = vunpack.c.l.b16 %v376
    %v1577 = vunpack.c.h.b16 %v376
    %v1578 = vunpack.c.l.b16 %v377
    %v1579 = vunpack.c.h.b16 %v377
    %v1580 = vunpack.c.l.b16 %v378
    %v1581 = vunpack.c.h.b16 %v378
    %v1582 = vunpack.c.l.b16 %v379
    %v1583 = vunpack.c.h.b16 %v379
    %v1584 = vunpack.c.l.b16 %v380
    %v1585 = vunpack.c.h.b16 %v380
    %v1586 = vunpack.c.l.b16 %v381
    %v1587 = vunpack.c.h.b16 %v381
    %v1588 = vunpack.c.l.b16 %v382
    %v1589 = vunpack.c.h.b16 %v382
    %v1590 = vunpack.c.l.b16 %v383
    %v1591 = vunpack.c.h.b16 %v383
    %v1592 = vunpack.c.l.b16 %v384
    %v1593 = vunpack.c.h.b16 %v384
    %v1594 = vunpack.c.l.b16 %v385
    %v1595 = vunpack.c.h.b16 %v385
    %v1596 = vunpack.c.l.b16 %v386
    %v1597 = vunpack.c.h.b16 %v386
    %v1598 = vunpack.c.l.b16 %v387
    %v1599 = vunpack.c.h.b16 %v387
    %v1600 = vunpack.c.l.b16 %v388
    %v1601 = vunpack.c.h.b16 %v388
    %v1602 = vunpack.c.l.b16 %v389
    %v1603 = vunpack.c.h.b16 %v389
    %v1604 = vunpack.c.l.b16 %v390
    %v1605 = vunpack.c.h.b16 %v390
    %v1606 = vunpack.c.l.b16 %v391
    %v1607 = vunpack.c.h.b16 %v391
    %v1608 = vunpack.c.l.b16 %v392
    %v1609 = vunpack.c.h.b16 %v392
    %v1610 = vunpack.c.l.b16 %v393
    %v1611 = vunpack.c.h.b16 %v393
    %v1612 = vunpack.c.l.b16 %v394
    %v1613 = vunpack.c.h.b16 %v394
    %v1614 = vunpack.c.l.b16 %v395
    %v1615 = vunpack.c.h.b16 %v395
    %v1616 = vunpack.c.l.b16 %v396
    %v1617 = vunpack.c.h.b16 %v396
    %v1618 = vunpack.c.l.b16 %v397
    %v1619 = vunpack.c.h.b16 %v397
    %v1620 = vunpack.c.l.b16 %v398
    %v1621 = vunpack.c.h.b16 %v398
    %v1622 = vunpack.c.l.b16 %v399
    %v1623 = vunpack.c.h.b16 %v399
    %v1624 = vunpack.c.l.b16 %v400
    %v1625 = vunpack.c.h.b16 %v400
    %v1626 = vunpack.c.l.b16 %v401
    %v1627 = vunpack.c.h.b16 %v401
    %v1628 = vunpack.c.l.b16 %v402
    %v1629 = vunpack.c.h.b16 %v402
    %v1630 = vunpack.c.l.b16 %v403
    %v1631 = vunpack.c.h.b16 %v403
    %v1632 = vunpack.c.l.b16 %v404
    %v1633 = vunpack.c.h.b16 %v404
    %v1634 = vunpack.c.l.b16 %v405
    %v1635 = vunpack.c.h.b16 %v405
    %v1636 = vunpack.c.l.b16 %v406
    %v1637 = vunpack.c.h.b16 %v406
    %v1638 = vunpack.c.l.b16 %v407
    %v1639 = vunpack.c.h.b16 %v407
    %v1640 = vunpack.c.l.b16 %v408
    %v1641 = vunpack.c.h.b16 %v408
    %v1642 = vunpack.c.l.b16 %v409
    %v1643 = vunpack.c.h.b16 %v409
    %v1644 = vunpack.c.l.b16 %v410
    %v1645 = vunpack.c.h.b16 %v410
    %v1646 = vunpack.c.l.b16 %v411
    %v1647 = vunpack.c.h.b16 %v411
    %v1648 = vunpack.c.l.b16 %v412
    %v1649 = vunpack.c.h.b16 %v412
    %v1650 = vunpack.c.l.b16 %v413
    %v1651 = vunpack.c.h.b16 %v413
    %v1652 = vunpack.c.l.b16 %v414
    %v1653 = vunpack.c.h.b16 %v414
    %v1654 = vunpack.c.l.b16 %v415
    %v1655 = vunpack.c.h.b16 %v415
    %v1656 = vunpack.c.l.b16 %v416
    %v1657 = vunpack.c.h.b16 %v416
    %v1658 = vunpack.c.l.b16 %v417
    %v1659 = vunpack.c.h.b16 %v417
    %v1660 = vunpack.c.l.b16 %v418
    %v1661 = vunpack.c.h.b16 %v418
    %v1662 = vunpack.c.l.b16 %v419
    %v1663 = vunpack.c.h.b16 %v419
    %v1664 = vunpack.c.l.b16 %v420
    %v1665 = vunpack.c.h.b16 %v420
    %v1666 = vunpack.c.l.b16 %v421
    %v1667 = vunpack.c.h.b16 %v421
    %v1668 = vunpack.c.l.b16 %v422
    %v1669 = vunpack.c.h.b16 %v422
    %v1670 = vunpack.c.l.b16 %v423
    %v1671 = vunpack.c.h.b16 %v423
    %v1672 = vunpack.c.l.b16 %v424
    %v1673 = vunpack.c.h.b16 %v424
    %v1674 = vunpack.c.l.b16 %v425
    %v1675 = vunpack.c.h.b16 %v425
    %v1676 = vunpack.c.l.b16 %v426
    %v1677 = vunpack.c.h.b16 %v426
    %v1678 = vunpack.c.l.b16 %v427
    %v1679 = vunpack.c.h.b16 %v427
    %v1680 = vunpack.c.l.b16 %v428
    %v1681 = vunpack.c.h.b16 %v428
    %v1682 = vunpack.c.l.b16 %v429
    %v1683 = vunpack.c.h.b16 %v429
    %v1684 = vunpack.c.l.b16 %v430
    %v1685 = vunpack.c.h.b16 %v430
    %v1686 = vunpack.c.l.b16 %v431
    %v1687 = vunpack.c.h.b16 %v431
    %v1688 = vunpack.c.l.b16 %v432
    %v1689 = vunpack.c.h.b16 %v432
    %v1690 = vunpack.c.l.b16 %v433
    %v1691 = vunpack.c.h.b16 %v433
    %v1692 = vunpack.c.l.b16 %v434
    %v1693 = vunpack.c.h.b16 %v434
    %v1694 = vunpack.c.l.b16 %v435
    %v1695 = vunpack.c.h.b16 %v435
    %v1696 = vunpack.c.l.b16 %v436
    %v1697 = vunpack.c.h.b16 %v436
    %v1698 = vunpack.c.l.b16 %v437
    %v1699 = vunpack.c.h.b16 %v437
    %v1700 = vunpack.c.l.b16 %v438
    %v1701 = vunpack.c.h.b16 %v438
    %v1702 = vunpack.c.l.b16 %v439
    %v1703 = vunpack.c.h.b16 %v439
    %v1704 = vunpack.c.l.b16 %v440
    %v1705 = vunpack.c.h.b16 %v440
    %v1706 = vunpack.c.l.b16 %v441
    %v1707 = vunpack.c.h.b16 %v441
    %v1708 = vunpack.c.l.b16 %v442
    %v1709 = vunpack.c.h.b16 %v442
    %v1710 = vunpack.c.l.b16 %v443
    %v1711 = vunpack.c.h.b16 %v443
    %v1712 = vunpack.c.l.b16 %v444
    %v1713 = vunpack.c.h.b16 %v444
    %v1714 = vunpack.c.l.b16 %v445
    %v1715 = vunpack.c.h.b16 %v445
    %v1716 = vpack.c.b16 %v1272, %v1268
    %v1717 = vpack.c.b16 %v1273, %v1269
    %v1718 = vpack.c.b16 %v1274, %v1270
    %v1719 = vpack.c.b16 %v1275, %v1271
    %v1720 = vpack.c.b16 %v1280, %v1276
    %v1721 = vpack.c.b16 %v1281, %v1277
    %v1722 = vpack.c.b16 %v1282, %v1278
    %v1723 = vpack.c.b16 %v1283, %v1279
    %v1724 = vpack.c.b16 %v1288, %v1284
    %v1725 = vpack.c.b16 %v1289, %v1285
    %v1726 = vpack.c.b16 %v1290, %v1286
    %v1727 = vpack.c.b16 %v1291, %v1287
    %v1728 = vpack.c.b16 %v1296, %v1292
    %v1729 = vpack.c.b16 %v1297, %v1293
    %v1730 = vpack.c.b16 %v1298, %v1294
    %v1731 = vpack.c.b16 %v1299, %v1295
    %v1732 = vpack.c.b16 %v1304, %v1300
    %v1733 = vpack.c.b16 %v1305, %v1301
    %v1734 = vpack.c.b16 %v1306, %v1302
    %v1735 = vpack.c.b16 %v1307, %v1303
    %v1736 = vpack.c.b16 %v1312, %v1308
    %v1737 = vpack.c.b16 %v1313, %v1309
    %v1738 = vpack.c.b16 %v1314, %v1310
    %v1739 = vpack.c.b16 %v1315, %v1311
    %v1740 = vpack.c.b16 %v1320, %v1316
    %v1741 = vpack.c.b16 %v1321, %v1317
    %v1742 = vpack.c.b16 %v1322, %v1318
    %v1743 = vpack.c.b16 %v1323, %v1319
    %v1744 = vpack.c.b16 %v1328, %v1324
    %v1745 = vpack.c.b16 %v1329, %v1325
    %v1746 = vpack.c.b16 %v1330, %v1326
    %v1747 = vpack.c.b16 %v1331, %v1327
    %v1748 = vpack.c.b16 %v1336, %v1332
    %v1749 = vpack.c.b16 %v1337, %v1333
    %v1750 = vpack.c.b16 %v1338, %v1334
    %v1751 = vpack.c.b16 %v1339, %v1335
    %v1752 = vpack.c.b16 %v1344, %v1340
    %v1753 = vpack.c.b16 %v1345, %v1341
    %v1754 = vpack.c.b16 %v1346, %v1342
    %v1755 = vpack.c.b16 %v1347, %v1343
    %v1756 = vpack.c.b16 %v1352, %v1348
    %v1757 = vpack.c.b16 %v1353, %v1349
    %v1758 = vpack.c.b16 %v1354, %v1350
    %v1759 = vpack.c.b16 %v1355, %v1351
    %v1760 = vpack.c.b16 %v1360, %v1356
    %v1761 = vpack.c.b16 %v1361, %v1357
    %v1762 = vpack.c.b16 %v1362, %v1358
    %v1763 = vpack.c.b16 %v1363, %v1359
    %v1764 = vpack.c.b16 %v1368, %v1364
    %v1765 = vpack.c.b16 %v1369, %v1365
    %v1766 = vpack.c.b16 %v1370, %v1366
    %v1767 = vpack.c.b16 %v1371, %v1367
    %v1768 = vpack.c.b16 %v1376, %v1372
    %v1769 = vpack.c.b16 %v1377, %v1373
    %v1770 = vpack.c.b16 %v1378, %v1374
    %v1771 = vpack.c.b16 %v1379, %v1375
    %v1772 = vpack.c.b16 %v1384, %v1380
    %v1773 = vpack.c.b16 %v1385, %v1381
    %v1774 = vpack.c.b16 %v1386, %v1382
    %v1775 = vpack.c.b16 %v1387, %v1383
    %v1776 = vpack.c.b16 %v1392, %v1388
    %v1777 = vpack.c.b16 %v1393, %v1389
    %v1778 = vpack.c.b16 %v1394, %v1390
    %v1779 = vpack.c.b16 %v1395, %v1391
    %v1780 = vpack.c.b16 %v1400, %v1396
    %v1781 = vpack.c.b16 %v1401, %v1397
    %v1782 = vpack.c.b16 %v1402, %v1398
    %v1783 = vpack.c.b16 %v1403, %v1399
    %v1784 = vpack.c.b16 %v1408, %v1404
    %v1785 = vpack.c.b16 %v1409, %v1405
    %v1786 = vpack.c.b16 %v1410, %v1406
    %v1787 = vpack.c.b16 %v1411, %v1407
    %v1788 = vpack.c.b16 %v1416, %v1412
    %v1789 = vpack.c.b16 %v1417, %v1413
    %v1790 = vpack.c.b16 %v1418, %v1414
    %v1791 = vpack.c.b16 %v1419, %v1415
    %v1792 = vpack.c.b16 %v1424, %v1420
    %v1793 = vpack.c.b16 %v1425, %v1421
    %v1794 = vpack.c.b16 %v1426, %v1422
    %v1795 = vpack.c.b16 %v1427, %v1423
    %v1796 = vpack.c.b16 %v1432, %v1428
    %v1797 = vpack.c.b16 %v1433, %v1429
    %v1798 = vpack.c.b16 %v1434, %v1430
    %v1799 = vpack.c.b16 %v1435, %v1431
    %v1800 = vpack.c.b16 %v1440, %v1436
    %v1801 = vpack.c.b16 %v1441, %v1437
    %v1802 = vpack.c.b16 %v1442, %v1438
    %v1803 = vpack.c.b16 %v1443, %v1439
    %v1804 = vpack.c.b16 %v1448, %v1444
    %v1805 = vpack.c.b16 %v1449, %v1445
    %v1806 = vpack.c.b16 %v1450, %v1446
    %v1807 = vpack.c.b16 %v1451, %v1447
    %v1808 = vpack.c.b16 %v1456, %v1452
    %v1809 = vpack.c.b16 %v1457, %v1453
    %v1810 = vpack.c.b16 %v1458, %v1454
    %v1811 = vpack.c.b16 %v1459, %v1455
    %v1812 = vpack.c.b16 %v1464, %v1460
    %v1813 = vpack.c.b16 %v1465, %v1461
    %v1814 = vpack.c.b16 %v1466, %v1462
    %v1815 = vpack.c.b16 %v1467, %v1463
    %v1816 = vpack.c.b16 %v1472, %v1468
    %v1817 = vpack.c.b16 %v1473, %v1469
    %v1818 = vpack.c.b16 %v1474, %v1470
    %v1819 = vpack.c.b16 %v1475, %v1471
    %v1820 = vpack.c.b16 %v1480, %v1476
    %v1821 = vpack.c.b16 %v1481, %v1477
    %v1822 = vpack.c.b16 %v1482, %v1478
    %v1823 = vpack.c.b16 %v1483, %v1479
    %v1824 = vpack.c.b16 %v1488, %v1484
    %v1825 = vpack.c.b16 %v1489, %v1485
    %v1826 = vpack.c.b16 %v1490, %v1486
    %v1827 = vpack.c.b16 %v1491, %v1487
    %v1828 = vpack.c.b16 %v1496, %v1492
    %v1829 = vpack.c.b16 %v1497, %v1493
    %v1830 = vpack.c.b16 %v1498, %v1494
    %v1831 = vpack.c.b16 %v1499, %v1495
    %v1832 = vpack.c.b16 %v1504, %v1500
    %v1833 = vpack.c.b16 %v1505, %v1501
    %v1834 = vpack.c.b16 %v1506, %v1502
    %v1835 = vpack.c.b16 %v1507, %v1503
    %v1836 = vpack.c.b16 %v1512, %v1508
    %v1837 = vpack.c.b16 %v1513, %v1509
    %v1838 = vpack.c.b16 %v1514, %v1510
    %v1839 = vpack.c.b16 %v1515, %v1511
    %v1840 = vpack.c.b16 %v1520, %v1516
    %v1841 = vpack.c.b16 %v1521, %v1517
    %v1842 = vpack.c.b16 %v1522, %v1518
    %v1843 = vpack.c.b16 %v1523, %v1519
    %v1844 = vpack.c.b16 %v1528, %v1524
    %v1845 = vpack.c.b16 %v1529, %v1525
    %v1846 = vpack.c.b16 %v1530, %v1526
    %v1847 = vpack.c.b16 %v1531, %v1527
    %v1848 = vpack.c.b16 %v1536, %v1532
    %v1849 = vpack.c.b16 %v1537, %v1533
    %v1850 = vpack.c.b16 %v1538, %v1534
    %v1851 = vpack.c.b16 %v1539, %v1535
    %v1852 = vpack.c.b16 %v1544, %v1540
    %v1853 = vpack.c.b16 %v1545, %v1541
    %v1854 = vpack.c.b16 %v1546, %v1542
    %v1855 = vpack.c.b16 %v1547, %v1543
    %v1856 = vpack.c.b16 %v1552, %v1548
    %v1857 = vpack.c.b16 %v1553, %v1549
    %v1858 = vpack.c.b16 %v1554, %v1550
    %v1859 = vpack.c.b16 %v1555, %v1551
    %v1860 = vpack.c.b16 %v1560, %v1556
    %v1861 = vpack.c.b16 %v1561, %v1557
    %v1862 = vpack.c.b16 %v1562, %v1558
    %v1863 = vpack.c.b16 %v1563, %v1559
    %v1864 = vpack.c.b16 %v1568, %v1564
    %v1865 = vpack.c.b16 %v1569, %v1565
    %v1866 = vpack.c.b16 %v1570, %v1566
    %v1867 = vpack.c.b16 %v1571, %v1567
    %v1868 = vpack.c.b16 %v1576, %v1572
    %v1869 = vpack.c.b16 %v1577, %v1573
    %v1870 = vpack.c.b16 %v1578, %v1574
    %v1871 = vpack.c.b16 %v1579, %v1575
    %v1872 = vpack.c.b16 %v1584, %v1580
    %v1873 = vpack.c.b16 %v1585, %v1581
    %v1874 = vpack.c.b16 %v1586, %v1582
    %v1875 = vpack.c.b16 %v1587, %v1583
    %v1876 = vpack.c.b16 %v1592, %v1588
    %v1877 = vpack.c.b16 %v1593, %v1589
    %v1878 = vpack.c.b16 %v1594, %v1590
    %v1879 = vpack.c.b16 %v1595, %v1591
    %v1880 = vpack.c.b16 %v1600, %v1596
    %v1881 = vpack.c.b16 %v1601, %v1597
    %v1882 = vpack.c.b16 %v1602, %v1598
    %v1883 = vpack.c.b16 %v1603, %v1599
    %v1884 = vpack.c.b16 %v1608, %v1604
    %v1885 = vpack.c.b16 %v1609, %v1605
    %v1886 = vpack.c.b16 %v1610, %v1606
    %v1887 = vpack.c.b16 %v1611, %v1607
    %v1888 = vpack.c.b16 %v1616, %v1612
    %v1889 = vpack.c.b16 %v1617, %v1613
    %v1890 = vpack.c.b16 %v1618, %v1614
    %v1891 = vpack.c.b16 %v1619, %v1615
    %v1892 = vpack.c.b16 %v1624, %v1620
    %v1893 = vpack.c.b16 %v1625, %v1621
    %v1894 = vpack.c.b16 %v1626, %v1622
    %v1895 = vpack.c.b16 %v1627, %v1623
    %v1896 = vpack.c.b16 %v1632, %v1628
    %v1897 = vpack.c.b16 %v1633, %v1629
    %v1898 = vpack.c.b16 %v1634, %v1630
    %v1899 = vpack.c.b16 %v1635, %v1631
    %v1900 = vpack.c.b16 %v1640, %v1636
    %v1901 = vpack.c.b16 %v1641, %v1637
    %v1902 = vpack.c.b16 %v1642, %v1638
    %v1903 = vpack.c.b16 %v1643, %v1639
    %v1904 = vpack.c.b16 %v1648, %v1644
    %v1905 = vpack.c.b16 %v1649, %v1645
    %v1906 = vpack.c.b16 %v1650, %v1646
    %v1907 = vpack.c.b16 %v1651, %v1647
    %v1908 = vpack.c.b16 %v1656, %v1652
    %v1909 = vpack.c.b16 %v1657, %v1653
    %v1910 = vpack.c.b16 %v1658, %v1654
    %v1911 = vpack.c.b16 %v1659, %v1655
    %v1912 = vpack.c.b16 %v1664, %v1660
    %v1913 = vpack.c.b16 %v1665, %v1661
    %v1914 = vpack.c.b16 %v1666, %v1662
    %v1915 = vpack.c.b16 %v1667, %v1663
    %v1916 = vpack.c.b16 %v1672, %v1668
    %v1917 = vpack.c.b16 %v1673, %v1669
    %v1918 = vpack.c.b16 %v1674, %v1670
    %v1919 = vpack.c.b16 %v1675, %v1671
    %v1920 = vpack.c.b16 %v1680, %v1676
    %v1921 = vpack.c.b16 %v1681, %v1677
    %v1922 = vpack.c.b16 %v1682, %v1678
    %v1923 = vpack.c.b16 %v1683, %v1679
    %v1924 = vpack.c.b16 %v1688, %v1684
    %v1925 = vpack.c.b16 %v1689, %v1685
    %v1926 = vpack.c.b16 %v1690, %v1686
    %v1927 = vpack.c.b16 %v1691, %v1687
    %v1928 = vpack.c.b16 %v1696, %v1692
    %v1929 = vpack.c.b16 %v1697, %v1693
    %v1930 = vpack.c.b16 %v1698, %v1694
    %v1931 = vpack.c.b16 %v1699, %v1695
    %v1932 = vpack.c.b16 %v1704, %v1700
    %v1933 = vpack.c.b16 %v1705, %v1701
    %v1934 = vpack.c.b16 %v1706, %v1702
    %v1935 = vpack.c.b16 %v1707, %v1703
    %v1936 = vpack.c.b16 %v1712, %v1708
    %v1937 = vpack.c.b16 %v1713, %v1709
    %v1938 = vpack.c.b16 %v1714, %v1710
    %v1939 = vpack.c.b16 %v1715, %v1711
    %2164 = vmatprep.subr.bf16.mxu0 %v1745
    %2165 = vmatpush1.bf16.msra.mxu0 %v1744
    %2166 = vmatprep.subr.bf16.mxu0 %v1741
    %2167 = vmatpush1.bf16.msra.mxu0 %v1740
    %2168 = vmatprep.subr.bf16.mxu0 %v1737
    %2169 = vmatpush1.bf16.msra.mxu0 %v1736
    %2170 = vmatprep.subr.bf16.mxu0 %v1733
    %2171 = vmatpush1.bf16.msra.mxu0 %v1732
    %2172 = vmatprep.subr.bf16.mxu0 %v1729
    %2173 = vmatpush1.bf16.msra.mxu0 %v1728
    %2174 = vmatprep.subr.bf16.mxu0 %v1725
    %2175 = vmatpush1.bf16.msra.mxu0 %v1724
    %2176 = vmatprep.subr.bf16.mxu0 %v1721
    %2177 = vmatpush1.bf16.msra.mxu0 %v1720
    %2178 = vmatprep.subr.bf16.mxu0 %v1717
    %2179 = vmatpush1.bf16.msra.mxu0 %v1716
    %2180 = vmatprep.subr.bf16.mxu0 %v1777
    %2181 = vmatpush2.bf16.msra.mxu0 %v1776
    %2182 = vmatprep.subr.bf16.mxu0 %v1773
    %2183 = vmatpush2.bf16.msra.mxu0 %v1772
    %2184 = vmatprep.subr.bf16.mxu0 %v1769
    %2185 = vmatpush2.bf16.msra.mxu0 %v1768
    %2186 = vmatprep.subr.bf16.mxu0 %v1765
    %2187 = vmatpush2.bf16.msra.mxu0 %v1764
    %2188 = vmatprep.subr.bf16.mxu0 %v1761
    %2189 = vmatpush2.bf16.msra.mxu0 %v1760
    %2190 = vmatprep.subr.bf16.mxu0 %v1757
    %2191 = vmatpush2.bf16.msra.mxu0 %v1756
    %2192 = vmatprep.subr.bf16.mxu0 %v1753
    %2193 = vmatpush2.bf16.msra.mxu0 %v1752
    %2194 = vmatprep.subr.bf16.mxu0 %v1749
    %2195 = vmatpush2.bf16.msra.mxu0 %v1748
    %2196 = vmatprep.mubr.bf16.mxu0 %v821
    %2197 = vmatmul.mubr.bf16.gmra.mxu0 %v820
    %v2198 = vpop.f32.mrf.mxu0
    %v2199 = vadd.f32 %v451, %v2198
    %v2200 = vpop.f32.mrf.mxu0
    %v2201 = vadd.f32 %v455, %v2200
    %v2202 = vpop.f32.mrf.mxu0
    %v2203 = vadd.f32 %v451, %v2202
    %v2204 = vpop.f32.mrf.mxu0
    %v2205 = vadd.f32 %v455, %v2204
    %2206 = vmatprep.mubr.bf16.mxu0 %v828
    %2207 = vmatmul.mubr.bf16.gmra.mxu0 %v827
    %v2208 = vpop.f32.mrf.mxu0
    %v2209 = vadd.f32 %v451, %v2208
    %v2210 = vpop.f32.mrf.mxu0
    %v2211 = vadd.f32 %v455, %v2210
    %v2212 = vpop.f32.mrf.mxu0
    %v2213 = vadd.f32 %v451, %v2212
    %v2214 = vpop.f32.mrf.mxu0
    %v2215 = vadd.f32 %v455, %v2214
    %2216 = vmatprep.mubr.bf16.mxu0 %v835
    %2217 = vmatmul.mubr.bf16.gmra.mxu0 %v834
    %v2218 = vpop.f32.mrf.mxu0
    %v2219 = vadd.f32 %v451, %v2218
    %v2220 = vpop.f32.mrf.mxu0
    %v2221 = vadd.f32 %v455, %v2220
    %v2222 = vpop.f32.mrf.mxu0
    %v2223 = vadd.f32 %v451, %v2222
    %v2224 = vpop.f32.mrf.mxu0
    %v2225 = vadd.f32 %v455, %v2224
    %2226 = vmatprep.mubr.bf16.mxu0 %v842
    %2227 = vmatmul.mubr.bf16.gmra.mxu0 %v841
    %v2228 = vpop.f32.mrf.mxu0
    %v2229 = vadd.f32 %v451, %v2228
    %v2230 = vpop.f32.mrf.mxu0
    %v2231 = vadd.f32 %v455, %v2230
    %v2232 = vpop.f32.mrf.mxu0
    %v2233 = vadd.f32 %v451, %v2232
    %v2234 = vpop.f32.mrf.mxu0
    %v2235 = vadd.f32 %v455, %v2234
    %2236 = vmatprep.mubr.bf16.mxu0 %v849
    %2237 = vmatmul.mubr.bf16.gmra.mxu0 %v848
    %v2238 = vpop.f32.mrf.mxu0
    %v2239 = vadd.f32 %v451, %v2238
    %v2240 = vpop.f32.mrf.mxu0
    %v2241 = vadd.f32 %v455, %v2240
    %v2242 = vpop.f32.mrf.mxu0
    %v2243 = vadd.f32 %v451, %v2242
    %v2244 = vpop.f32.mrf.mxu0
    %v2245 = vadd.f32 %v455, %v2244
    %2246 = vmatprep.mubr.bf16.mxu0 %v856
    %2247 = vmatmul.mubr.bf16.gmra.mxu0 %v855
    %v2248 = vpop.f32.mrf.mxu0
    %v2249 = vadd.f32 %v451, %v2248
    %v2250 = vpop.f32.mrf.mxu0
    %v2251 = vadd.f32 %v455, %v2250
    %v2252 = vpop.f32.mrf.mxu0
    %v2253 = vadd.f32 %v451, %v2252
    %v2254 = vpop.f32.mrf.mxu0
    %v2255 = vadd.f32 %v455, %v2254
    %2256 = vmatprep.mubr.bf16.mxu0 %v863
    %2257 = vmatmul.mubr.bf16.gmra.mxu0 %v862
    %v2258 = vpop.f32.mrf.mxu0
    %v2259 = vadd.f32 %v451, %v2258
    %v2260 = vpop.f32.mrf.mxu0
    %v2261 = vadd.f32 %v455, %v2260
    %v2262 = vpop.f32.mrf.mxu0
    %v2263 = vadd.f32 %v451, %v2262
    %v2264 = vpop.f32.mrf.mxu0
    %v2265 = vadd.f32 %v455, %v2264
    %2266 = vmatprep.mubr.bf16.mxu0 %v870
    %2267 = vmatmul.mubr.bf16.gmra.mxu0 %v869
    %v2268 = vpop.f32.mrf.mxu0
    %v2269 = vadd.f32 %v451, %v2268
    %v2270 = vpop.f32.mrf.mxu0
    %v2271 = vadd.f32 %v455, %v2270
    %v2272 = vpop.f32.mrf.mxu0
    %v2273 = vadd.f32 %v451, %v2272
    %v2274 = vpop.f32.mrf.mxu0
    %v2275 = vadd.f32 %v455, %v2274
    %2276 = vmatprep.mubr.bf16.mxu0 %v877
    %2277 = vmatmul.mubr.bf16.gmra.mxu0 %v876
    %v2278 = vpop.f32.mrf.mxu0
    %v2279 = vadd.f32 %v451, %v2278
    %v2280 = vpop.f32.mrf.mxu0
    %v2281 = vadd.f32 %v455, %v2280
    %v2282 = vpop.f32.mrf.mxu0
    %v2283 = vadd.f32 %v451, %v2282
    %v2284 = vpop.f32.mrf.mxu0
    %v2285 = vadd.f32 %v455, %v2284
    %2286 = vmatprep.mubr.bf16.mxu0 %v884
    %2287 = vmatmul.mubr.bf16.gmra.mxu0 %v883
    %v2288 = vpop.f32.mrf.mxu0
    %v2289 = vadd.f32 %v451, %v2288
    %v2290 = vpop.f32.mrf.mxu0
    %v2291 = vadd.f32 %v455, %v2290
    %v2292 = vpop.f32.mrf.mxu0
    %v2293 = vadd.f32 %v451, %v2292
    %v2294 = vpop.f32.mrf.mxu0
    %v2295 = vadd.f32 %v455, %v2294
    %2296 = vmatprep.mubr.bf16.mxu0 %v891
    %2297 = vmatmul.mubr.bf16.gmra.mxu0 %v890
    %v2298 = vpop.f32.mrf.mxu0
    %v2299 = vadd.f32 %v451, %v2298
    %v2300 = vpop.f32.mrf.mxu0
    %v2301 = vadd.f32 %v455, %v2300
    %v2302 = vpop.f32.mrf.mxu0
    %v2303 = vadd.f32 %v451, %v2302
    %v2304 = vpop.f32.mrf.mxu0
    %v2305 = vadd.f32 %v455, %v2304
    %2306 = vmatprep.mubr.bf16.mxu0 %v898
    %2307 = vmatmul.mubr.bf16.gmra.mxu0 %v897
    %v2308 = vpop.f32.mrf.mxu0
    %v2309 = vadd.f32 %v451, %v2308
    %v2310 = vpop.f32.mrf.mxu0
    %v2311 = vadd.f32 %v455, %v2310
    %v2312 = vpop.f32.mrf.mxu0
    %v2313 = vadd.f32 %v451, %v2312
    %v2314 = vpop.f32.mrf.mxu0
    %v2315 = vadd.f32 %v455, %v2314
    %2316 = vmatprep.mubr.bf16.mxu0 %v905
    %2317 = vmatmul.mubr.bf16.gmra.mxu0 %v904
    %v2318 = vpop.f32.mrf.mxu0
    %v2319 = vadd.f32 %v451, %v2318
    %v2320 = vpop.f32.mrf.mxu0
    %v2321 = vadd.f32 %v455, %v2320
    %v2322 = vpop.f32.mrf.mxu0
    %v2323 = vadd.f32 %v451, %v2322
    %v2324 = vpop.f32.mrf.mxu0
    %v2325 = vadd.f32 %v455, %v2324
    %2326 = vmatprep.mubr.bf16.mxu0 %v912
    %2327 = vmatmul.mubr.bf16.gmra.mxu0 %v911
    %v2328 = vpop.f32.mrf.mxu0
    %v2329 = vadd.f32 %v451, %v2328
    %v2330 = vpop.f32.mrf.mxu0
    %v2331 = vadd.f32 %v455, %v2330
    %v2332 = vpop.f32.mrf.mxu0
    %v2333 = vadd.f32 %v451, %v2332
    %v2334 = vpop.f32.mrf.mxu0
    %v2335 = vadd.f32 %v455, %v2334
    %2336 = vmatprep.mubr.bf16.mxu0 %v919
    %2337 = vmatmul.mubr.bf16.gmra.mxu0 %v918
    %v2338 = vpop.f32.mrf.mxu0
    %v2339 = vadd.f32 %v451, %v2338
    %v2340 = vpop.f32.mrf.mxu0
    %v2341 = vadd.f32 %v455, %v2340
    %v2342 = vpop.f32.mrf.mxu0
    %v2343 = vadd.f32 %v451, %v2342
    %v2344 = vpop.f32.mrf.mxu0
    %v2345 = vadd.f32 %v455, %v2344
    %2346 = vmatprep.mubr.bf16.mxu0 %v926
    %2347 = vmatmul.mubr.bf16.gmra.mxu0 %v925
    %v2348 = vpop.f32.mrf.mxu0
    %v2349 = vadd.f32 %v451, %v2348
    %v2350 = vpop.f32.mrf.mxu0
    %v2351 = vadd.f32 %v455, %v2350
    %v2352 = vpop.f32.mrf.mxu0
    %v2353 = vadd.f32 %v451, %v2352
    %v2354 = vpop.f32.mrf.mxu0
    %v2355 = vadd.f32 %v455, %v2354
    %2356 = vdwg.mxu0
    %2357 = vmatprep.subr.bf16.mxu0 %v1809
    %2358 = vmatpush1.bf16.msra.mxu0 %v1808
    %2359 = vmatprep.subr.bf16.mxu0 %v1805
    %2360 = vmatpush1.bf16.msra.mxu0 %v1804
    %2361 = vmatprep.subr.bf16.mxu0 %v1801
    %2362 = vmatpush1.bf16.msra.mxu0 %v1800
    %2363 = vmatprep.subr.bf16.mxu0 %v1797
    %2364 = vmatpush1.bf16.msra.mxu0 %v1796
    %2365 = vmatprep.subr.bf16.mxu0 %v1793
    %2366 = vmatpush1.bf16.msra.mxu0 %v1792
    %2367 = vmatprep.subr.bf16.mxu0 %v1789
    %2368 = vmatpush1.bf16.msra.mxu0 %v1788
    %2369 = vmatprep.subr.bf16.mxu0 %v1785
    %2370 = vmatpush1.bf16.msra.mxu0 %v1784
    %2371 = vmatprep.subr.bf16.mxu0 %v1781
    %2372 = vmatpush1.bf16.msra.mxu0 %v1780
    %2373 = vmatprep.subr.bf16.mxu0 %v1841
    %2374 = vmatpush2.bf16.msra.mxu0 %v1840
    %2375 = vmatprep.subr.bf16.mxu0 %v1837
    %2376 = vmatpush2.bf16.msra.mxu0 %v1836
    %2377 = vmatprep.subr.bf16.mxu0 %v1833
    %2378 = vmatpush2.bf16.msra.mxu0 %v1832
    %2379 = vmatprep.subr.bf16.mxu0 %v1829
    %2380 = vmatpush2.bf16.msra.mxu0 %v1828
    %2381 = vmatprep.subr.bf16.mxu0 %v1825
    %2382 = vmatpush2.bf16.msra.mxu0 %v1824
    %2383 = vmatprep.subr.bf16.mxu0 %v1821
    %2384 = vmatpush2.bf16.msra.mxu0 %v1820
    %2385 = vmatprep.subr.bf16.mxu0 %v1817
    %2386 = vmatpush2.bf16.msra.mxu0 %v1816
    %2387 = vmatprep.subr.bf16.mxu0 %v1813
    %2388 = vmatpush2.bf16.msra.mxu0 %v1812
    %2389 = vmatprep.mubr.bf16.mxu0 %v823
    %2390 = vmatmul.mubr.bf16.gmra.mxu0 %v822
    %v2391 = vpop.f32.mrf.mxu0
    %v2392 = vadd.f32 %v2199, %v2391
    %v2393 = vpop.f32.mrf.mxu0
    %v2394 = vadd.f32 %v2201, %v2393
    %v2395 = vpop.f32.mrf.mxu0
    %v2396 = vadd.f32 %v2203, %v2395
    %v2397 = vpop.f32.mrf.mxu0
    %v2398 = vadd.f32 %v2205, %v2397
    %2399 = vmatprep.mubr.bf16.mxu0 %v830
    %2400 = vmatmul.mubr.bf16.gmra.mxu0 %v829
    %v2401 = vpop.f32.mrf.mxu0
    %v2402 = vadd.f32 %v2209, %v2401
    %v2403 = vpop.f32.mrf.mxu0
    %v2404 = vadd.f32 %v2211, %v2403
    %v2405 = vpop.f32.mrf.mxu0
    %v2406 = vadd.f32 %v2213, %v2405
    %v2407 = vpop.f32.mrf.mxu0
    %v2408 = vadd.f32 %v2215, %v2407
    %2409 = vmatprep.mubr.bf16.mxu0 %v837
    %2410 = vmatmul.mubr.bf16.gmra.mxu0 %v836
    %v2411 = vpop.f32.mrf.mxu0
    %v2412 = vadd.f32 %v2219, %v2411
    %v2413 = vpop.f32.mrf.mxu0
    %v2414 = vadd.f32 %v2221, %v2413
    %v2415 = vpop.f32.mrf.mxu0
    %v2416 = vadd.f32 %v2223, %v2415
    %v2417 = vpop.f32.mrf.mxu0
    %v2418 = vadd.f32 %v2225, %v2417
    %2419 = vmatprep.mubr.bf16.mxu0 %v844
    %2420 = vmatmul.mubr.bf16.gmra.mxu0 %v843
    %v2421 = vpop.f32.mrf.mxu0
    %v2422 = vadd.f32 %v2229, %v2421
    %v2423 = vpop.f32.mrf.mxu0
    %v2424 = vadd.f32 %v2231, %v2423
    %v2425 = vpop.f32.mrf.mxu0
    %v2426 = vadd.f32 %v2233, %v2425
    %v2427 = vpop.f32.mrf.mxu0
    %v2428 = vadd.f32 %v2235, %v2427
    %2429 = vmatprep.mubr.bf16.mxu0 %v851
    %2430 = vmatmul.mubr.bf16.gmra.mxu0 %v850
    %v2431 = vpop.f32.mrf.mxu0
    %v2432 = vadd.f32 %v2239, %v2431
    %v2433 = vpop.f32.mrf.mxu0
    %v2434 = vadd.f32 %v2241, %v2433
    %v2435 = vpop.f32.mrf.mxu0
    %v2436 = vadd.f32 %v2243, %v2435
    %v2437 = vpop.f32.mrf.mxu0
    %v2438 = vadd.f32 %v2245, %v2437
    %2439 = vmatprep.mubr.bf16.mxu0 %v858
    %2440 = vmatmul.mubr.bf16.gmra.mxu0 %v857
    %v2441 = vpop.f32.mrf.mxu0
    %v2442 = vadd.f32 %v2249, %v2441
    %v2443 = vpop.f32.mrf.mxu0
    %v2444 = vadd.f32 %v2251, %v2443
    %v2445 = vpop.f32.mrf.mxu0
    %v2446 = vadd.f32 %v2253, %v2445
    %v2447 = vpop.f32.mrf.mxu0
    %v2448 = vadd.f32 %v2255, %v2447
    %2449 = vmatprep.mubr.bf16.mxu0 %v865
    %2450 = vmatmul.mubr.bf16.gmra.mxu0 %v864
    %v2451 = vpop.f32.mrf.mxu0
    %v2452 = vadd.f32 %v2259, %v2451
    %v2453 = vpop.f32.mrf.mxu0
    %v2454 = vadd.f32 %v2261, %v2453
    %v2455 = vpop.f32.mrf.mxu0
    %v2456 = vadd.f32 %v2263, %v2455
    %v2457 = vpop.f32.mrf.mxu0
    %v2458 = vadd.f32 %v2265, %v2457
    %2459 = vmatprep.mubr.bf16.mxu0 %v872
    %2460 = vmatmul.mubr.bf16.gmra.mxu0 %v871
    %v2461 = vpop.f32.mrf.mxu0
    %v2462 = vadd.f32 %v2269, %v2461
    %v2463 = vpop.f32.mrf.mxu0
    %v2464 = vadd.f32 %v2271, %v2463
    %v2465 = vpop.f32.mrf.mxu0
    %v2466 = vadd.f32 %v2273, %v2465
    %v2467 = vpop.f32.mrf.mxu0
    %v2468 = vadd.f32 %v2275, %v2467
    %2469 = vmatprep.mubr.bf16.mxu0 %v879
    %2470 = vmatmul.mubr.bf16.gmra.mxu0 %v878
    %v2471 = vpop.f32.mrf.mxu0
    %v2472 = vadd.f32 %v2279, %v2471
    %v2473 = vpop.f32.mrf.mxu0
    %v2474 = vadd.f32 %v2281, %v2473
    %v2475 = vpop.f32.mrf.mxu0
    %v2476 = vadd.f32 %v2283, %v2475
    %v2477 = vpop.f32.mrf.mxu0
    %v2478 = vadd.f32 %v2285, %v2477
    %2479 = vmatprep.mubr.bf16.mxu0 %v886
    %2480 = vmatmul.mubr.bf16.gmra.mxu0 %v885
    %v2481 = vpop.f32.mrf.mxu0
    %v2482 = vadd.f32 %v2289, %v2481
    %v2483 = vpop.f32.mrf.mxu0
    %v2484 = vadd.f32 %v2291, %v2483
    %v2485 = vpop.f32.mrf.mxu0
    %v2486 = vadd.f32 %v2293, %v2485
    %v2487 = vpop.f32.mrf.mxu0
    %v2488 = vadd.f32 %v2295, %v2487
    %2489 = vmatprep.mubr.bf16.mxu0 %v893
    %2490 = vmatmul.mubr.bf16.gmra.mxu0 %v892
    %v2491 = vpop.f32.mrf.mxu0
    %v2492 = vadd.f32 %v2299, %v2491
    %v2493 = vpop.f32.mrf.mxu0
    %v2494 = vadd.f32 %v2301, %v2493
    %v2495 = vpop.f32.mrf.mxu0
    %v2496 = vadd.f32 %v2303, %v2495
    %v2497 = vpop.f32.mrf.mxu0
    %v2498 = vadd.f32 %v2305, %v2497
    %2499 = vmatprep.mubr.bf16.mxu0 %v900
    %2500 = vmatmul.mubr.bf16.gmra.mxu0 %v899
    %v2501 = vpop.f32.mrf.mxu0
    %v2502 = vadd.f32 %v2309, %v2501
    %v2503 = vpop.f32.mrf.mxu0
    %v2504 = vadd.f32 %v2311, %v2503
    %v2505 = vpop.f32.mrf.mxu0
    %v2506 = vadd.f32 %v2313, %v2505
    %v2507 = vpop.f32.mrf.mxu0
    %v2508 = vadd.f32 %v2315, %v2507
    %2509 = vmatprep.mubr.bf16.mxu0 %v907
    %2510 = vmatmul.mubr.bf16.gmra.mxu0 %v906
    %v2511 = vpop.f32.mrf.mxu0
    %v2512 = vadd.f32 %v2319, %v2511
    %v2513 = vpop.f32.mrf.mxu0
    %v2514 = vadd.f32 %v2321, %v2513
    %v2515 = vpop.f32.mrf.mxu0
    %v2516 = vadd.f32 %v2323, %v2515
    %v2517 = vpop.f32.mrf.mxu0
    %v2518 = vadd.f32 %v2325, %v2517
    %2519 = vmatprep.mubr.bf16.mxu0 %v914
    %2520 = vmatmul.mubr.bf16.gmra.mxu0 %v913
    %v2521 = vpop.f32.mrf.mxu0
    %v2522 = vadd.f32 %v2329, %v2521
    %v2523 = vpop.f32.mrf.mxu0
    %v2524 = vadd.f32 %v2331, %v2523
    %v2525 = vpop.f32.mrf.mxu0
    %v2526 = vadd.f32 %v2333, %v2525
    %v2527 = vpop.f32.mrf.mxu0
    %v2528 = vadd.f32 %v2335, %v2527
    %2529 = vmatprep.mubr.bf16.mxu0 %v921
    %2530 = vmatmul.mubr.bf16.gmra.mxu0 %v920
    %v2531 = vpop.f32.mrf.mxu0
    %v2532 = vadd.f32 %v2339, %v2531
    %v2533 = vpop.f32.mrf.mxu0
    %v2534 = vadd.f32 %v2341, %v2533
    %v2535 = vpop.f32.mrf.mxu0
    %v2536 = vadd.f32 %v2343, %v2535
    %v2537 = vpop.f32.mrf.mxu0
    %v2538 = vadd.f32 %v2345, %v2537
    %2539 = vmatprep.mubr.bf16.mxu0 %v928
    %2540 = vmatmul.mubr.bf16.gmra.mxu0 %v927
    %v2541 = vpop.f32.mrf.mxu0
    %v2542 = vadd.f32 %v2349, %v2541
    %v2543 = vpop.f32.mrf.mxu0
    %v2544 = vadd.f32 %v2351, %v2543
    %v2545 = vpop.f32.mrf.mxu0
    %v2546 = vadd.f32 %v2353, %v2545
    %v2547 = vpop.f32.mrf.mxu0
    %v2548 = vadd.f32 %v2355, %v2547
    %2549 = vdwg.mxu0
    %2550 = vmatprep.subr.bf16.mxu0 %v1873
    %2551 = vmatpush1.bf16.msra.mxu0 %v1872
    %2552 = vmatprep.subr.bf16.mxu0 %v1869
    %2553 = vmatpush1.bf16.msra.mxu0 %v1868
    %2554 = vmatprep.subr.bf16.mxu0 %v1865
    %2555 = vmatpush1.bf16.msra.mxu0 %v1864
    %2556 = vmatprep.subr.bf16.mxu0 %v1861
    %2557 = vmatpush1.bf16.msra.mxu0 %v1860
    %2558 = vmatprep.subr.bf16.mxu0 %v1857
    %2559 = vmatpush1.bf16.msra.mxu0 %v1856
    %2560 = vmatprep.subr.bf16.mxu0 %v1853
    %2561 = vmatpush1.bf16.msra.mxu0 %v1852
    %2562 = vmatprep.subr.bf16.mxu0 %v1849
    %2563 = vmatpush1.bf16.msra.mxu0 %v1848
    %2564 = vmatprep.subr.bf16.mxu0 %v1845
    %2565 = vmatpush1.bf16.msra.mxu0 %v1844
    %2566 = vmatprep.subr.bf16.mxu0 %v1905
    %2567 = vmatpush2.bf16.msra.mxu0 %v1904
    %2568 = vmatprep.subr.bf16.mxu0 %v1901
    %2569 = vmatpush2.bf16.msra.mxu0 %v1900
    %2570 = vmatprep.subr.bf16.mxu0 %v1897
    %2571 = vmatpush2.bf16.msra.mxu0 %v1896
    %2572 = vmatprep.subr.bf16.mxu0 %v1893
    %2573 = vmatpush2.bf16.msra.mxu0 %v1892
    %2574 = vmatprep.subr.bf16.mxu0 %v1889
    %2575 = vmatpush2.bf16.msra.mxu0 %v1888
    %2576 = vmatprep.subr.bf16.mxu0 %v1885
    %2577 = vmatpush2.bf16.msra.mxu0 %v1884
    %2578 = vmatprep.subr.bf16.mxu0 %v1881
    %2579 = vmatpush2.bf16.msra.mxu0 %v1880
    %2580 = vmatprep.subr.bf16.mxu0 %v1877
    %2581 = vmatpush2.bf16.msra.mxu0 %v1876
    %2582 = vmatprep.mubr.bf16.mxu0 %v825
    %2583 = vmatmul.mubr.bf16.gmra.mxu0 %v824
    %v2584 = vpop.f32.mrf.mxu0
    %v2585 = vadd.f32 %v2392, %v2584
    %v2586 = vpop.f32.mrf.mxu0
    %v2587 = vadd.f32 %v2394, %v2586
    %v2588 = vpop.f32.mrf.mxu0
    %v2589 = vadd.f32 %v2396, %v2588
    %v2590 = vpop.f32.mrf.mxu0
    %v2591 = vadd.f32 %v2398, %v2590
    %2592 = vmatprep.mubr.bf16.mxu0 %v832
    %2593 = vmatmul.mubr.bf16.gmra.mxu0 %v831
    %v2594 = vpop.f32.mrf.mxu0
    %v2595 = vadd.f32 %v2402, %v2594
    %v2596 = vpop.f32.mrf.mxu0
    %v2597 = vadd.f32 %v2404, %v2596
    %v2598 = vpop.f32.mrf.mxu0
    %v2599 = vadd.f32 %v2406, %v2598
    %v2600 = vpop.f32.mrf.mxu0
    %v2601 = vadd.f32 %v2408, %v2600
    %2602 = vmatprep.mubr.bf16.mxu0 %v839
    %2603 = vmatmul.mubr.bf16.gmra.mxu0 %v838
    %v2604 = vpop.f32.mrf.mxu0
    %v2605 = vadd.f32 %v2412, %v2604
    %v2606 = vpop.f32.mrf.mxu0
    %v2607 = vadd.f32 %v2414, %v2606
    %v2608 = vpop.f32.mrf.mxu0
    %v2609 = vadd.f32 %v2416, %v2608
    %v2610 = vpop.f32.mrf.mxu0
    %v2611 = vadd.f32 %v2418, %v2610
    %2612 = vmatprep.mubr.bf16.mxu0 %v846
    %2613 = vmatmul.mubr.bf16.gmra.mxu0 %v845
    %v2614 = vpop.f32.mrf.mxu0
    %v2615 = vadd.f32 %v2422, %v2614
    %v2616 = vpop.f32.mrf.mxu0
    %v2617 = vadd.f32 %v2424, %v2616
    %v2618 = vpop.f32.mrf.mxu0
    %v2619 = vadd.f32 %v2426, %v2618
    %v2620 = vpop.f32.mrf.mxu0
    %v2621 = vadd.f32 %v2428, %v2620
    %2622 = vmatprep.mubr.bf16.mxu0 %v853
    %2623 = vmatmul.mubr.bf16.gmra.mxu0 %v852
    %v2624 = vpop.f32.mrf.mxu0
    %v2625 = vadd.f32 %v2432, %v2624
    %v2626 = vpop.f32.mrf.mxu0
    %v2627 = vadd.f32 %v2434, %v2626
    %v2628 = vpop.f32.mrf.mxu0
    %v2629 = vadd.f32 %v2436, %v2628
    %v2630 = vpop.f32.mrf.mxu0
    %v2631 = vadd.f32 %v2438, %v2630
    %2632 = vmatprep.mubr.bf16.mxu0 %v860
    %2633 = vmatmul.mubr.bf16.gmra.mxu0 %v859
    %v2634 = vpop.f32.mrf.mxu0
    %v2635 = vadd.f32 %v2442, %v2634
    %v2636 = vpop.f32.mrf.mxu0
    %v2637 = vadd.f32 %v2444, %v2636
    %v2638 = vpop.f32.mrf.mxu0
    %v2639 = vadd.f32 %v2446, %v2638
    %v2640 = vpop.f32.mrf.mxu0
    %v2641 = vadd.f32 %v2448, %v2640
    %2642 = vmatprep.mubr.bf16.mxu0 %v867
    %2643 = vmatmul.mubr.bf16.gmra.mxu0 %v866
    %v2644 = vpop.f32.mrf.mxu0
    %v2645 = vadd.f32 %v2452, %v2644
    %v2646 = vpop.f32.mrf.mxu0
    %v2647 = vadd.f32 %v2454, %v2646
    %v2648 = vpop.f32.mrf.mxu0
    %v2649 = vadd.f32 %v2456, %v2648
    %v2650 = vpop.f32.mrf.mxu0
    %v2651 = vadd.f32 %v2458, %v2650
    %2652 = vmatprep.mubr.bf16.mxu0 %v874
    %2653 = vmatmul.mubr.bf16.gmra.mxu0 %v873
    %v2654 = vpop.f32.mrf.mxu0
    %v2655 = vadd.f32 %v2462, %v2654
    %v2656 = vpop.f32.mrf.mxu0
    %v2657 = vadd.f32 %v2464, %v2656
    %v2658 = vpop.f32.mrf.mxu0
    %v2659 = vadd.f32 %v2466, %v2658
    %v2660 = vpop.f32.mrf.mxu0
    %v2661 = vadd.f32 %v2468, %v2660
    %2662 = vmatprep.mubr.bf16.mxu0 %v881
    %2663 = vmatmul.mubr.bf16.gmra.mxu0 %v880
    %v2664 = vpop.f32.mrf.mxu0
    %v2665 = vadd.f32 %v2472, %v2664
    %v2666 = vpop.f32.mrf.mxu0
    %v2667 = vadd.f32 %v2474, %v2666
    %v2668 = vpop.f32.mrf.mxu0
    %v2669 = vadd.f32 %v2476, %v2668
    %v2670 = vpop.f32.mrf.mxu0
    %v2671 = vadd.f32 %v2478, %v2670
    %2672 = vmatprep.mubr.bf16.mxu0 %v888
    %2673 = vmatmul.mubr.bf16.gmra.mxu0 %v887
    %v2674 = vpop.f32.mrf.mxu0
    %v2675 = vadd.f32 %v2482, %v2674
    %v2676 = vpop.f32.mrf.mxu0
    %v2677 = vadd.f32 %v2484, %v2676
    %v2678 = vpop.f32.mrf.mxu0
    %v2679 = vadd.f32 %v2486, %v2678
    %v2680 = vpop.f32.mrf.mxu0
    %v2681 = vadd.f32 %v2488, %v2680
    %2682 = vmatprep.mubr.bf16.mxu0 %v895
    %2683 = vmatmul.mubr.bf16.gmra.mxu0 %v894
    %v2684 = vpop.f32.mrf.mxu0
    %v2685 = vadd.f32 %v2492, %v2684
    %v2686 = vpop.f32.mrf.mxu0
    %v2687 = vadd.f32 %v2494, %v2686
    %v2688 = vpop.f32.mrf.mxu0
    %v2689 = vadd.f32 %v2496, %v2688
    %v2690 = vpop.f32.mrf.mxu0
    %v2691 = vadd.f32 %v2498, %v2690
    %2692 = vmatprep.mubr.bf16.mxu0 %v902
    %2693 = vmatmul.mubr.bf16.gmra.mxu0 %v901
    %v2694 = vpop.f32.mrf.mxu0
    %v2695 = vadd.f32 %v2502, %v2694
    %v2696 = vpop.f32.mrf.mxu0
    %v2697 = vadd.f32 %v2504, %v2696
    %v2698 = vpop.f32.mrf.mxu0
    %v2699 = vadd.f32 %v2506, %v2698
    %v2700 = vpop.f32.mrf.mxu0
    %v2701 = vadd.f32 %v2508, %v2700
    %2702 = vmatprep.mubr.bf16.mxu0 %v909
    %2703 = vmatmul.mubr.bf16.gmra.mxu0 %v908
    %v2704 = vpop.f32.mrf.mxu0
    %v2705 = vadd.f32 %v2512, %v2704
    %v2706 = vpop.f32.mrf.mxu0
    %v2707 = vadd.f32 %v2514, %v2706
    %v2708 = vpop.f32.mrf.mxu0
    %v2709 = vadd.f32 %v2516, %v2708
    %v2710 = vpop.f32.mrf.mxu0
    %v2711 = vadd.f32 %v2518, %v2710
    %2712 = vmatprep.mubr.bf16.mxu0 %v916
    %2713 = vmatmul.mubr.bf16.gmra.mxu0 %v915
    %v2714 = vpop.f32.mrf.mxu0
    %v2715 = vadd.f32 %v2522, %v2714
    %v2716 = vpop.f32.mrf.mxu0
    %v2717 = vadd.f32 %v2524, %v2716
    %v2718 = vpop.f32.mrf.mxu0
    %v2719 = vadd.f32 %v2526, %v2718
    %v2720 = vpop.f32.mrf.mxu0
    %v2721 = vadd.f32 %v2528, %v2720
    %2722 = vmatprep.mubr.bf16.mxu0 %v923
    %2723 = vmatmul.mubr.bf16.gmra.mxu0 %v922
    %v2724 = vpop.f32.mrf.mxu0
    %v2725 = vadd.f32 %v2532, %v2724
    %v2726 = vpop.f32.mrf.mxu0
    %v2727 = vadd.f32 %v2534, %v2726
    %v2728 = vpop.f32.mrf.mxu0
    %v2729 = vadd.f32 %v2536, %v2728
    %v2730 = vpop.f32.mrf.mxu0
    %v2731 = vadd.f32 %v2538, %v2730
    %2732 = vmatprep.mubr.bf16.mxu0 %v930
    %2733 = vmatmul.mubr.bf16.gmra.mxu0 %v929
    %v2734 = vpop.f32.mrf.mxu0
    %v2735 = vadd.f32 %v2542, %v2734
    %v2736 = vpop.f32.mrf.mxu0
    %v2737 = vadd.f32 %v2544, %v2736
    %v2738 = vpop.f32.mrf.mxu0
    %v2739 = vadd.f32 %v2546, %v2738
    %v2740 = vpop.f32.mrf.mxu0
    %v2741 = vadd.f32 %v2548, %v2740
    %2742 = vdwg.mxu0
    %2743 = vmatprep.subr.bf16.mxu0 %v1937
    %2744 = vmatpush1.bf16.msra.mxu0 %v1936
    %2745 = vmatprep.subr.bf16.mxu0 %v1933
    %2746 = vmatpush1.bf16.msra.mxu0 %v1932
    %2747 = vmatprep.subr.bf16.mxu0 %v1929
    %2748 = vmatpush1.bf16.msra.mxu0 %v1928
    %2749 = vmatprep.subr.bf16.mxu0 %v1925
    %2750 = vmatpush1.bf16.msra.mxu0 %v1924
    %2751 = vmatprep.subr.bf16.mxu0 %v1921
    %2752 = vmatpush1.bf16.msra.mxu0 %v1920
    %2753 = vmatprep.subr.bf16.mxu0 %v1917
    %2754 = vmatpush1.bf16.msra.mxu0 %v1916
    %2755 = vmatprep.subr.bf16.mxu0 %v1913
    %2756 = vmatpush1.bf16.msra.mxu0 %v1912
    %2757 = vmatprep.subr.bf16.mxu0 %v1909
    %2758 = vmatpush1.bf16.msra.mxu0 %v1908
    %2759 = vmatprep.subr.bf16.mxu0 0
    %2760 = vmatpush2.bf16.msra.mxu0 0
    %2761 = vmatprep.subr.bf16.mxu0 0
    %2762 = vmatpush2.bf16.msra.mxu0 0
    %2763 = vmatprep.subr.bf16.mxu0 0
    %2764 = vmatpush2.bf16.msra.mxu0 0
    %2765 = vmatprep.subr.bf16.mxu0 0
    %2766 = vmatpush2.bf16.msra.mxu0 0
    %2767 = vmatprep.subr.bf16.mxu0 0
    %2768 = vmatpush2.bf16.msra.mxu0 0
    %2769 = vmatprep.subr.bf16.mxu0 0
    %2770 = vmatpush2.bf16.msra.mxu0 0
    %2771 = vmatprep.subr.bf16.mxu0 0
    %2772 = vmatpush2.bf16.msra.mxu0 0
    %2773 = vmatprep.subr.bf16.mxu0 0
    %2774 = vmatpush2.bf16.msra.mxu0 0
    %2775 = vmatprep.mubr.bf16.mxu0 0
    %2776 = vmatmul.mubr.bf16.gmra.mxu0 %v826
    %v2777 = vpop.f32.mrf.mxu0
    %v2778 = vadd.f32 %v2585, %v2777
    %v2779 = vpop.f32.mrf.mxu0
    %v2780 = vadd.f32 %v2587, %v2779
    %v2781 = vpop.f32.mrf.mxu0
    %v2782 = vadd.f32 %v2589, %v2781
    %v2783 = vpop.f32.mrf.mxu0
    %v2784 = vadd.f32 %v2591, %v2783
    %2785 = vmatprep.mubr.bf16.mxu0 0
    %2786 = vmatmul.mubr.bf16.gmra.mxu0 %v833
    %v2787 = vpop.f32.mrf.mxu0
    %v2788 = vadd.f32 %v2595, %v2787
    %v2789 = vpop.f32.mrf.mxu0
    %v2790 = vadd.f32 %v2597, %v2789
    %v2791 = vpop.f32.mrf.mxu0
    %v2792 = vadd.f32 %v2599, %v2791
    %v2793 = vpop.f32.mrf.mxu0
    %v2794 = vadd.f32 %v2601, %v2793
    %2795 = vmatprep.mubr.bf16.mxu0 0
    %2796 = vmatmul.mubr.bf16.gmra.mxu0 %v840
    %v2797 = vpop.f32.mrf.mxu0
    %v2798 = vadd.f32 %v2605, %v2797
    %v2799 = vpop.f32.mrf.mxu0
    %v2800 = vadd.f32 %v2607, %v2799
    %v2801 = vpop.f32.mrf.mxu0
    %v2802 = vadd.f32 %v2609, %v2801
    %v2803 = vpop.f32.mrf.mxu0
    %v2804 = vadd.f32 %v2611, %v2803
    %2805 = vmatprep.mubr.bf16.mxu0 0
    %2806 = vmatmul.mubr.bf16.gmra.mxu0 %v847
    %v2807 = vpop.f32.mrf.mxu0
    %v2808 = vadd.f32 %v2615, %v2807
    %v2809 = vpop.f32.mrf.mxu0
    %v2810 = vadd.f32 %v2617, %v2809
    %v2811 = vpop.f32.mrf.mxu0
    %v2812 = vadd.f32 %v2619, %v2811
    %v2813 = vpop.f32.mrf.mxu0
    %v2814 = vadd.f32 %v2621, %v2813
    %2815 = vmatprep.mubr.bf16.mxu0 0
    %2816 = vmatmul.mubr.bf16.gmra.mxu0 %v854
    %v2817 = vpop.f32.mrf.mxu0
    %v2818 = vadd.f32 %v2625, %v2817
    %v2819 = vpop.f32.mrf.mxu0
    %v2820 = vadd.f32 %v2627, %v2819
    %v2821 = vpop.f32.mrf.mxu0
    %v2822 = vadd.f32 %v2629, %v2821
    %v2823 = vpop.f32.mrf.mxu0
    %v2824 = vadd.f32 %v2631, %v2823
    %2825 = vmatprep.mubr.bf16.mxu0 0
    %2826 = vmatmul.mubr.bf16.gmra.mxu0 %v861
    %v2827 = vpop.f32.mrf.mxu0
    %v2828 = vadd.f32 %v2635, %v2827
    %v2829 = vpop.f32.mrf.mxu0
    %v2830 = vadd.f32 %v2637, %v2829
    %v2831 = vpop.f32.mrf.mxu0
    %v2832 = vadd.f32 %v2639, %v2831
    %v2833 = vpop.f32.mrf.mxu0
    %v2834 = vadd.f32 %v2641, %v2833
    %2835 = vmatprep.mubr.bf16.mxu0 0
    %2836 = vmatmul.mubr.bf16.gmra.mxu0 %v868
    %v2837 = vpop.f32.mrf.mxu0
    %v2838 = vadd.f32 %v2645, %v2837
    %v2839 = vpop.f32.mrf.mxu0
    %v2840 = vadd.f32 %v2647, %v2839
    %v2841 = vpop.f32.mrf.mxu0
    %v2842 = vadd.f32 %v2649, %v2841
    %v2843 = vpop.f32.mrf.mxu0
    %v2844 = vadd.f32 %v2651, %v2843
    %2845 = vmatprep.mubr.bf16.mxu0 0
    %2846 = vmatmul.mubr.bf16.gmra.mxu0 %v875
    %v2847 = vpop.f32.mrf.mxu0
    %v2848 = vadd.f32 %v2655, %v2847
    %v2849 = vpop.f32.mrf.mxu0
    %v2850 = vadd.f32 %v2657, %v2849
    %v2851 = vpop.f32.mrf.mxu0
    %v2852 = vadd.f32 %v2659, %v2851
    %v2853 = vpop.f32.mrf.mxu0
    %v2854 = vadd.f32 %v2661, %v2853
    %2855 = vmatprep.mubr.bf16.mxu0 0
    %2856 = vmatmul.mubr.bf16.gmra.mxu0 %v882
    %v2857 = vpop.f32.mrf.mxu0
    %v2858 = vadd.f32 %v2665, %v2857
    %v2859 = vpop.f32.mrf.mxu0
    %v2860 = vadd.f32 %v2667, %v2859
    %v2861 = vpop.f32.mrf.mxu0
    %v2862 = vadd.f32 %v2669, %v2861
    %v2863 = vpop.f32.mrf.mxu0
    %v2864 = vadd.f32 %v2671, %v2863
    %2865 = vmatprep.mubr.bf16.mxu0 0
    %2866 = vmatmul.mubr.bf16.gmra.mxu0 %v889
    %v2867 = vpop.f32.mrf.mxu0
    %v2868 = vadd.f32 %v2675, %v2867
    %v2869 = vpop.f32.mrf.mxu0
    %v2870 = vadd.f32 %v2677, %v2869
    %v2871 = vpop.f32.mrf.mxu0
    %v2872 = vadd.f32 %v2679, %v2871
    %v2873 = vpop.f32.mrf.mxu0
    %v2874 = vadd.f32 %v2681, %v2873
    %2875 = vmatprep.mubr.bf16.mxu0 0
    %2876 = vmatmul.mubr.bf16.gmra.mxu0 %v896
    %v2877 = vpop.f32.mrf.mxu0
    %v2878 = vadd.f32 %v2685, %v2877
    %v2879 = vpop.f32.mrf.mxu0
    %v2880 = vadd.f32 %v2687, %v2879
    %v2881 = vpop.f32.mrf.mxu0
    %v2882 = vadd.f32 %v2689, %v2881
    %v2883 = vpop.f32.mrf.mxu0
    %v2884 = vadd.f32 %v2691, %v2883
    %2885 = vmatprep.mubr.bf16.mxu0 0
    %2886 = vmatmul.mubr.bf16.gmra.mxu0 %v903
    %v2887 = vpop.f32.mrf.mxu0
    %v2888 = vadd.f32 %v2695, %v2887
    %v2889 = vpop.f32.mrf.mxu0
    %v2890 = vadd.f32 %v2697, %v2889
    %v2891 = vpop.f32.mrf.mxu0
    %v2892 = vadd.f32 %v2699, %v2891
    %v2893 = vpop.f32.mrf.mxu0
    %v2894 = vadd.f32 %v2701, %v2893
    %2895 = vmatprep.mubr.bf16.mxu0 0
    %2896 = vmatmul.mubr.bf16.gmra.mxu0 %v910
    %v2897 = vpop.f32.mrf.mxu0
    %v2898 = vadd.f32 %v2705, %v2897
    %v2899 = vpop.f32.mrf.mxu0
    %v2900 = vadd.f32 %v2707, %v2899
    %v2901 = vpop.f32.mrf.mxu0
    %v2902 = vadd.f32 %v2709, %v2901
    %v2903 = vpop.f32.mrf.mxu0
    %v2904 = vadd.f32 %v2711, %v2903
    %2905 = vmatprep.mubr.bf16.mxu0 0
    %2906 = vmatmul.mubr.bf16.gmra.mxu0 %v917
    %v2907 = vpop.f32.mrf.mxu0
    %v2908 = vadd.f32 %v2715, %v2907
    %v2909 = vpop.f32.mrf.mxu0
    %v2910 = vadd.f32 %v2717, %v2909
    %v2911 = vpop.f32.mrf.mxu0
    %v2912 = vadd.f32 %v2719, %v2911
    %v2913 = vpop.f32.mrf.mxu0
    %v2914 = vadd.f32 %v2721, %v2913
    %2915 = vmatprep.mubr.bf16.mxu0 0
    %2916 = vmatmul.mubr.bf16.gmra.mxu0 %v924
    %v2917 = vpop.f32.mrf.mxu0
    %v2918 = vadd.f32 %v2725, %v2917
    %v2919 = vpop.f32.mrf.mxu0
    %v2920 = vadd.f32 %v2727, %v2919
    %v2921 = vpop.f32.mrf.mxu0
    %v2922 = vadd.f32 %v2729, %v2921
    %v2923 = vpop.f32.mrf.mxu0
    %v2924 = vadd.f32 %v2731, %v2923
    %2925 = vmatprep.mubr.bf16.mxu0 0
    %2926 = vmatmul.mubr.bf16.gmra.mxu0 %v931
    %v2927 = vpop.f32.mrf.mxu0
    %v2928 = vadd.f32 %v2735, %v2927
    %v2929 = vpop.f32.mrf.mxu0
    %v2930 = vadd.f32 %v2737, %v2929
    %v2931 = vpop.f32.mrf.mxu0
    %v2932 = vadd.f32 %v2739, %v2931
    %v2933 = vpop.f32.mrf.mxu0
    %v2934 = vadd.f32 %v2741, %v2933
    %2935 = vdwg.mxu0
    %2936 = vmatprep.subr.bf16.mxu0 %v1747
    %2937 = vmatpush1.bf16.msra.mxu0 %v1746
    %2938 = vmatprep.subr.bf16.mxu0 %v1743
    %2939 = vmatpush1.bf16.msra.mxu0 %v1742
    %2940 = vmatprep.subr.bf16.mxu0 %v1739
    %2941 = vmatpush1.bf16.msra.mxu0 %v1738
    %2942 = vmatprep.subr.bf16.mxu0 %v1735
    %2943 = vmatpush1.bf16.msra.mxu0 %v1734
    %2944 = vmatprep.subr.bf16.mxu0 %v1731
    %2945 = vmatpush1.bf16.msra.mxu0 %v1730
    %2946 = vmatprep.subr.bf16.mxu0 %v1727
    %2947 = vmatpush1.bf16.msra.mxu0 %v1726
    %2948 = vmatprep.subr.bf16.mxu0 %v1723
    %2949 = vmatpush1.bf16.msra.mxu0 %v1722
    %2950 = vmatprep.subr.bf16.mxu0 %v1719
    %2951 = vmatpush1.bf16.msra.mxu0 %v1718
    %2952 = vmatprep.subr.bf16.mxu0 %v1779
    %2953 = vmatpush2.bf16.msra.mxu0 %v1778
    %2954 = vmatprep.subr.bf16.mxu0 %v1775
    %2955 = vmatpush2.bf16.msra.mxu0 %v1774
    %2956 = vmatprep.subr.bf16.mxu0 %v1771
    %2957 = vmatpush2.bf16.msra.mxu0 %v1770
    %2958 = vmatprep.subr.bf16.mxu0 %v1767
    %2959 = vmatpush2.bf16.msra.mxu0 %v1766
    %2960 = vmatprep.subr.bf16.mxu0 %v1763
    %2961 = vmatpush2.bf16.msra.mxu0 %v1762
    %2962 = vmatprep.subr.bf16.mxu0 %v1759
    %2963 = vmatpush2.bf16.msra.mxu0 %v1758
    %2964 = vmatprep.subr.bf16.mxu0 %v1755
    %2965 = vmatpush2.bf16.msra.mxu0 %v1754
    %2966 = vmatprep.subr.bf16.mxu0 %v1751
    %2967 = vmatpush2.bf16.msra.mxu0 %v1750
    %2968 = vmatprep.mubr.bf16.mxu0 %v821
    %2969 = vmatmul.mubr.bf16.gmra.mxu0 %v820
    %v2970 = vpop.f32.mrf.mxu0
    %v2971 = vadd.f32 %v459, %v2970
    %v2972 = vpop.f32.mrf.mxu0
    %v2973 = vadd.f32 %v463, %v2972
    %v2974 = vpop.f32.mrf.mxu0
    %v2975 = vadd.f32 %v459, %v2974
    %v2976 = vpop.f32.mrf.mxu0
    %v2977 = vadd.f32 %v463, %v2976
    %2978 = vmatprep.mubr.bf16.mxu0 %v828
    %2979 = vmatmul.mubr.bf16.gmra.mxu0 %v827
    %v2980 = vpop.f32.mrf.mxu0
    %v2981 = vadd.f32 %v459, %v2980
    %v2982 = vpop.f32.mrf.mxu0
    %v2983 = vadd.f32 %v463, %v2982
    %v2984 = vpop.f32.mrf.mxu0
    %v2985 = vadd.f32 %v459, %v2984
    %v2986 = vpop.f32.mrf.mxu0
    %v2987 = vadd.f32 %v463, %v2986
    %2988 = vmatprep.mubr.bf16.mxu0 %v835
    %2989 = vmatmul.mubr.bf16.gmra.mxu0 %v834
    %v2990 = vpop.f32.mrf.mxu0
    %v2991 = vadd.f32 %v459, %v2990
    %v2992 = vpop.f32.mrf.mxu0
    %v2993 = vadd.f32 %v463, %v2992
    %v2994 = vpop.f32.mrf.mxu0
    %v2995 = vadd.f32 %v459, %v2994
    %v2996 = vpop.f32.mrf.mxu0
    %v2997 = vadd.f32 %v463, %v2996
    %2998 = vmatprep.mubr.bf16.mxu0 %v842
    %2999 = vmatmul.mubr.bf16.gmra.mxu0 %v841
    %v3000 = vpop.f32.mrf.mxu0
    %v3001 = vadd.f32 %v459, %v3000
    %v3002 = vpop.f32.mrf.mxu0
    %v3003 = vadd.f32 %v463, %v3002
    %v3004 = vpop.f32.mrf.mxu0
    %v3005 = vadd.f32 %v459, %v3004
    %v3006 = vpop.f32.mrf.mxu0
    %v3007 = vadd.f32 %v463, %v3006
    %3008 = vmatprep.mubr.bf16.mxu0 %v849
    %3009 = vmatmul.mubr.bf16.gmra.mxu0 %v848
    %v3010 = vpop.f32.mrf.mxu0
    %v3011 = vadd.f32 %v459, %v3010
    %v3012 = vpop.f32.mrf.mxu0
    %v3013 = vadd.f32 %v463, %v3012
    %v3014 = vpop.f32.mrf.mxu0
    %v3015 = vadd.f32 %v459, %v3014
    %v3016 = vpop.f32.mrf.mxu0
    %v3017 = vadd.f32 %v463, %v3016
    %3018 = vmatprep.mubr.bf16.mxu0 %v856
    %3019 = vmatmul.mubr.bf16.gmra.mxu0 %v855
    %v3020 = vpop.f32.mrf.mxu0
    %v3021 = vadd.f32 %v459, %v3020
    %v3022 = vpop.f32.mrf.mxu0
    %v3023 = vadd.f32 %v463, %v3022
    %v3024 = vpop.f32.mrf.mxu0
    %v3025 = vadd.f32 %v459, %v3024
    %v3026 = vpop.f32.mrf.mxu0
    %v3027 = vadd.f32 %v463, %v3026
    %3028 = vmatprep.mubr.bf16.mxu0 %v863
    %3029 = vmatmul.mubr.bf16.gmra.mxu0 %v862
    %v3030 = vpop.f32.mrf.mxu0
    %v3031 = vadd.f32 %v459, %v3030
    %v3032 = vpop.f32.mrf.mxu0
    %v3033 = vadd.f32 %v463, %v3032
    %v3034 = vpop.f32.mrf.mxu0
    %v3035 = vadd.f32 %v459, %v3034
    %v3036 = vpop.f32.mrf.mxu0
    %v3037 = vadd.f32 %v463, %v3036
    %3038 = vmatprep.mubr.bf16.mxu0 %v870
    %3039 = vmatmul.mubr.bf16.gmra.mxu0 %v869
    %v3040 = vpop.f32.mrf.mxu0
    %v3041 = vadd.f32 %v459, %v3040
    %v3042 = vpop.f32.mrf.mxu0
    %v3043 = vadd.f32 %v463, %v3042
    %v3044 = vpop.f32.mrf.mxu0
    %v3045 = vadd.f32 %v459, %v3044
    %v3046 = vpop.f32.mrf.mxu0
    %v3047 = vadd.f32 %v463, %v3046
    %3048 = vmatprep.mubr.bf16.mxu0 %v877
    %3049 = vmatmul.mubr.bf16.gmra.mxu0 %v876
    %v3050 = vpop.f32.mrf.mxu0
    %v3051 = vadd.f32 %v459, %v3050
    %v3052 = vpop.f32.mrf.mxu0
    %v3053 = vadd.f32 %v463, %v3052
    %v3054 = vpop.f32.mrf.mxu0
    %v3055 = vadd.f32 %v459, %v3054
    %v3056 = vpop.f32.mrf.mxu0
    %v3057 = vadd.f32 %v463, %v3056
    %3058 = vmatprep.mubr.bf16.mxu0 %v884
    %3059 = vmatmul.mubr.bf16.gmra.mxu0 %v883
    %v3060 = vpop.f32.mrf.mxu0
    %v3061 = vadd.f32 %v459, %v3060
    %v3062 = vpop.f32.mrf.mxu0
    %v3063 = vadd.f32 %v463, %v3062
    %v3064 = vpop.f32.mrf.mxu0
    %v3065 = vadd.f32 %v459, %v3064
    %v3066 = vpop.f32.mrf.mxu0
    %v3067 = vadd.f32 %v463, %v3066
    %3068 = vmatprep.mubr.bf16.mxu0 %v891
    %3069 = vmatmul.mubr.bf16.gmra.mxu0 %v890
    %v3070 = vpop.f32.mrf.mxu0
    %v3071 = vadd.f32 %v459, %v3070
    %v3072 = vpop.f32.mrf.mxu0
    %v3073 = vadd.f32 %v463, %v3072
    %v3074 = vpop.f32.mrf.mxu0
    %v3075 = vadd.f32 %v459, %v3074
    %v3076 = vpop.f32.mrf.mxu0
    %v3077 = vadd.f32 %v463, %v3076
    %3078 = vmatprep.mubr.bf16.mxu0 %v898
    %3079 = vmatmul.mubr.bf16.gmra.mxu0 %v897
    %v3080 = vpop.f32.mrf.mxu0
    %v3081 = vadd.f32 %v459, %v3080
    %v3082 = vpop.f32.mrf.mxu0
    %v3083 = vadd.f32 %v463, %v3082
    %v3084 = vpop.f32.mrf.mxu0
    %v3085 = vadd.f32 %v459, %v3084
    %v3086 = vpop.f32.mrf.mxu0
    %v3087 = vadd.f32 %v463, %v3086
    %3088 = vmatprep.mubr.bf16.mxu0 %v905
    %3089 = vmatmul.mubr.bf16.gmra.mxu0 %v904
    %v3090 = vpop.f32.mrf.mxu0
    %v3091 = vadd.f32 %v459, %v3090
    %v3092 = vpop.f32.mrf.mxu0
    %v3093 = vadd.f32 %v463, %v3092
    %v3094 = vpop.f32.mrf.mxu0
    %v3095 = vadd.f32 %v459, %v3094
    %v3096 = vpop.f32.mrf.mxu0
    %v3097 = vadd.f32 %v463, %v3096
    %3098 = vmatprep.mubr.bf16.mxu0 %v912
    %3099 = vmatmul.mubr.bf16.gmra.mxu0 %v911
    %v3100 = vpop.f32.mrf.mxu0
    %v3101 = vadd.f32 %v459, %v3100
    %v3102 = vpop.f32.mrf.mxu0
    %v3103 = vadd.f32 %v463, %v3102
    %v3104 = vpop.f32.mrf.mxu0
    %v3105 = vadd.f32 %v459, %v3104
    %v3106 = vpop.f32.mrf.mxu0
    %v3107 = vadd.f32 %v463, %v3106
    %3108 = vmatprep.mubr.bf16.mxu0 %v919
    %3109 = vmatmul.mubr.bf16.gmra.mxu0 %v918
    %v3110 = vpop.f32.mrf.mxu0
    %v3111 = vadd.f32 %v459, %v3110
    %v3112 = vpop.f32.mrf.mxu0
    %v3113 = vadd.f32 %v463, %v3112
    %v3114 = vpop.f32.mrf.mxu0
    %v3115 = vadd.f32 %v459, %v3114
    %v3116 = vpop.f32.mrf.mxu0
    %v3117 = vadd.f32 %v463, %v3116
    %3118 = vmatprep.mubr.bf16.mxu0 %v926
    %3119 = vmatmul.mubr.bf16.gmra.mxu0 %v925
    %v3120 = vpop.f32.mrf.mxu0
    %v3121 = vadd.f32 %v459, %v3120
    %v3122 = vpop.f32.mrf.mxu0
    %v3123 = vadd.f32 %v463, %v3122
    %v3124 = vpop.f32.mrf.mxu0
    %v3125 = vadd.f32 %v459, %v3124
    %v3126 = vpop.f32.mrf.mxu0
    %v3127 = vadd.f32 %v463, %v3126
    %3128 = vdwg.mxu0
    %3129 = vmatprep.subr.bf16.mxu0 %v1811
    %3130 = vmatpush1.bf16.msra.mxu0 %v1810
    %3131 = vmatprep.subr.bf16.mxu0 %v1807
    %3132 = vmatpush1.bf16.msra.mxu0 %v1806
    %3133 = vmatprep.subr.bf16.mxu0 %v1803
    %3134 = vmatpush1.bf16.msra.mxu0 %v1802
    %3135 = vmatprep.subr.bf16.mxu0 %v1799
    %3136 = vmatpush1.bf16.msra.mxu0 %v1798
    %3137 = vmatprep.subr.bf16.mxu0 %v1795
    %3138 = vmatpush1.bf16.msra.mxu0 %v1794
    %3139 = vmatprep.subr.bf16.mxu0 %v1791
    %3140 = vmatpush1.bf16.msra.mxu0 %v1790
    %3141 = vmatprep.subr.bf16.mxu0 %v1787
    %3142 = vmatpush1.bf16.msra.mxu0 %v1786
    %3143 = vmatprep.subr.bf16.mxu0 %v1783
    %3144 = vmatpush1.bf16.msra.mxu0 %v1782
    %3145 = vmatprep.subr.bf16.mxu0 %v1843
    %3146 = vmatpush2.bf16.msra.mxu0 %v1842
    %3147 = vmatprep.subr.bf16.mxu0 %v1839
    %3148 = vmatpush2.bf16.msra.mxu0 %v1838
    %3149 = vmatprep.subr.bf16.mxu0 %v1835
    %3150 = vmatpush2.bf16.msra.mxu0 %v1834
    %3151 = vmatprep.subr.bf16.mxu0 %v1831
    %3152 = vmatpush2.bf16.msra.mxu0 %v1830
    %3153 = vmatprep.subr.bf16.mxu0 %v1827
    %3154 = vmatpush2.bf16.msra.mxu0 %v1826
    %3155 = vmatprep.subr.bf16.mxu0 %v1823
    %3156 = vmatpush2.bf16.msra.mxu0 %v1822
    %3157 = vmatprep.subr.bf16.mxu0 %v1819
    %3158 = vmatpush2.bf16.msra.mxu0 %v1818
    %3159 = vmatprep.subr.bf16.mxu0 %v1815
    %3160 = vmatpush2.bf16.msra.mxu0 %v1814
    %3161 = vmatprep.mubr.bf16.mxu0 %v823
    %3162 = vmatmul.mubr.bf16.gmra.mxu0 %v822
    %v3163 = vpop.f32.mrf.mxu0
    %v3164 = vadd.f32 %v2971, %v3163
    %v3165 = vpop.f32.mrf.mxu0
    %v3166 = vadd.f32 %v2973, %v3165
    %v3167 = vpop.f32.mrf.mxu0
    %v3168 = vadd.f32 %v2975, %v3167
    %v3169 = vpop.f32.mrf.mxu0
    %v3170 = vadd.f32 %v2977, %v3169
    %3171 = vmatprep.mubr.bf16.mxu0 %v830
    %3172 = vmatmul.mubr.bf16.gmra.mxu0 %v829
    %v3173 = vpop.f32.mrf.mxu0
    %v3174 = vadd.f32 %v2981, %v3173
    %v3175 = vpop.f32.mrf.mxu0
    %v3176 = vadd.f32 %v2983, %v3175
    %v3177 = vpop.f32.mrf.mxu0
    %v3178 = vadd.f32 %v2985, %v3177
    %v3179 = vpop.f32.mrf.mxu0
    %v3180 = vadd.f32 %v2987, %v3179
    %3181 = vmatprep.mubr.bf16.mxu0 %v837
    %3182 = vmatmul.mubr.bf16.gmra.mxu0 %v836
    %v3183 = vpop.f32.mrf.mxu0
    %v3184 = vadd.f32 %v2991, %v3183
    %v3185 = vpop.f32.mrf.mxu0
    %v3186 = vadd.f32 %v2993, %v3185
    %v3187 = vpop.f32.mrf.mxu0
    %v3188 = vadd.f32 %v2995, %v3187
    %v3189 = vpop.f32.mrf.mxu0
    %v3190 = vadd.f32 %v2997, %v3189
    %3191 = vmatprep.mubr.bf16.mxu0 %v844
    %3192 = vmatmul.mubr.bf16.gmra.mxu0 %v843
    %v3193 = vpop.f32.mrf.mxu0
    %v3194 = vadd.f32 %v3001, %v3193
    %v3195 = vpop.f32.mrf.mxu0
    %v3196 = vadd.f32 %v3003, %v3195
    %v3197 = vpop.f32.mrf.mxu0
    %v3198 = vadd.f32 %v3005, %v3197
    %v3199 = vpop.f32.mrf.mxu0
    %v3200 = vadd.f32 %v3007, %v3199
    %3201 = vmatprep.mubr.bf16.mxu0 %v851
    %3202 = vmatmul.mubr.bf16.gmra.mxu0 %v850
    %v3203 = vpop.f32.mrf.mxu0
    %v3204 = vadd.f32 %v3011, %v3203
    %v3205 = vpop.f32.mrf.mxu0
    %v3206 = vadd.f32 %v3013, %v3205
    %v3207 = vpop.f32.mrf.mxu0
    %v3208 = vadd.f32 %v3015, %v3207
    %v3209 = vpop.f32.mrf.mxu0
    %v3210 = vadd.f32 %v3017, %v3209
    %3211 = vmatprep.mubr.bf16.mxu0 %v858
    %3212 = vmatmul.mubr.bf16.gmra.mxu0 %v857
    %v3213 = vpop.f32.mrf.mxu0
    %v3214 = vadd.f32 %v3021, %v3213
    %v3215 = vpop.f32.mrf.mxu0
    %v3216 = vadd.f32 %v3023, %v3215
    %v3217 = vpop.f32.mrf.mxu0
    %v3218 = vadd.f32 %v3025, %v3217
    %v3219 = vpop.f32.mrf.mxu0
    %v3220 = vadd.f32 %v3027, %v3219
    %3221 = vmatprep.mubr.bf16.mxu0 %v865
    %3222 = vmatmul.mubr.bf16.gmra.mxu0 %v864
    %v3223 = vpop.f32.mrf.mxu0
    %v3224 = vadd.f32 %v3031, %v3223
    %v3225 = vpop.f32.mrf.mxu0
    %v3226 = vadd.f32 %v3033, %v3225
    %v3227 = vpop.f32.mrf.mxu0
    %v3228 = vadd.f32 %v3035, %v3227
    %v3229 = vpop.f32.mrf.mxu0
    %v3230 = vadd.f32 %v3037, %v3229
    %3231 = vmatprep.mubr.bf16.mxu0 %v872
    %3232 = vmatmul.mubr.bf16.gmra.mxu0 %v871
    %v3233 = vpop.f32.mrf.mxu0
    %v3234 = vadd.f32 %v3041, %v3233
    %v3235 = vpop.f32.mrf.mxu0
    %v3236 = vadd.f32 %v3043, %v3235
    %v3237 = vpop.f32.mrf.mxu0
    %v3238 = vadd.f32 %v3045, %v3237
    %v3239 = vpop.f32.mrf.mxu0
    %v3240 = vadd.f32 %v3047, %v3239
    %3241 = vmatprep.mubr.bf16.mxu0 %v879
    %3242 = vmatmul.mubr.bf16.gmra.mxu0 %v878
    %v3243 = vpop.f32.mrf.mxu0
    %v3244 = vadd.f32 %v3051, %v3243
    %v3245 = vpop.f32.mrf.mxu0
    %v3246 = vadd.f32 %v3053, %v3245
    %v3247 = vpop.f32.mrf.mxu0
    %v3248 = vadd.f32 %v3055, %v3247
    %v3249 = vpop.f32.mrf.mxu0
    %v3250 = vadd.f32 %v3057, %v3249
    %3251 = vmatprep.mubr.bf16.mxu0 %v886
    %3252 = vmatmul.mubr.bf16.gmra.mxu0 %v885
    %v3253 = vpop.f32.mrf.mxu0
    %v3254 = vadd.f32 %v3061, %v3253
    %v3255 = vpop.f32.mrf.mxu0
    %v3256 = vadd.f32 %v3063, %v3255
    %v3257 = vpop.f32.mrf.mxu0
    %v3258 = vadd.f32 %v3065, %v3257
    %v3259 = vpop.f32.mrf.mxu0
    %v3260 = vadd.f32 %v3067, %v3259
    %3261 = vmatprep.mubr.bf16.mxu0 %v893
    %3262 = vmatmul.mubr.bf16.gmra.mxu0 %v892
    %v3263 = vpop.f32.mrf.mxu0
    %v3264 = vadd.f32 %v3071, %v3263
    %v3265 = vpop.f32.mrf.mxu0
    %v3266 = vadd.f32 %v3073, %v3265
    %v3267 = vpop.f32.mrf.mxu0
    %v3268 = vadd.f32 %v3075, %v3267
    %v3269 = vpop.f32.mrf.mxu0
    %v3270 = vadd.f32 %v3077, %v3269
    %3271 = vmatprep.mubr.bf16.mxu0 %v900
    %3272 = vmatmul.mubr.bf16.gmra.mxu0 %v899
    %v3273 = vpop.f32.mrf.mxu0
    %v3274 = vadd.f32 %v3081, %v3273
    %v3275 = vpop.f32.mrf.mxu0
    %v3276 = vadd.f32 %v3083, %v3275
    %v3277 = vpop.f32.mrf.mxu0
    %v3278 = vadd.f32 %v3085, %v3277
    %v3279 = vpop.f32.mrf.mxu0
    %v3280 = vadd.f32 %v3087, %v3279
    %3281 = vmatprep.mubr.bf16.mxu0 %v907
    %3282 = vmatmul.mubr.bf16.gmra.mxu0 %v906
    %v3283 = vpop.f32.mrf.mxu0
    %v3284 = vadd.f32 %v3091, %v3283
    %v3285 = vpop.f32.mrf.mxu0
    %v3286 = vadd.f32 %v3093, %v3285
    %v3287 = vpop.f32.mrf.mxu0
    %v3288 = vadd.f32 %v3095, %v3287
    %v3289 = vpop.f32.mrf.mxu0
    %v3290 = vadd.f32 %v3097, %v3289
    %3291 = vmatprep.mubr.bf16.mxu0 %v914
    %3292 = vmatmul.mubr.bf16.gmra.mxu0 %v913
    %v3293 = vpop.f32.mrf.mxu0
    %v3294 = vadd.f32 %v3101, %v3293
    %v3295 = vpop.f32.mrf.mxu0
    %v3296 = vadd.f32 %v3103, %v3295
    %v3297 = vpop.f32.mrf.mxu0
    %v3298 = vadd.f32 %v3105, %v3297
    %v3299 = vpop.f32.mrf.mxu0
    %v3300 = vadd.f32 %v3107, %v3299
    %3301 = vmatprep.mubr.bf16.mxu0 %v921
    %3302 = vmatmul.mubr.bf16.gmra.mxu0 %v920
    %v3303 = vpop.f32.mrf.mxu0
    %v3304 = vadd.f32 %v3111, %v3303
    %v3305 = vpop.f32.mrf.mxu0
    %v3306 = vadd.f32 %v3113, %v3305
    %v3307 = vpop.f32.mrf.mxu0
    %v3308 = vadd.f32 %v3115, %v3307
    %v3309 = vpop.f32.mrf.mxu0
    %v3310 = vadd.f32 %v3117, %v3309
    %3311 = vmatprep.mubr.bf16.mxu0 %v928
    %3312 = vmatmul.mubr.bf16.gmra.mxu0 %v927
    %v3313 = vpop.f32.mrf.mxu0
    %v3314 = vadd.f32 %v3121, %v3313
    %v3315 = vpop.f32.mrf.mxu0
    %v3316 = vadd.f32 %v3123, %v3315
    %v3317 = vpop.f32.mrf.mxu0
    %v3318 = vadd.f32 %v3125, %v3317
    %v3319 = vpop.f32.mrf.mxu0
    %v3320 = vadd.f32 %v3127, %v3319
    %3321 = vdwg.mxu0
    %3322 = vmatprep.subr.bf16.mxu0 %v1875
    %3323 = vmatpush1.bf16.msra.mxu0 %v1874
    %3324 = vmatprep.subr.bf16.mxu0 %v1871
    %3325 = vmatpush1.bf16.msra.mxu0 %v1870
    %3326 = vmatprep.subr.bf16.mxu0 %v1867
    %3327 = vmatpush1.bf16.msra.mxu0 %v1866
    %3328 = vmatprep.subr.bf16.mxu0 %v1863
    %3329 = vmatpush1.bf16.msra.mxu0 %v1862
    %3330 = vmatprep.subr.bf16.mxu0 %v1859
    %3331 = vmatpush1.bf16.msra.mxu0 %v1858
    %3332 = vmatprep.subr.bf16.mxu0 %v1855
    %3333 = vmatpush1.bf16.msra.mxu0 %v1854
    %3334 = vmatprep.subr.bf16.mxu0 %v1851
    %3335 = vmatpush1.bf16.msra.mxu0 %v1850
    %3336 = vmatprep.subr.bf16.mxu0 %v1847
    %3337 = vmatpush1.bf16.msra.mxu0 %v1846
    %3338 = vmatprep.subr.bf16.mxu0 %v1907
    %3339 = vmatpush2.bf16.msra.mxu0 %v1906
    %3340 = vmatprep.subr.bf16.mxu0 %v1903
    %3341 = vmatpush2.bf16.msra.mxu0 %v1902
    %3342 = vmatprep.subr.bf16.mxu0 %v1899
    %3343 = vmatpush2.bf16.msra.mxu0 %v1898
    %3344 = vmatprep.subr.bf16.mxu0 %v1895
    %3345 = vmatpush2.bf16.msra.mxu0 %v1894
    %3346 = vmatprep.subr.bf16.mxu0 %v1891
    %3347 = vmatpush2.bf16.msra.mxu0 %v1890
    %3348 = vmatprep.subr.bf16.mxu0 %v1887
    %3349 = vmatpush2.bf16.msra.mxu0 %v1886
    %3350 = vmatprep.subr.bf16.mxu0 %v1883
    %3351 = vmatpush2.bf16.msra.mxu0 %v1882
    %3352 = vmatprep.subr.bf16.mxu0 %v1879
    %3353 = vmatpush2.bf16.msra.mxu0 %v1878
    %3354 = vmatprep.mubr.bf16.mxu0 %v825
    %3355 = vmatmul.mubr.bf16.gmra.mxu0 %v824
    %v3356 = vpop.f32.mrf.mxu0
    %v3357 = vadd.f32 %v3164, %v3356
    %v3358 = vpop.f32.mrf.mxu0
    %v3359 = vadd.f32 %v3166, %v3358
    %v3360 = vpop.f32.mrf.mxu0
    %v3361 = vadd.f32 %v3168, %v3360
    %v3362 = vpop.f32.mrf.mxu0
    %v3363 = vadd.f32 %v3170, %v3362
    %3364 = vmatprep.mubr.bf16.mxu0 %v832
    %3365 = vmatmul.mubr.bf16.gmra.mxu0 %v831
    %v3366 = vpop.f32.mrf.mxu0
    %v3367 = vadd.f32 %v3174, %v3366
    %v3368 = vpop.f32.mrf.mxu0
    %v3369 = vadd.f32 %v3176, %v3368
    %v3370 = vpop.f32.mrf.mxu0
    %v3371 = vadd.f32 %v3178, %v3370
    %v3372 = vpop.f32.mrf.mxu0
    %v3373 = vadd.f32 %v3180, %v3372
    %3374 = vmatprep.mubr.bf16.mxu0 %v839
    %3375 = vmatmul.mubr.bf16.gmra.mxu0 %v838
    %v3376 = vpop.f32.mrf.mxu0
    %v3377 = vadd.f32 %v3184, %v3376
    %v3378 = vpop.f32.mrf.mxu0
    %v3379 = vadd.f32 %v3186, %v3378
    %v3380 = vpop.f32.mrf.mxu0
    %v3381 = vadd.f32 %v3188, %v3380
    %v3382 = vpop.f32.mrf.mxu0
    %v3383 = vadd.f32 %v3190, %v3382
    %3384 = vmatprep.mubr.bf16.mxu0 %v846
    %3385 = vmatmul.mubr.bf16.gmra.mxu0 %v845
    %v3386 = vpop.f32.mrf.mxu0
    %v3387 = vadd.f32 %v3194, %v3386
    %v3388 = vpop.f32.mrf.mxu0
    %v3389 = vadd.f32 %v3196, %v3388
    %v3390 = vpop.f32.mrf.mxu0
    %v3391 = vadd.f32 %v3198, %v3390
    %v3392 = vpop.f32.mrf.mxu0
    %v3393 = vadd.f32 %v3200, %v3392
    %3394 = vmatprep.mubr.bf16.mxu0 %v853
    %3395 = vmatmul.mubr.bf16.gmra.mxu0 %v852
    %v3396 = vpop.f32.mrf.mxu0
    %v3397 = vadd.f32 %v3204, %v3396
    %v3398 = vpop.f32.mrf.mxu0
    %v3399 = vadd.f32 %v3206, %v3398
    %v3400 = vpop.f32.mrf.mxu0
    %v3401 = vadd.f32 %v3208, %v3400
    %v3402 = vpop.f32.mrf.mxu0
    %v3403 = vadd.f32 %v3210, %v3402
    %3404 = vmatprep.mubr.bf16.mxu0 %v860
    %3405 = vmatmul.mubr.bf16.gmra.mxu0 %v859
    %v3406 = vpop.f32.mrf.mxu0
    %v3407 = vadd.f32 %v3214, %v3406
    %v3408 = vpop.f32.mrf.mxu0
    %v3409 = vadd.f32 %v3216, %v3408
    %v3410 = vpop.f32.mrf.mxu0
    %v3411 = vadd.f32 %v3218, %v3410
    %v3412 = vpop.f32.mrf.mxu0
    %v3413 = vadd.f32 %v3220, %v3412
    %3414 = vmatprep.mubr.bf16.mxu0 %v867
    %3415 = vmatmul.mubr.bf16.gmra.mxu0 %v866
    %v3416 = vpop.f32.mrf.mxu0
    %v3417 = vadd.f32 %v3224, %v3416
    %v3418 = vpop.f32.mrf.mxu0
    %v3419 = vadd.f32 %v3226, %v3418
    %v3420 = vpop.f32.mrf.mxu0
    %v3421 = vadd.f32 %v3228, %v3420
    %v3422 = vpop.f32.mrf.mxu0
    %v3423 = vadd.f32 %v3230, %v3422
    %3424 = vmatprep.mubr.bf16.mxu0 %v874
    %3425 = vmatmul.mubr.bf16.gmra.mxu0 %v873
    %v3426 = vpop.f32.mrf.mxu0
    %v3427 = vadd.f32 %v3234, %v3426
    %v3428 = vpop.f32.mrf.mxu0
    %v3429 = vadd.f32 %v3236, %v3428
    %v3430 = vpop.f32.mrf.mxu0
    %v3431 = vadd.f32 %v3238, %v3430
    %v3432 = vpop.f32.mrf.mxu0
    %v3433 = vadd.f32 %v3240, %v3432
    %3434 = vmatprep.mubr.bf16.mxu0 %v881
    %3435 = vmatmul.mubr.bf16.gmra.mxu0 %v880
    %v3436 = vpop.f32.mrf.mxu0
    %v3437 = vadd.f32 %v3244, %v3436
    %v3438 = vpop.f32.mrf.mxu0
    %v3439 = vadd.f32 %v3246, %v3438
    %v3440 = vpop.f32.mrf.mxu0
    %v3441 = vadd.f32 %v3248, %v3440
    %v3442 = vpop.f32.mrf.mxu0
    %v3443 = vadd.f32 %v3250, %v3442
    %3444 = vmatprep.mubr.bf16.mxu0 %v888
    %3445 = vmatmul.mubr.bf16.gmra.mxu0 %v887
    %v3446 = vpop.f32.mrf.mxu0
    %v3447 = vadd.f32 %v3254, %v3446
    %v3448 = vpop.f32.mrf.mxu0
    %v3449 = vadd.f32 %v3256, %v3448
    %v3450 = vpop.f32.mrf.mxu0
    %v3451 = vadd.f32 %v3258, %v3450
    %v3452 = vpop.f32.mrf.mxu0
    %v3453 = vadd.f32 %v3260, %v3452
    %3454 = vmatprep.mubr.bf16.mxu0 %v895
    %3455 = vmatmul.mubr.bf16.gmra.mxu0 %v894
    %v3456 = vpop.f32.mrf.mxu0
    %v3457 = vadd.f32 %v3264, %v3456
    %v3458 = vpop.f32.mrf.mxu0
    %v3459 = vadd.f32 %v3266, %v3458
    %v3460 = vpop.f32.mrf.mxu0
    %v3461 = vadd.f32 %v3268, %v3460
    %v3462 = vpop.f32.mrf.mxu0
    %v3463 = vadd.f32 %v3270, %v3462
    %3464 = vmatprep.mubr.bf16.mxu0 %v902
    %3465 = vmatmul.mubr.bf16.gmra.mxu0 %v901
    %v3466 = vpop.f32.mrf.mxu0
    %v3467 = vadd.f32 %v3274, %v3466
    %v3468 = vpop.f32.mrf.mxu0
    %v3469 = vadd.f32 %v3276, %v3468
    %v3470 = vpop.f32.mrf.mxu0
    %v3471 = vadd.f32 %v3278, %v3470
    %v3472 = vpop.f32.mrf.mxu0
    %v3473 = vadd.f32 %v3280, %v3472
    %3474 = vmatprep.mubr.bf16.mxu0 %v909
    %3475 = vmatmul.mubr.bf16.gmra.mxu0 %v908
    %v3476 = vpop.f32.mrf.mxu0
    %v3477 = vadd.f32 %v3284, %v3476
    %v3478 = vpop.f32.mrf.mxu0
    %v3479 = vadd.f32 %v3286, %v3478
    %v3480 = vpop.f32.mrf.mxu0
    %v3481 = vadd.f32 %v3288, %v3480
    %v3482 = vpop.f32.mrf.mxu0
    %v3483 = vadd.f32 %v3290, %v3482
    %3484 = vmatprep.mubr.bf16.mxu0 %v916
    %3485 = vmatmul.mubr.bf16.gmra.mxu0 %v915
    %v3486 = vpop.f32.mrf.mxu0
    %v3487 = vadd.f32 %v3294, %v3486
    %v3488 = vpop.f32.mrf.mxu0
    %v3489 = vadd.f32 %v3296, %v3488
    %v3490 = vpop.f32.mrf.mxu0
    %v3491 = vadd.f32 %v3298, %v3490
    %v3492 = vpop.f32.mrf.mxu0
    %v3493 = vadd.f32 %v3300, %v3492
    %3494 = vmatprep.mubr.bf16.mxu0 %v923
    %3495 = vmatmul.mubr.bf16.gmra.mxu0 %v922
    %v3496 = vpop.f32.mrf.mxu0
    %v3497 = vadd.f32 %v3304, %v3496
    %v3498 = vpop.f32.mrf.mxu0
    %v3499 = vadd.f32 %v3306, %v3498
    %v3500 = vpop.f32.mrf.mxu0
    %v3501 = vadd.f32 %v3308, %v3500
    %v3502 = vpop.f32.mrf.mxu0
    %v3503 = vadd.f32 %v3310, %v3502
    %3504 = vmatprep.mubr.bf16.mxu0 %v930
    %3505 = vmatmul.mubr.bf16.gmra.mxu0 %v929
    %v3506 = vpop.f32.mrf.mxu0
    %v3507 = vadd.f32 %v3314, %v3506
    %v3508 = vpop.f32.mrf.mxu0
    %v3509 = vadd.f32 %v3316, %v3508
    %v3510 = vpop.f32.mrf.mxu0
    %v3511 = vadd.f32 %v3318, %v3510
    %v3512 = vpop.f32.mrf.mxu0
    %v3513 = vadd.f32 %v3320, %v3512
    %3514 = vdwg.mxu0
    %3515 = vmatprep.subr.bf16.mxu0 %v1939
    %3516 = vmatpush1.bf16.msra.mxu0 %v1938
    %3517 = vmatprep.subr.bf16.mxu0 %v1935
    %3518 = vmatpush1.bf16.msra.mxu0 %v1934
    %3519 = vmatprep.subr.bf16.mxu0 %v1931
    %3520 = vmatpush1.bf16.msra.mxu0 %v1930
    %3521 = vmatprep.subr.bf16.mxu0 %v1927
    %3522 = vmatpush1.bf16.msra.mxu0 %v1926
    %3523 = vmatprep.subr.bf16.mxu0 %v1923
    %3524 = vmatpush1.bf16.msra.mxu0 %v1922
    %3525 = vmatprep.subr.bf16.mxu0 %v1919
    %3526 = vmatpush1.bf16.msra.mxu0 %v1918
    %3527 = vmatprep.subr.bf16.mxu0 %v1915
    %3528 = vmatpush1.bf16.msra.mxu0 %v1914
    %3529 = vmatprep.subr.bf16.mxu0 %v1911
    %3530 = vmatpush1.bf16.msra.mxu0 %v1910
    %3531 = vmatprep.subr.bf16.mxu0 0
    %3532 = vmatpush2.bf16.msra.mxu0 0
    %3533 = vmatprep.subr.bf16.mxu0 0
    %3534 = vmatpush2.bf16.msra.mxu0 0
    %3535 = vmatprep.subr.bf16.mxu0 0
    %3536 = vmatpush2.bf16.msra.mxu0 0
    %3537 = vmatprep.subr.bf16.mxu0 0
    %3538 = vmatpush2.bf16.msra.mxu0 0
    %3539 = vmatprep.subr.bf16.mxu0 0
    %3540 = vmatpush2.bf16.msra.mxu0 0
    %3541 = vmatprep.subr.bf16.mxu0 0
    %3542 = vmatpush2.bf16.msra.mxu0 0
    %3543 = vmatprep.subr.bf16.mxu0 0
    %3544 = vmatpush2.bf16.msra.mxu0 0
    %3545 = vmatprep.subr.bf16.mxu0 0
    %3546 = vmatpush2.bf16.msra.mxu0 0
    %3547 = vmatprep.mubr.bf16.mxu0 0
    %3548 = vmatmul.mubr.bf16.gmra.mxu0 %v826
    %v3549 = vpop.f32.mrf.mxu0
    %v3550 = vadd.f32 %v3357, %v3549
    %v3551 = vpop.f32.mrf.mxu0
    %v3552 = vadd.f32 %v3359, %v3551
    %v3553 = vpop.f32.mrf.mxu0
    %v3554 = vadd.f32 %v3361, %v3553
    %v3555 = vpop.f32.mrf.mxu0
    %v3556 = vadd.f32 %v3363, %v3555
    %3557 = vmatprep.mubr.bf16.mxu0 0
    %3558 = vmatmul.mubr.bf16.gmra.mxu0 %v833
    %v3559 = vpop.f32.mrf.mxu0
    %v3560 = vadd.f32 %v3367, %v3559
    %v3561 = vpop.f32.mrf.mxu0
    %v3562 = vadd.f32 %v3369, %v3561
    %v3563 = vpop.f32.mrf.mxu0
    %v3564 = vadd.f32 %v3371, %v3563
    %v3565 = vpop.f32.mrf.mxu0
    %v3566 = vadd.f32 %v3373, %v3565
    %3567 = vmatprep.mubr.bf16.mxu0 0
    %3568 = vmatmul.mubr.bf16.gmra.mxu0 %v840
    %v3569 = vpop.f32.mrf.mxu0
    %v3570 = vadd.f32 %v3377, %v3569
    %v3571 = vpop.f32.mrf.mxu0
    %v3572 = vadd.f32 %v3379, %v3571
    %v3573 = vpop.f32.mrf.mxu0
    %v3574 = vadd.f32 %v3381, %v3573
    %v3575 = vpop.f32.mrf.mxu0
    %v3576 = vadd.f32 %v3383, %v3575
    %3577 = vmatprep.mubr.bf16.mxu0 0
    %3578 = vmatmul.mubr.bf16.gmra.mxu0 %v847
    %v3579 = vpop.f32.mrf.mxu0
    %v3580 = vadd.f32 %v3387, %v3579
    %v3581 = vpop.f32.mrf.mxu0
    %v3582 = vadd.f32 %v3389, %v3581
    %v3583 = vpop.f32.mrf.mxu0
    %v3584 = vadd.f32 %v3391, %v3583
    %v3585 = vpop.f32.mrf.mxu0
    %v3586 = vadd.f32 %v3393, %v3585
    %3587 = vmatprep.mubr.bf16.mxu0 0
    %3588 = vmatmul.mubr.bf16.gmra.mxu0 %v854
    %v3589 = vpop.f32.mrf.mxu0
    %v3590 = vadd.f32 %v3397, %v3589
    %v3591 = vpop.f32.mrf.mxu0
    %v3592 = vadd.f32 %v3399, %v3591
    %v3593 = vpop.f32.mrf.mxu0
    %v3594 = vadd.f32 %v3401, %v3593
    %v3595 = vpop.f32.mrf.mxu0
    %v3596 = vadd.f32 %v3403, %v3595
    %3597 = vmatprep.mubr.bf16.mxu0 0
    %3598 = vmatmul.mubr.bf16.gmra.mxu0 %v861
    %v3599 = vpop.f32.mrf.mxu0
    %v3600 = vadd.f32 %v3407, %v3599
    %v3601 = vpop.f32.mrf.mxu0
    %v3602 = vadd.f32 %v3409, %v3601
    %v3603 = vpop.f32.mrf.mxu0
    %v3604 = vadd.f32 %v3411, %v3603
    %v3605 = vpop.f32.mrf.mxu0
    %v3606 = vadd.f32 %v3413, %v3605
    %3607 = vmatprep.mubr.bf16.mxu0 0
    %3608 = vmatmul.mubr.bf16.gmra.mxu0 %v868
    %v3609 = vpop.f32.mrf.mxu0
    %v3610 = vadd.f32 %v3417, %v3609
    %v3611 = vpop.f32.mrf.mxu0
    %v3612 = vadd.f32 %v3419, %v3611
    %v3613 = vpop.f32.mrf.mxu0
    %v3614 = vadd.f32 %v3421, %v3613
    %v3615 = vpop.f32.mrf.mxu0
    %v3616 = vadd.f32 %v3423, %v3615
    %3617 = vmatprep.mubr.bf16.mxu0 0
    %3618 = vmatmul.mubr.bf16.gmra.mxu0 %v875
    %v3619 = vpop.f32.mrf.mxu0
    %v3620 = vadd.f32 %v3427, %v3619
    %v3621 = vpop.f32.mrf.mxu0
    %v3622 = vadd.f32 %v3429, %v3621
    %v3623 = vpop.f32.mrf.mxu0
    %v3624 = vadd.f32 %v3431, %v3623
    %v3625 = vpop.f32.mrf.mxu0
    %v3626 = vadd.f32 %v3433, %v3625
    %3627 = vmatprep.mubr.bf16.mxu0 0
    %3628 = vmatmul.mubr.bf16.gmra.mxu0 %v882
    %v3629 = vpop.f32.mrf.mxu0
    %v3630 = vadd.f32 %v3437, %v3629
    %v3631 = vpop.f32.mrf.mxu0
    %v3632 = vadd.f32 %v3439, %v3631
    %v3633 = vpop.f32.mrf.mxu0
    %v3634 = vadd.f32 %v3441, %v3633
    %v3635 = vpop.f32.mrf.mxu0
    %v3636 = vadd.f32 %v3443, %v3635
    %3637 = vmatprep.mubr.bf16.mxu0 0
    %3638 = vmatmul.mubr.bf16.gmra.mxu0 %v889
    %v3639 = vpop.f32.mrf.mxu0
    %v3640 = vadd.f32 %v3447, %v3639
    %v3641 = vpop.f32.mrf.mxu0
    %v3642 = vadd.f32 %v3449, %v3641
    %v3643 = vpop.f32.mrf.mxu0
    %v3644 = vadd.f32 %v3451, %v3643
    %v3645 = vpop.f32.mrf.mxu0
    %v3646 = vadd.f32 %v3453, %v3645
    %3647 = vmatprep.mubr.bf16.mxu0 0
    %3648 = vmatmul.mubr.bf16.gmra.mxu0 %v896
    %v3649 = vpop.f32.mrf.mxu0
    %v3650 = vadd.f32 %v3457, %v3649
    %v3651 = vpop.f32.mrf.mxu0
    %v3652 = vadd.f32 %v3459, %v3651
    %v3653 = vpop.f32.mrf.mxu0
    %v3654 = vadd.f32 %v3461, %v3653
    %v3655 = vpop.f32.mrf.mxu0
    %v3656 = vadd.f32 %v3463, %v3655
    %3657 = vmatprep.mubr.bf16.mxu0 0
    %3658 = vmatmul.mubr.bf16.gmra.mxu0 %v903
    %v3659 = vpop.f32.mrf.mxu0
    %v3660 = vadd.f32 %v3467, %v3659
    %v3661 = vpop.f32.mrf.mxu0
    %v3662 = vadd.f32 %v3469, %v3661
    %v3663 = vpop.f32.mrf.mxu0
    %v3664 = vadd.f32 %v3471, %v3663
    %v3665 = vpop.f32.mrf.mxu0
    %v3666 = vadd.f32 %v3473, %v3665
    %3667 = vmatprep.mubr.bf16.mxu0 0
    %3668 = vmatmul.mubr.bf16.gmra.mxu0 %v910
    %v3669 = vpop.f32.mrf.mxu0
    %v3670 = vadd.f32 %v3477, %v3669
    %v3671 = vpop.f32.mrf.mxu0
    %v3672 = vadd.f32 %v3479, %v3671
    %v3673 = vpop.f32.mrf.mxu0
    %v3674 = vadd.f32 %v3481, %v3673
    %v3675 = vpop.f32.mrf.mxu0
    %v3676 = vadd.f32 %v3483, %v3675
    %3677 = vmatprep.mubr.bf16.mxu0 0
    %3678 = vmatmul.mubr.bf16.gmra.mxu0 %v917
    %v3679 = vpop.f32.mrf.mxu0
    %v3680 = vadd.f32 %v3487, %v3679
    %v3681 = vpop.f32.mrf.mxu0
    %v3682 = vadd.f32 %v3489, %v3681
    %v3683 = vpop.f32.mrf.mxu0
    %v3684 = vadd.f32 %v3491, %v3683
    %v3685 = vpop.f32.mrf.mxu0
    %v3686 = vadd.f32 %v3493, %v3685
    %3687 = vmatprep.mubr.bf16.mxu0 0
    %3688 = vmatmul.mubr.bf16.gmra.mxu0 %v924
    %v3689 = vpop.f32.mrf.mxu0
    %v3690 = vadd.f32 %v3497, %v3689
    %v3691 = vpop.f32.mrf.mxu0
    %v3692 = vadd.f32 %v3499, %v3691
    %v3693 = vpop.f32.mrf.mxu0
    %v3694 = vadd.f32 %v3501, %v3693
    %v3695 = vpop.f32.mrf.mxu0
    %v3696 = vadd.f32 %v3503, %v3695
    %3697 = vmatprep.mubr.bf16.mxu0 0
    %3698 = vmatmul.mubr.bf16.gmra.mxu0 %v931
    %v3699 = vpop.f32.mrf.mxu0
    %v3700 = vadd.f32 %v3507, %v3699
    %v3701 = vpop.f32.mrf.mxu0
    %v3702 = vadd.f32 %v3509, %v3701
    %v3703 = vpop.f32.mrf.mxu0
    %v3704 = vadd.f32 %v3511, %v3703
    %v3705 = vpop.f32.mrf.mxu0
    %v3706 = vadd.f32 %v3513, %v3705
    %3707 = vdwg.mxu0
    %v3708 = vmax.f32 %v2778, 0.0
    %v3709 = vmax.f32 %v2780, 0.0
    %v3710 = vmax.f32 %v3550, 0.0
    %v3711 = vmax.f32 %v3552, 0.0
    %v3712 = vmax.f32 %v2782, 0.0
    %v3713 = vmax.f32 %v2784, 0.0
    %v3714 = vmax.f32 %v3554, 0.0
    %v3715 = vmax.f32 %v3556, 0.0
    %v3716 = vmax.f32 %v2788, 0.0
    %v3717 = vmax.f32 %v2790, 0.0
    %v3718 = vmax.f32 %v3560, 0.0
    %v3719 = vmax.f32 %v3562, 0.0
    %v3720 = vmax.f32 %v2792, 0.0
    %v3721 = vmax.f32 %v2794, 0.0
    %v3722 = vmax.f32 %v3564, 0.0
    %v3723 = vmax.f32 %v3566, 0.0
    %v3724 = vmax.f32 %v2798, 0.0
    %v3725 = vmax.f32 %v2800, 0.0
    %v3726 = vmax.f32 %v3570, 0.0
    %v3727 = vmax.f32 %v3572, 0.0
    %v3728 = vmax.f32 %v2802, 0.0
    %v3729 = vmax.f32 %v2804, 0.0
    %v3730 = vmax.f32 %v3574, 0.0
    %v3731 = vmax.f32 %v3576, 0.0
    %v3732 = vmax.f32 %v2808, 0.0
    %v3733 = vmax.f32 %v2810, 0.0
    %v3734 = vmax.f32 %v3580, 0.0
    %v3735 = vmax.f32 %v3582, 0.0
    %v3736 = vmax.f32 %v2812, 0.0
    %v3737 = vmax.f32 %v2814, 0.0
    %v3738 = vmax.f32 %v3584, 0.0
    %v3739 = vmax.f32 %v3586, 0.0
    %v3740 = vmax.f32 %v2818, 0.0
    %v3741 = vmax.f32 %v2820, 0.0
    %v3742 = vmax.f32 %v3590, 0.0
    %v3743 = vmax.f32 %v3592, 0.0
    %v3744 = vmax.f32 %v2822, 0.0
    %v3745 = vmax.f32 %v2824, 0.0
    %v3746 = vmax.f32 %v3594, 0.0
    %v3747 = vmax.f32 %v3596, 0.0
    %v3748 = vmax.f32 %v2828, 0.0
    %v3749 = vmax.f32 %v2830, 0.0
    %v3750 = vmax.f32 %v3600, 0.0
    %v3751 = vmax.f32 %v3602, 0.0
    %v3752 = vmax.f32 %v2832, 0.0
    %v3753 = vmax.f32 %v2834, 0.0
    %v3754 = vmax.f32 %v3604, 0.0
    %v3755 = vmax.f32 %v3606, 0.0
    %v3756 = vmax.f32 %v2838, 0.0
    %v3757 = vmax.f32 %v2840, 0.0
    %v3758 = vmax.f32 %v3610, 0.0
    %v3759 = vmax.f32 %v3612, 0.0
    %v3760 = vmax.f32 %v2842, 0.0
    %v3761 = vmax.f32 %v2844, 0.0
    %v3762 = vmax.f32 %v3614, 0.0
    %v3763 = vmax.f32 %v3616, 0.0
    %v3764 = vmax.f32 %v2848, 0.0
    %v3765 = vmax.f32 %v2850, 0.0
    %v3766 = vmax.f32 %v3620, 0.0
    %v3767 = vmax.f32 %v3622, 0.0
    %v3768 = vmax.f32 %v2852, 0.0
    %v3769 = vmax.f32 %v2854, 0.0
    %v3770 = vmax.f32 %v3624, 0.0
    %v3771 = vmax.f32 %v3626, 0.0
    %v3772 = vmax.f32 %v2858, 0.0
    %v3773 = vmax.f32 %v2860, 0.0
    %v3774 = vmax.f32 %v3630, 0.0
    %v3775 = vmax.f32 %v3632, 0.0
    %v3776 = vmax.f32 %v2862, 0.0
    %v3777 = vmax.f32 %v2864, 0.0
    %v3778 = vmax.f32 %v3634, 0.0
    %v3779 = vmax.f32 %v3636, 0.0
    %v3780 = vmax.f32 %v2868, 0.0
    %v3781 = vmax.f32 %v2870, 0.0
    %v3782 = vmax.f32 %v3640, 0.0
    %v3783 = vmax.f32 %v3642, 0.0
    %v3784 = vmax.f32 %v2872, 0.0
    %v3785 = vmax.f32 %v2874, 0.0
    %v3786 = vmax.f32 %v3644, 0.0
    %v3787 = vmax.f32 %v3646, 0.0
    %v3788 = vmax.f32 %v2878, 0.0
    %v3789 = vmax.f32 %v2880, 0.0
    %v3790 = vmax.f32 %v3650, 0.0
    %v3791 = vmax.f32 %v3652, 0.0
    %v3792 = vmax.f32 %v2882, 0.0
    %v3793 = vmax.f32 %v2884, 0.0
    %v3794 = vmax.f32 %v3654, 0.0
    %v3795 = vmax.f32 %v3656, 0.0
    %v3796 = vmax.f32 %v2888, 0.0
    %v3797 = vmax.f32 %v2890, 0.0
    %v3798 = vmax.f32 %v3660, 0.0
    %v3799 = vmax.f32 %v3662, 0.0
    %v3800 = vmax.f32 %v2892, 0.0
    %v3801 = vmax.f32 %v2894, 0.0
    %v3802 = vmax.f32 %v3664, 0.0
    %v3803 = vmax.f32 %v3666, 0.0
    %v3804 = vmax.f32 %v2898, 0.0
    %v3805 = vmax.f32 %v2900, 0.0
    %v3806 = vmax.f32 %v3670, 0.0
    %v3807 = vmax.f32 %v3672, 0.0
    %v3808 = vmax.f32 %v2902, 0.0
    %v3809 = vmax.f32 %v2904, 0.0
    %v3810 = vmax.f32 %v3674, 0.0
    %v3811 = vmax.f32 %v3676, 0.0
    %v3812 = vmax.f32 %v2908, 0.0
    %v3813 = vmax.f32 %v2910, 0.0
    %v3814 = vmax.f32 %v3680, 0.0
    %v3815 = vmax.f32 %v3682, 0.0
    %v3816 = vmax.f32 %v2912, 0.0
    %v3817 = vmax.f32 %v2914, 0.0
    %v3818 = vmax.f32 %v3684, 0.0
    %v3819 = vmax.f32 %v3686, 0.0
    %v3820 = vmax.f32 %v2918, 0.0
    %v3821 = vmax.f32 %v2920, 0.0
    %v3822 = vmax.f32 %v3690, 0.0
    %v3823 = vmax.f32 %v3692, 0.0
    %v3824 = vmax.f32 %v2922, 0.0
    %v3825 = vmax.f32 %v2924, 0.0
    %v3826 = vmax.f32 %v3694, 0.0
    %v3827 = vmax.f32 %v3696, 0.0
    %v3828 = vmax.f32 %v2928, 0.0
    %v3829 = vmax.f32 %v2930, 0.0
    %v3830 = vmax.f32 %v3700, 0.0
    %v3831 = vmax.f32 %v3702, 0.0
    %v3832 = vmax.f32 %v2932, 0.0
    %v3833 = vmax.f32 %v2934, 0.0
    %v3834 = vmax.f32 %v3704, 0.0
    %v3835 = vmax.f32 %v3706, 0.0
    %v3836 = vpack.c.bf16 %v3712, %v3708
    %v3837 = vpack.c.bf16 %v3713, %v3709
    %v3838 = vpack.c.bf16 %v3714, %v3710
    %v3839 = vpack.c.bf16 %v3715, %v3711
    %v3840 = vpack.c.bf16 %v3720, %v3716
    %v3841 = vpack.c.bf16 %v3721, %v3717
    %v3842 = vpack.c.bf16 %v3722, %v3718
    %v3843 = vpack.c.bf16 %v3723, %v3719
    %v3844 = vpack.c.bf16 %v3728, %v3724
    %v3845 = vpack.c.bf16 %v3729, %v3725
    %v3846 = vpack.c.bf16 %v3730, %v3726
    %v3847 = vpack.c.bf16 %v3731, %v3727
    %v3848 = vpack.c.bf16 %v3736, %v3732
    %v3849 = vpack.c.bf16 %v3737, %v3733
    %v3850 = vpack.c.bf16 %v3738, %v3734
    %v3851 = vpack.c.bf16 %v3739, %v3735
    %v3852 = vpack.c.bf16 %v3744, %v3740
    %v3853 = vpack.c.bf16 %v3745, %v3741
    %v3854 = vpack.c.bf16 %v3746, %v3742
    %v3855 = vpack.c.bf16 %v3747, %v3743
    %v3856 = vpack.c.bf16 %v3752, %v3748
    %v3857 = vpack.c.bf16 %v3753, %v3749
    %v3858 = vpack.c.bf16 %v3754, %v3750
    %v3859 = vpack.c.bf16 %v3755, %v3751
    %v3860 = vpack.c.bf16 %v3760, %v3756
    %v3861 = vpack.c.bf16 %v3761, %v3757
    %v3862 = vpack.c.bf16 %v3762, %v3758
    %v3863 = vpack.c.bf16 %v3763, %v3759
    %v3864 = vpack.c.bf16 %v3768, %v3764
    %v3865 = vpack.c.bf16 %v3769, %v3765
    %v3866 = vpack.c.bf16 %v3770, %v3766
    %v3867 = vpack.c.bf16 %v3771, %v3767
    %v3868 = vpack.c.bf16 %v3776, %v3772
    %v3869 = vpack.c.bf16 %v3777, %v3773
    %v3870 = vpack.c.bf16 %v3778, %v3774
    %v3871 = vpack.c.bf16 %v3779, %v3775
    %v3872 = vpack.c.bf16 %v3784, %v3780
    %v3873 = vpack.c.bf16 %v3785, %v3781
    %v3874 = vpack.c.bf16 %v3786, %v3782
    %v3875 = vpack.c.bf16 %v3787, %v3783
    %v3876 = vpack.c.bf16 %v3792, %v3788
    %v3877 = vpack.c.bf16 %v3793, %v3789
    %v3878 = vpack.c.bf16 %v3794, %v3790
    %v3879 = vpack.c.bf16 %v3795, %v3791
    %v3880 = vpack.c.bf16 %v3800, %v3796
    %v3881 = vpack.c.bf16 %v3801, %v3797
    %v3882 = vpack.c.bf16 %v3802, %v3798
    %v3883 = vpack.c.bf16 %v3803, %v3799
    %v3884 = vpack.c.bf16 %v3808, %v3804
    %v3885 = vpack.c.bf16 %v3809, %v3805
    %v3886 = vpack.c.bf16 %v3810, %v3806
    %v3887 = vpack.c.bf16 %v3811, %v3807
    %v3888 = vpack.c.bf16 %v3816, %v3812
    %v3889 = vpack.c.bf16 %v3817, %v3813
    %v3890 = vpack.c.bf16 %v3818, %v3814
    %v3891 = vpack.c.bf16 %v3819, %v3815
    %v3892 = vpack.c.bf16 %v3824, %v3820
    %v3893 = vpack.c.bf16 %v3825, %v3821
    %v3894 = vpack.c.bf16 %v3826, %v3822
    %v3895 = vpack.c.bf16 %v3827, %v3823
    %v3896 = vpack.c.bf16 %v3832, %v3828
    %v3897 = vpack.c.bf16 %v3833, %v3829
    %v3898 = vpack.c.bf16 %v3834, %v3830
    %v3899 = vpack.c.bf16 %v3835, %v3831
    %v3900 = vld [vmem:[#allocation8] sm:$0xff]
    %v3901 = vld [vmem:[#allocation8 + $0x8] sm:$0xff]
    %v3902 = vld [vmem:[#allocation8 + $0x10] sm:$0xff]
    %v3903 = vld [vmem:[#allocation8 + $0x18] sm:$0xff]
    %v3904 = vld [vmem:[#allocation8 + $0x20] sm:$0xff]
    %v3905 = vld [vmem:[#allocation8 + $0x28] sm:$0xff]
    %v3906 = vld [vmem:[#allocation8 + $0x30] sm:$0xff]
    %v3907 = vld [vmem:[#allocation8 + $0x38] sm:$0xff]
    %v3908 = vld [vmem:[#allocation8 + $0x40] sm:$0xff]
    %v3909 = vld [vmem:[#allocation8 + $0x48] sm:$0xff]
    %v3910 = vld [vmem:[#allocation8 + $0x50] sm:$0xff]
    %v3911 = vld [vmem:[#allocation8 + $0x58] sm:$0xff]
    %v3912 = vld [vmem:[#allocation8 + $0x60] sm:$0xff]
    %v3913 = vld [vmem:[#allocation8 + $0x68] sm:$0xff]
    %v3914 = vld [vmem:[#allocation8 + $0x70] sm:$0xff]
    %v3915 = vld [vmem:[#allocation8 + $0x78] sm:$0xff]
    %v3916 = vld [vmem:[#allocation8 + $0x80] sm:$0xff]
    %v3917 = vld [vmem:[#allocation8 + $0x88] sm:$0xff]
    %v3918 = vld [vmem:[#allocation8 + $0x90] sm:$0xff]
    %v3919 = vld [vmem:[#allocation8 + $0x98] sm:$0xff]
    %v3920 = vld [vmem:[#allocation8 + $0xa0] sm:$0xff]
    %v3921 = vld [vmem:[#allocation8 + $0xa8] sm:$0xff]
    %v3922 = vld [vmem:[#allocation8 + $0xb0] sm:$0xff]
    %v3923 = vld [vmem:[#allocation8 + $0xb8] sm:$0xff]
    %v3924 = vld [vmem:[#allocation8 + $0xc0] sm:$0xff]
    %v3925 = vld [vmem:[#allocation8 + $0xc8] sm:$0xff]
    %v3926 = vld [vmem:[#allocation8 + $0xd0] sm:$0xff]
    %v3927 = vld [vmem:[#allocation8 + $0xd8] sm:$0xff]
    %v3928 = vld [vmem:[#allocation8 + $0xe0] sm:$0xff]
    %v3929 = vld [vmem:[#allocation8 + $0xe8] sm:$0xff]
    %v3930 = vld [vmem:[#allocation8 + $0xf0] sm:$0xff]
    %v3931 = vld [vmem:[#allocation8 + $0xf8] sm:$0xff]
    %v3932 = vld [vmem:[#allocation8 + $0x100] sm:$0xff]
    %v3933 = vld [vmem:[#allocation8 + $0x108] sm:$0xff]
    %v3934 = vld [vmem:[#allocation8 + $0x110] sm:$0xff]
    %v3935 = vld [vmem:[#allocation8 + $0x118] sm:$0xff]
    %v3936 = vld [vmem:[#allocation8 + $0x120] sm:$0xff]
    %v3937 = vld [vmem:[#allocation8 + $0x128] sm:$0xff]
    %v3938 = vld [vmem:[#allocation8 + $0x130] sm:$0xff]
    %v3939 = vld [vmem:[#allocation8 + $0x138] sm:$0xff]
    %v3940 = vld [vmem:[#allocation8 + $0x140] sm:$0xff]
    %v3941 = vld [vmem:[#allocation8 + $0x148] sm:$0xff]
    %v3942 = vld [vmem:[#allocation8 + $0x150] sm:$0xff]
    %v3943 = vld [vmem:[#allocation8 + $0x158] sm:$0xff]
    %v3944 = vld [vmem:[#allocation8 + $0x160] sm:$0xff]
    %v3945 = vld [vmem:[#allocation8 + $0x168] sm:$0xff]
    %v3946 = vld [vmem:[#allocation8 + $0x170] sm:$0xff]
    %v3947 = vld [vmem:[#allocation8 + $0x178] sm:$0xff]
    %v3948 = vld [vmem:[#allocation8 + $0x180] sm:$0xff]
    %v3949 = vld [vmem:[#allocation8 + $0x188] sm:$0xff]
    %v3950 = vld [vmem:[#allocation8 + $0x190] sm:$0xff]
    %v3951 = vld [vmem:[#allocation8 + $0x198] sm:$0xff]
    %v3952 = vld [vmem:[#allocation8 + $0x1a0] sm:$0xff]
    %v3953 = vld [vmem:[#allocation8 + $0x1a8] sm:$0xff]
    %v3954 = vld [vmem:[#allocation8 + $0x1b0] sm:$0xff]
    %v3955 = vld [vmem:[#allocation8 + $0x1b8] sm:$0xff]
    %v3956 = vld [vmem:[#allocation8 + $0x1c0] sm:$0xff]
    %v3957 = vld [vmem:[#allocation8 + $0x1c8] sm:$0xff]
    %v3958 = vld [vmem:[#allocation8 + $0x1d0] sm:$0xff]
    %v3959 = vld [vmem:[#allocation8 + $0x1d8] sm:$0xff]
    %v3960 = vld [vmem:[#allocation8 + $0x1e0] sm:$0xff]
    %v3961 = vld [vmem:[#allocation8 + $0x1e8] sm:$0xff]
    %v3962 = vld [vmem:[#allocation8 + $0x1f0] sm:$0xff]
    %v3963 = vld [vmem:[#allocation8 + $0x1f8] sm:$0xff]
    %v3964 = vld [vmem:[#allocation8 + $0x200] sm:$0xff]
    %v3965 = vld [vmem:[#allocation8 + $0x208] sm:$0xff]
    %v3966 = vld [vmem:[#allocation8 + $0x210] sm:$0xff]
    %v3967 = vld [vmem:[#allocation8 + $0x218] sm:$0xff]
    %v3968 = vld [vmem:[#allocation8 + $0x220] sm:$0xff]
    %v3969 = vld [vmem:[#allocation8 + $0x228] sm:$0xff]
    %v3970 = vld [vmem:[#allocation8 + $0x230] sm:$0xff]
    %v3971 = vld [vmem:[#allocation8 + $0x238] sm:$0xff]
    %v3972 = vld [vmem:[#allocation8 + $0x240] sm:$0xff]
    %v3973 = vld [vmem:[#allocation8 + $0x248] sm:$0xff]
    %v3974 = vld [vmem:[#allocation8 + $0x250] sm:$0xff]
    %v3975 = vld [vmem:[#allocation8 + $0x258] sm:$0xff]
    %v3976 = vld [vmem:[#allocation8 + $0x260] sm:$0xff]
    %v3977 = vld [vmem:[#allocation8 + $0x268] sm:$0xff]
    %v3978 = vld [vmem:[#allocation8 + $0x270] sm:$0xff]
    %v3979 = vld [vmem:[#allocation8 + $0x278] sm:$0xff]
    %v3980 = vld [vmem:[#allocation8 + $0x280] sm:$0xff]
    %v3981 = vld [vmem:[#allocation8 + $0x288] sm:$0xff]
    %v3982 = vld [vmem:[#allocation8 + $0x290] sm:$0xff]
    %v3983 = vld [vmem:[#allocation8 + $0x298] sm:$0xff]
    %v3984 = vld [vmem:[#allocation8 + $0x2a0] sm:$0xff]
    %v3985 = vld [vmem:[#allocation8 + $0x2a8] sm:$0xff]
    %v3986 = vld [vmem:[#allocation8 + $0x2b0] sm:$0xff]
    %v3987 = vld [vmem:[#allocation8 + $0x2b8] sm:$0xff]
    %v3988 = vld [vmem:[#allocation8 + $0x2c0] sm:$0xff]
    %v3989 = vld [vmem:[#allocation8 + $0x2c8] sm:$0xff]
    %v3990 = vld [vmem:[#allocation8 + $0x2d0] sm:$0xff]
    %v3991 = vld [vmem:[#allocation8 + $0x2d8] sm:$0xff]
    %v3992 = vld [vmem:[#allocation8 + $0x2e0] sm:$0xff]
    %v3993 = vld [vmem:[#allocation8 + $0x2e8] sm:$0xff]
    %v3994 = vld [vmem:[#allocation8 + $0x2f0] sm:$0xff]
    %v3995 = vld [vmem:[#allocation8 + $0x2f8] sm:$0xff]
    %v3996 = vld [vmem:[#allocation8 + $0x300] sm:$0xff]
    %v3997 = vld [vmem:[#allocation8 + $0x308] sm:$0xff]
    %v3998 = vld [vmem:[#allocation8 + $0x310] sm:$0xff]
    %v3999 = vld [vmem:[#allocation8 + $0x318] sm:$0xff]
    %v4000 = vld [vmem:[#allocation8 + $0x320] sm:$0xff]
    %v4001 = vld [vmem:[#allocation8 + $0x328] sm:$0xff]
    %v4002 = vld [vmem:[#allocation8 + $0x330] sm:$0xff]
    %v4003 = vld [vmem:[#allocation8 + $0x338] sm:$0xff]
    %v4004 = vld [vmem:[#allocation8 + $0x340] sm:$0xff]
    %v4005 = vld [vmem:[#allocation8 + $0x348] sm:$0xff]
    %v4006 = vld [vmem:[#allocation8 + $0x350] sm:$0xff]
    %v4007 = vld [vmem:[#allocation8 + $0x358] sm:$0xff]
    %v4008 = vld [vmem:[#allocation8 + $0x360] sm:$0xff]
    %v4009 = vld [vmem:[#allocation8 + $0x368] sm:$0xff]
    %v4010 = vld [vmem:[#allocation8 + $0x370] sm:$0xff]
    %v4011 = vld [vmem:[#allocation8 + $0x378] sm:$0xff]
    %v4012 = vld [vmem:[#allocation8 + $0x380] sm:$0xff]
    %v4013 = vld [vmem:[#allocation8 + $0x388] sm:$0xff]
    %v4014 = vld [vmem:[#allocation8 + $0x390] sm:$0xff]
    %v4015 = vld [vmem:[#allocation8 + $0x398] sm:$0xff]
    %v4016 = vld [vmem:[#allocation8 + $0x3a0] sm:$0xff]
    %v4017 = vld [vmem:[#allocation8 + $0x3a8] sm:$0xff]
    %v4018 = vld [vmem:[#allocation8 + $0x3b0] sm:$0xff]
    %v4019 = vld [vmem:[#allocation8 + $0x3b8] sm:$0xff]
    %v4020 = vld [vmem:[#allocation8 + $0x3c0] sm:$0xff]
    %v4021 = vld [vmem:[#allocation8 + $0x3c8] sm:$0xff]
    %v4022 = vld [vmem:[#allocation8 + $0x3d0] sm:$0xff]
    %v4023 = vld [vmem:[#allocation8 + $0x3d8] sm:$0xff]
    %v4024 = vld [vmem:[#allocation8 + $0x3e0] sm:$0xff]
    %v4025 = vld [vmem:[#allocation8 + $0x3e8] sm:$0xff]
    %v4026 = vld [vmem:[#allocation8 + $0x3f0] sm:$0xff]
    %v4027 = vld [vmem:[#allocation8 + $0x3f8] sm:$0xff]
    %v4028 = vld [vmem:[%s4] sm:$0xf]
    %v4030 = vlaneseq
    %v4031 = vshrl.u32 %v4030, 7
    %v4032 = vsub.s32 0, %v4031
    %v4033 = vrot.slane %v4028, %v4032
    %v4034 = vlaneseq
    %v4035 = vshrl.u32 %v4034, 7
    %v4036 = vsub.s32 1, %v4035
    %v4037 = vrot.slane %v4028, %v4036
    %v4038 = vlaneseq
    %v4039 = vshrl.u32 %v4038, 7
    %v4040 = vsub.s32 2, %v4039
    %v4041 = vrot.slane %v4028, %v4040
    %v4042 = vlaneseq
    %v4043 = vshrl.u32 %v4042, 7
    %v4044 = vsub.s32 3, %v4043
    %v4045 = vrot.slane %v4028, %v4044
    %v4178 = vunpack.c.l.b16 %v3900
    %v4179 = vunpack.c.h.b16 %v3900
    %v4180 = vunpack.c.l.b16 %v3901
    %v4181 = vunpack.c.h.b16 %v3901
    %v4182 = vunpack.c.l.b16 %v3902
    %v4183 = vunpack.c.h.b16 %v3902
    %v4184 = vunpack.c.l.b16 %v3903
    %v4185 = vunpack.c.h.b16 %v3903
    %v4186 = vunpack.c.l.b16 %v3904
    %v4187 = vunpack.c.h.b16 %v3904
    %v4188 = vunpack.c.l.b16 %v3905
    %v4189 = vunpack.c.h.b16 %v3905
    %v4190 = vunpack.c.l.b16 %v3906
    %v4191 = vunpack.c.h.b16 %v3906
    %v4192 = vunpack.c.l.b16 %v3907
    %v4193 = vunpack.c.h.b16 %v3907
    %v4194 = vunpack.c.l.b16 %v3908
    %v4195 = vunpack.c.h.b16 %v3908
    %v4196 = vunpack.c.l.b16 %v3909
    %v4197 = vunpack.c.h.b16 %v3909
    %v4198 = vunpack.c.l.b16 %v3910
    %v4199 = vunpack.c.h.b16 %v3910
    %v4200 = vunpack.c.l.b16 %v3911
    %v4201 = vunpack.c.h.b16 %v3911
    %v4202 = vunpack.c.l.b16 %v3912
    %v4203 = vunpack.c.h.b16 %v3912
    %v4204 = vunpack.c.l.b16 %v3913
    %v4205 = vunpack.c.h.b16 %v3913
    %v4206 = vunpack.c.l.b16 %v3914
    %v4207 = vunpack.c.h.b16 %v3914
    %v4208 = vunpack.c.l.b16 %v3915
    %v4209 = vunpack.c.h.b16 %v3915
    %v4210 = vunpack.c.l.b16 %v3916
    %v4211 = vunpack.c.h.b16 %v3916
    %v4212 = vunpack.c.l.b16 %v3917
    %v4213 = vunpack.c.h.b16 %v3917
    %v4214 = vunpack.c.l.b16 %v3918
    %v4215 = vunpack.c.h.b16 %v3918
    %v4216 = vunpack.c.l.b16 %v3919
    %v4217 = vunpack.c.h.b16 %v3919
    %v4218 = vunpack.c.l.b16 %v3920
    %v4219 = vunpack.c.h.b16 %v3920
    %v4220 = vunpack.c.l.b16 %v3921
    %v4221 = vunpack.c.h.b16 %v3921
    %v4222 = vunpack.c.l.b16 %v3922
    %v4223 = vunpack.c.h.b16 %v3922
    %v4224 = vunpack.c.l.b16 %v3923
    %v4225 = vunpack.c.h.b16 %v3923
    %v4226 = vunpack.c.l.b16 %v3924
    %v4227 = vunpack.c.h.b16 %v3924
    %v4228 = vunpack.c.l.b16 %v3925
    %v4229 = vunpack.c.h.b16 %v3925
    %v4230 = vunpack.c.l.b16 %v3926
    %v4231 = vunpack.c.h.b16 %v3926
    %v4232 = vunpack.c.l.b16 %v3927
    %v4233 = vunpack.c.h.b16 %v3927
    %v4234 = vunpack.c.l.b16 %v3928
    %v4235 = vunpack.c.h.b16 %v3928
    %v4236 = vunpack.c.l.b16 %v3929
    %v4237 = vunpack.c.h.b16 %v3929
    %v4238 = vunpack.c.l.b16 %v3930
    %v4239 = vunpack.c.h.b16 %v3930
    %v4240 = vunpack.c.l.b16 %v3931
    %v4241 = vunpack.c.h.b16 %v3931
    %v4242 = vunpack.c.l.b16 %v3932
    %v4243 = vunpack.c.h.b16 %v3932
    %v4244 = vunpack.c.l.b16 %v3933
    %v4245 = vunpack.c.h.b16 %v3933
    %v4246 = vunpack.c.l.b16 %v3934
    %v4247 = vunpack.c.h.b16 %v3934
    %v4248 = vunpack.c.l.b16 %v3935
    %v4249 = vunpack.c.h.b16 %v3935
    %v4250 = vunpack.c.l.b16 %v3936
    %v4251 = vunpack.c.h.b16 %v3936
    %v4252 = vunpack.c.l.b16 %v3937
    %v4253 = vunpack.c.h.b16 %v3937
    %v4254 = vunpack.c.l.b16 %v3938
    %v4255 = vunpack.c.h.b16 %v3938
    %v4256 = vunpack.c.l.b16 %v3939
    %v4257 = vunpack.c.h.b16 %v3939
    %v4258 = vunpack.c.l.b16 %v3940
    %v4259 = vunpack.c.h.b16 %v3940
    %v4260 = vunpack.c.l.b16 %v3941
    %v4261 = vunpack.c.h.b16 %v3941
    %v4262 = vunpack.c.l.b16 %v3942
    %v4263 = vunpack.c.h.b16 %v3942
    %v4264 = vunpack.c.l.b16 %v3943
    %v4265 = vunpack.c.h.b16 %v3943
    %v4266 = vunpack.c.l.b16 %v3944
    %v4267 = vunpack.c.h.b16 %v3944
    %v4268 = vunpack.c.l.b16 %v3945
    %v4269 = vunpack.c.h.b16 %v3945
    %v4270 = vunpack.c.l.b16 %v3946
    %v4271 = vunpack.c.h.b16 %v3946
    %v4272 = vunpack.c.l.b16 %v3947
    %v4273 = vunpack.c.h.b16 %v3947
    %v4274 = vunpack.c.l.b16 %v3948
    %v4275 = vunpack.c.h.b16 %v3948
    %v4276 = vunpack.c.l.b16 %v3949
    %v4277 = vunpack.c.h.b16 %v3949
    %v4278 = vunpack.c.l.b16 %v3950
    %v4279 = vunpack.c.h.b16 %v3950
    %v4280 = vunpack.c.l.b16 %v3951
    %v4281 = vunpack.c.h.b16 %v3951
    %v4282 = vunpack.c.l.b16 %v3952
    %v4283 = vunpack.c.h.b16 %v3952
    %v4284 = vunpack.c.l.b16 %v3953
    %v4285 = vunpack.c.h.b16 %v3953
    %v4286 = vunpack.c.l.b16 %v3954
    %v4287 = vunpack.c.h.b16 %v3954
    %v4288 = vunpack.c.l.b16 %v3955
    %v4289 = vunpack.c.h.b16 %v3955
    %v4290 = vunpack.c.l.b16 %v3956
    %v4291 = vunpack.c.h.b16 %v3956
    %v4292 = vunpack.c.l.b16 %v3957
    %v4293 = vunpack.c.h.b16 %v3957
    %v4294 = vunpack.c.l.b16 %v3958
    %v4295 = vunpack.c.h.b16 %v3958
    %v4296 = vunpack.c.l.b16 %v3959
    %v4297 = vunpack.c.h.b16 %v3959
    %v4298 = vunpack.c.l.b16 %v3960
    %v4299 = vunpack.c.h.b16 %v3960
    %v4300 = vunpack.c.l.b16 %v3961
    %v4301 = vunpack.c.h.b16 %v3961
    %v4302 = vunpack.c.l.b16 %v3962
    %v4303 = vunpack.c.h.b16 %v3962
    %v4304 = vunpack.c.l.b16 %v3963
    %v4305 = vunpack.c.h.b16 %v3963
    %v4306 = vunpack.c.l.b16 %v3964
    %v4307 = vunpack.c.h.b16 %v3964
    %v4308 = vunpack.c.l.b16 %v3965
    %v4309 = vunpack.c.h.b16 %v3965
    %v4310 = vunpack.c.l.b16 %v3966
    %v4311 = vunpack.c.h.b16 %v3966
    %v4312 = vunpack.c.l.b16 %v3967
    %v4313 = vunpack.c.h.b16 %v3967
    %v4314 = vunpack.c.l.b16 %v3968
    %v4315 = vunpack.c.h.b16 %v3968
    %v4316 = vunpack.c.l.b16 %v3969
    %v4317 = vunpack.c.h.b16 %v3969
    %v4318 = vunpack.c.l.b16 %v3970
    %v4319 = vunpack.c.h.b16 %v3970
    %v4320 = vunpack.c.l.b16 %v3971
    %v4321 = vunpack.c.h.b16 %v3971
    %v4322 = vunpack.c.l.b16 %v3972
    %v4323 = vunpack.c.h.b16 %v3972
    %v4324 = vunpack.c.l.b16 %v3973
    %v4325 = vunpack.c.h.b16 %v3973
    %v4326 = vunpack.c.l.b16 %v3974
    %v4327 = vunpack.c.h.b16 %v3974
    %v4328 = vunpack.c.l.b16 %v3975
    %v4329 = vunpack.c.h.b16 %v3975
    %v4330 = vunpack.c.l.b16 %v3976
    %v4331 = vunpack.c.h.b16 %v3976
    %v4332 = vunpack.c.l.b16 %v3977
    %v4333 = vunpack.c.h.b16 %v3977
    %v4334 = vunpack.c.l.b16 %v3978
    %v4335 = vunpack.c.h.b16 %v3978
    %v4336 = vunpack.c.l.b16 %v3979
    %v4337 = vunpack.c.h.b16 %v3979
    %v4338 = vunpack.c.l.b16 %v3980
    %v4339 = vunpack.c.h.b16 %v3980
    %v4340 = vunpack.c.l.b16 %v3981
    %v4341 = vunpack.c.h.b16 %v3981
    %v4342 = vunpack.c.l.b16 %v3982
    %v4343 = vunpack.c.h.b16 %v3982
    %v4344 = vunpack.c.l.b16 %v3983
    %v4345 = vunpack.c.h.b16 %v3983
    %v4346 = vunpack.c.l.b16 %v3984
    %v4347 = vunpack.c.h.b16 %v3984
    %v4348 = vunpack.c.l.b16 %v3985
    %v4349 = vunpack.c.h.b16 %v3985
    %v4350 = vunpack.c.l.b16 %v3986
    %v4351 = vunpack.c.h.b16 %v3986
    %v4352 = vunpack.c.l.b16 %v3987
    %v4353 = vunpack.c.h.b16 %v3987
    %v4354 = vunpack.c.l.b16 %v3988
    %v4355 = vunpack.c.h.b16 %v3988
    %v4356 = vunpack.c.l.b16 %v3989
    %v4357 = vunpack.c.h.b16 %v3989
    %v4358 = vunpack.c.l.b16 %v3990
    %v4359 = vunpack.c.h.b16 %v3990
    %v4360 = vunpack.c.l.b16 %v3991
    %v4361 = vunpack.c.h.b16 %v3991
    %v4362 = vunpack.c.l.b16 %v3992
    %v4363 = vunpack.c.h.b16 %v3992
    %v4364 = vunpack.c.l.b16 %v3993
    %v4365 = vunpack.c.h.b16 %v3993
    %v4366 = vunpack.c.l.b16 %v3994
    %v4367 = vunpack.c.h.b16 %v3994
    %v4368 = vunpack.c.l.b16 %v3995
    %v4369 = vunpack.c.h.b16 %v3995
    %v4370 = vunpack.c.l.b16 %v3996
    %v4371 = vunpack.c.h.b16 %v3996
    %v4372 = vunpack.c.l.b16 %v3997
    %v4373 = vunpack.c.h.b16 %v3997
    %v4374 = vunpack.c.l.b16 %v3998
    %v4375 = vunpack.c.h.b16 %v3998
    %v4376 = vunpack.c.l.b16 %v3999
    %v4377 = vunpack.c.h.b16 %v3999
    %v4378 = vunpack.c.l.b16 %v4000
    %v4379 = vunpack.c.h.b16 %v4000
    %v4380 = vunpack.c.l.b16 %v4001
    %v4381 = vunpack.c.h.b16 %v4001
    %v4382 = vunpack.c.l.b16 %v4002
    %v4383 = vunpack.c.h.b16 %v4002
    %v4384 = vunpack.c.l.b16 %v4003
    %v4385 = vunpack.c.h.b16 %v4003
    %v4386 = vunpack.c.l.b16 %v4004
    %v4387 = vunpack.c.h.b16 %v4004
    %v4388 = vunpack.c.l.b16 %v4005
    %v4389 = vunpack.c.h.b16 %v4005
    %v4390 = vunpack.c.l.b16 %v4006
    %v4391 = vunpack.c.h.b16 %v4006
    %v4392 = vunpack.c.l.b16 %v4007
    %v4393 = vunpack.c.h.b16 %v4007
    %v4394 = vunpack.c.l.b16 %v4008
    %v4395 = vunpack.c.h.b16 %v4008
    %v4396 = vunpack.c.l.b16 %v4009
    %v4397 = vunpack.c.h.b16 %v4009
    %v4398 = vunpack.c.l.b16 %v4010
    %v4399 = vunpack.c.h.b16 %v4010
    %v4400 = vunpack.c.l.b16 %v4011
    %v4401 = vunpack.c.h.b16 %v4011
    %v4402 = vunpack.c.l.b16 %v4012
    %v4403 = vunpack.c.h.b16 %v4012
    %v4404 = vunpack.c.l.b16 %v4013
    %v4405 = vunpack.c.h.b16 %v4013
    %v4406 = vunpack.c.l.b16 %v4014
    %v4407 = vunpack.c.h.b16 %v4014
    %v4408 = vunpack.c.l.b16 %v4015
    %v4409 = vunpack.c.h.b16 %v4015
    %v4410 = vunpack.c.l.b16 %v4016
    %v4411 = vunpack.c.h.b16 %v4016
    %v4412 = vunpack.c.l.b16 %v4017
    %v4413 = vunpack.c.h.b16 %v4017
    %v4414 = vunpack.c.l.b16 %v4018
    %v4415 = vunpack.c.h.b16 %v4018
    %v4416 = vunpack.c.l.b16 %v4019
    %v4417 = vunpack.c.h.b16 %v4019
    %v4418 = vunpack.c.l.b16 %v4020
    %v4419 = vunpack.c.h.b16 %v4020
    %v4420 = vunpack.c.l.b16 %v4021
    %v4421 = vunpack.c.h.b16 %v4021
    %v4422 = vunpack.c.l.b16 %v4022
    %v4423 = vunpack.c.h.b16 %v4022
    %v4424 = vunpack.c.l.b16 %v4023
    %v4425 = vunpack.c.h.b16 %v4023
    %v4426 = vunpack.c.l.b16 %v4024
    %v4427 = vunpack.c.h.b16 %v4024
    %v4428 = vunpack.c.l.b16 %v4025
    %v4429 = vunpack.c.h.b16 %v4025
    %v4430 = vunpack.c.l.b16 %v4026
    %v4431 = vunpack.c.h.b16 %v4026
    %v4432 = vunpack.c.l.b16 %v4027
    %v4433 = vunpack.c.h.b16 %v4027
    %v4434 = vpack.c.b16 %v4182, %v4178
    %v4435 = vpack.c.b16 %v4183, %v4179
    %v4436 = vpack.c.b16 %v4184, %v4180
    %v4437 = vpack.c.b16 %v4185, %v4181
    %v4438 = vpack.c.b16 %v4190, %v4186
    %v4439 = vpack.c.b16 %v4191, %v4187
    %v4440 = vpack.c.b16 %v4192, %v4188
    %v4441 = vpack.c.b16 %v4193, %v4189
    %v4442 = vpack.c.b16 %v4198, %v4194
    %v4443 = vpack.c.b16 %v4199, %v4195
    %v4444 = vpack.c.b16 %v4200, %v4196
    %v4445 = vpack.c.b16 %v4201, %v4197
    %v4446 = vpack.c.b16 %v4206, %v4202
    %v4447 = vpack.c.b16 %v4207, %v4203
    %v4448 = vpack.c.b16 %v4208, %v4204
    %v4449 = vpack.c.b16 %v4209, %v4205
    %v4450 = vpack.c.b16 %v4214, %v4210
    %v4451 = vpack.c.b16 %v4215, %v4211
    %v4452 = vpack.c.b16 %v4216, %v4212
    %v4453 = vpack.c.b16 %v4217, %v4213
    %v4454 = vpack.c.b16 %v4222, %v4218
    %v4455 = vpack.c.b16 %v4223, %v4219
    %v4456 = vpack.c.b16 %v4224, %v4220
    %v4457 = vpack.c.b16 %v4225, %v4221
    %v4458 = vpack.c.b16 %v4230, %v4226
    %v4459 = vpack.c.b16 %v4231, %v4227
    %v4460 = vpack.c.b16 %v4232, %v4228
    %v4461 = vpack.c.b16 %v4233, %v4229
    %v4462 = vpack.c.b16 %v4238, %v4234
    %v4463 = vpack.c.b16 %v4239, %v4235
    %v4464 = vpack.c.b16 %v4240, %v4236
    %v4465 = vpack.c.b16 %v4241, %v4237
    %v4466 = vpack.c.b16 %v4246, %v4242
    %v4467 = vpack.c.b16 %v4247, %v4243
    %v4468 = vpack.c.b16 %v4248, %v4244
    %v4469 = vpack.c.b16 %v4249, %v4245
    %v4470 = vpack.c.b16 %v4254, %v4250
    %v4471 = vpack.c.b16 %v4255, %v4251
    %v4472 = vpack.c.b16 %v4256, %v4252
    %v4473 = vpack.c.b16 %v4257, %v4253
    %v4474 = vpack.c.b16 %v4262, %v4258
    %v4475 = vpack.c.b16 %v4263, %v4259
    %v4476 = vpack.c.b16 %v4264, %v4260
    %v4477 = vpack.c.b16 %v4265, %v4261
    %v4478 = vpack.c.b16 %v4270, %v4266
    %v4479 = vpack.c.b16 %v4271, %v4267
    %v4480 = vpack.c.b16 %v4272, %v4268
    %v4481 = vpack.c.b16 %v4273, %v4269
    %v4482 = vpack.c.b16 %v4278, %v4274
    %v4483 = vpack.c.b16 %v4279, %v4275
    %v4484 = vpack.c.b16 %v4280, %v4276
    %v4485 = vpack.c.b16 %v4281, %v4277
    %v4486 = vpack.c.b16 %v4286, %v4282
    %v4487 = vpack.c.b16 %v4287, %v4283
    %v4488 = vpack.c.b16 %v4288, %v4284
    %v4489 = vpack.c.b16 %v4289, %v4285
    %v4490 = vpack.c.b16 %v4294, %v4290
    %v4491 = vpack.c.b16 %v4295, %v4291
    %v4492 = vpack.c.b16 %v4296, %v4292
    %v4493 = vpack.c.b16 %v4297, %v4293
    %v4494 = vpack.c.b16 %v4302, %v4298
    %v4495 = vpack.c.b16 %v4303, %v4299
    %v4496 = vpack.c.b16 %v4304, %v4300
    %v4497 = vpack.c.b16 %v4305, %v4301
    %v4498 = vpack.c.b16 %v4310, %v4306
    %v4499 = vpack.c.b16 %v4311, %v4307
    %v4500 = vpack.c.b16 %v4312, %v4308
    %v4501 = vpack.c.b16 %v4313, %v4309
    %v4502 = vpack.c.b16 %v4318, %v4314
    %v4503 = vpack.c.b16 %v4319, %v4315
    %v4504 = vpack.c.b16 %v4320, %v4316
    %v4505 = vpack.c.b16 %v4321, %v4317
    %v4506 = vpack.c.b16 %v4326, %v4322
    %v4507 = vpack.c.b16 %v4327, %v4323
    %v4508 = vpack.c.b16 %v4328, %v4324
    %v4509 = vpack.c.b16 %v4329, %v4325
    %v4510 = vpack.c.b16 %v4334, %v4330
    %v4511 = vpack.c.b16 %v4335, %v4331
    %v4512 = vpack.c.b16 %v4336, %v4332
    %v4513 = vpack.c.b16 %v4337, %v4333
    %v4514 = vpack.c.b16 %v4342, %v4338
    %v4515 = vpack.c.b16 %v4343, %v4339
    %v4516 = vpack.c.b16 %v4344, %v4340
    %v4517 = vpack.c.b16 %v4345, %v4341
    %v4518 = vpack.c.b16 %v4350, %v4346
    %v4519 = vpack.c.b16 %v4351, %v4347
    %v4520 = vpack.c.b16 %v4352, %v4348
    %v4521 = vpack.c.b16 %v4353, %v4349
    %v4522 = vpack.c.b16 %v4358, %v4354
    %v4523 = vpack.c.b16 %v4359, %v4355
    %v4524 = vpack.c.b16 %v4360, %v4356
    %v4525 = vpack.c.b16 %v4361, %v4357
    %v4526 = vpack.c.b16 %v4366, %v4362
    %v4527 = vpack.c.b16 %v4367, %v4363
    %v4528 = vpack.c.b16 %v4368, %v4364
    %v4529 = vpack.c.b16 %v4369, %v4365
    %v4530 = vpack.c.b16 %v4374, %v4370
    %v4531 = vpack.c.b16 %v4375, %v4371
    %v4532 = vpack.c.b16 %v4376, %v4372
    %v4533 = vpack.c.b16 %v4377, %v4373
    %v4534 = vpack.c.b16 %v4382, %v4378
    %v4535 = vpack.c.b16 %v4383, %v4379
    %v4536 = vpack.c.b16 %v4384, %v4380
    %v4537 = vpack.c.b16 %v4385, %v4381
    %v4538 = vpack.c.b16 %v4390, %v4386
    %v4539 = vpack.c.b16 %v4391, %v4387
    %v4540 = vpack.c.b16 %v4392, %v4388
    %v4541 = vpack.c.b16 %v4393, %v4389
    %v4542 = vpack.c.b16 %v4398, %v4394
    %v4543 = vpack.c.b16 %v4399, %v4395
    %v4544 = vpack.c.b16 %v4400, %v4396
    %v4545 = vpack.c.b16 %v4401, %v4397
    %v4546 = vpack.c.b16 %v4406, %v4402
    %v4547 = vpack.c.b16 %v4407, %v4403
    %v4548 = vpack.c.b16 %v4408, %v4404
    %v4549 = vpack.c.b16 %v4409, %v4405
    %v4550 = vpack.c.b16 %v4414, %v4410
    %v4551 = vpack.c.b16 %v4415, %v4411
    %v4552 = vpack.c.b16 %v4416, %v4412
    %v4553 = vpack.c.b16 %v4417, %v4413
    %v4554 = vpack.c.b16 %v4422, %v4418
    %v4555 = vpack.c.b16 %v4423, %v4419
    %v4556 = vpack.c.b16 %v4424, %v4420
    %v4557 = vpack.c.b16 %v4425, %v4421
    %v4558 = vpack.c.b16 %v4430, %v4426
    %v4559 = vpack.c.b16 %v4431, %v4427
    %v4560 = vpack.c.b16 %v4432, %v4428
    %v4561 = vpack.c.b16 %v4433, %v4429
    %4690 = vmatprep.subr.bf16.mxu0 %v4463
    %4691 = vmatpush1.bf16.msra.mxu0 %v4462
    %4692 = vmatprep.subr.bf16.mxu0 %v4459
    %4693 = vmatpush1.bf16.msra.mxu0 %v4458
    %4694 = vmatprep.subr.bf16.mxu0 %v4455
    %4695 = vmatpush1.bf16.msra.mxu0 %v4454
    %4696 = vmatprep.subr.bf16.mxu0 %v4451
    %4697 = vmatpush1.bf16.msra.mxu0 %v4450
    %4698 = vmatprep.subr.bf16.mxu0 %v4447
    %4699 = vmatpush1.bf16.msra.mxu0 %v4446
    %4700 = vmatprep.subr.bf16.mxu0 %v4443
    %4701 = vmatpush1.bf16.msra.mxu0 %v4442
    %4702 = vmatprep.subr.bf16.mxu0 %v4439
    %4703 = vmatpush1.bf16.msra.mxu0 %v4438
    %4704 = vmatprep.subr.bf16.mxu0 %v4435
    %4705 = vmatpush1.bf16.msra.mxu0 %v4434
    %4706 = vmatprep.subr.bf16.mxu0 %v4495
    %4707 = vmatpush2.bf16.msra.mxu0 %v4494
    %4708 = vmatprep.subr.bf16.mxu0 %v4491
    %4709 = vmatpush2.bf16.msra.mxu0 %v4490
    %4710 = vmatprep.subr.bf16.mxu0 %v4487
    %4711 = vmatpush2.bf16.msra.mxu0 %v4486
    %4712 = vmatprep.subr.bf16.mxu0 %v4483
    %4713 = vmatpush2.bf16.msra.mxu0 %v4482
    %4714 = vmatprep.subr.bf16.mxu0 %v4479
    %4715 = vmatpush2.bf16.msra.mxu0 %v4478
    %4716 = vmatprep.subr.bf16.mxu0 %v4475
    %4717 = vmatpush2.bf16.msra.mxu0 %v4474
    %4718 = vmatprep.subr.bf16.mxu0 %v4471
    %4719 = vmatpush2.bf16.msra.mxu0 %v4470
    %4720 = vmatprep.subr.bf16.mxu0 %v4467
    %4721 = vmatpush2.bf16.msra.mxu0 %v4466
    %4722 = vmatprep.mubr.bf16.mxu0 %v3837
    %4723 = vmatmul.mubr.bf16.gmra.mxu0 %v3836
    %v4724 = vpop.f32.mrf.mxu0
    %v4725 = vadd.f32 %v4033, %v4724
    %v4726 = vpop.f32.mrf.mxu0
    %v4727 = vadd.f32 %v4037, %v4726
    %v4728 = vpop.f32.mrf.mxu0
    %v4729 = vadd.f32 %v4033, %v4728
    %v4730 = vpop.f32.mrf.mxu0
    %v4731 = vadd.f32 %v4037, %v4730
    %4732 = vmatprep.mubr.bf16.mxu0 %v3841
    %4733 = vmatmul.mubr.bf16.gmra.mxu0 %v3840
    %v4734 = vpop.f32.mrf.mxu0
    %v4735 = vadd.f32 %v4033, %v4734
    %v4736 = vpop.f32.mrf.mxu0
    %v4737 = vadd.f32 %v4037, %v4736
    %v4738 = vpop.f32.mrf.mxu0
    %v4739 = vadd.f32 %v4033, %v4738
    %v4740 = vpop.f32.mrf.mxu0
    %v4741 = vadd.f32 %v4037, %v4740
    %4742 = vmatprep.mubr.bf16.mxu0 %v3845
    %4743 = vmatmul.mubr.bf16.gmra.mxu0 %v3844
    %v4744 = vpop.f32.mrf.mxu0
    %v4745 = vadd.f32 %v4033, %v4744
    %v4746 = vpop.f32.mrf.mxu0
    %v4747 = vadd.f32 %v4037, %v4746
    %v4748 = vpop.f32.mrf.mxu0
    %v4749 = vadd.f32 %v4033, %v4748
    %v4750 = vpop.f32.mrf.mxu0
    %v4751 = vadd.f32 %v4037, %v4750
    %4752 = vmatprep.mubr.bf16.mxu0 %v3849
    %4753 = vmatmul.mubr.bf16.gmra.mxu0 %v3848
    %v4754 = vpop.f32.mrf.mxu0
    %v4755 = vadd.f32 %v4033, %v4754
    %v4756 = vpop.f32.mrf.mxu0
    %v4757 = vadd.f32 %v4037, %v4756
    %v4758 = vpop.f32.mrf.mxu0
    %v4759 = vadd.f32 %v4033, %v4758
    %v4760 = vpop.f32.mrf.mxu0
    %v4761 = vadd.f32 %v4037, %v4760
    %4762 = vmatprep.mubr.bf16.mxu0 %v3853
    %4763 = vmatmul.mubr.bf16.gmra.mxu0 %v3852
    %v4764 = vpop.f32.mrf.mxu0
    %v4765 = vadd.f32 %v4033, %v4764
    %v4766 = vpop.f32.mrf.mxu0
    %v4767 = vadd.f32 %v4037, %v4766
    %v4768 = vpop.f32.mrf.mxu0
    %v4769 = vadd.f32 %v4033, %v4768
    %v4770 = vpop.f32.mrf.mxu0
    %v4771 = vadd.f32 %v4037, %v4770
    %4772 = vmatprep.mubr.bf16.mxu0 %v3857
    %4773 = vmatmul.mubr.bf16.gmra.mxu0 %v3856
    %v4774 = vpop.f32.mrf.mxu0
    %v4775 = vadd.f32 %v4033, %v4774
    %v4776 = vpop.f32.mrf.mxu0
    %v4777 = vadd.f32 %v4037, %v4776
    %v4778 = vpop.f32.mrf.mxu0
    %v4779 = vadd.f32 %v4033, %v4778
    %v4780 = vpop.f32.mrf.mxu0
    %v4781 = vadd.f32 %v4037, %v4780
    %4782 = vmatprep.mubr.bf16.mxu0 %v3861
    %4783 = vmatmul.mubr.bf16.gmra.mxu0 %v3860
    %v4784 = vpop.f32.mrf.mxu0
    %v4785 = vadd.f32 %v4033, %v4784
    %v4786 = vpop.f32.mrf.mxu0
    %v4787 = vadd.f32 %v4037, %v4786
    %v4788 = vpop.f32.mrf.mxu0
    %v4789 = vadd.f32 %v4033, %v4788
    %v4790 = vpop.f32.mrf.mxu0
    %v4791 = vadd.f32 %v4037, %v4790
    %4792 = vmatprep.mubr.bf16.mxu0 %v3865
    %4793 = vmatmul.mubr.bf16.gmra.mxu0 %v3864
    %v4794 = vpop.f32.mrf.mxu0
    %v4795 = vadd.f32 %v4033, %v4794
    %v4796 = vpop.f32.mrf.mxu0
    %v4797 = vadd.f32 %v4037, %v4796
    %v4798 = vpop.f32.mrf.mxu0
    %v4799 = vadd.f32 %v4033, %v4798
    %v4800 = vpop.f32.mrf.mxu0
    %v4801 = vadd.f32 %v4037, %v4800
    %4802 = vmatprep.mubr.bf16.mxu0 %v3869
    %4803 = vmatmul.mubr.bf16.gmra.mxu0 %v3868
    %v4804 = vpop.f32.mrf.mxu0
    %v4805 = vadd.f32 %v4033, %v4804
    %v4806 = vpop.f32.mrf.mxu0
    %v4807 = vadd.f32 %v4037, %v4806
    %v4808 = vpop.f32.mrf.mxu0
    %v4809 = vadd.f32 %v4033, %v4808
    %v4810 = vpop.f32.mrf.mxu0
    %v4811 = vadd.f32 %v4037, %v4810
    %4812 = vmatprep.mubr.bf16.mxu0 %v3873
    %4813 = vmatmul.mubr.bf16.gmra.mxu0 %v3872
    %v4814 = vpop.f32.mrf.mxu0
    %v4815 = vadd.f32 %v4033, %v4814
    %v4816 = vpop.f32.mrf.mxu0
    %v4817 = vadd.f32 %v4037, %v4816
    %v4818 = vpop.f32.mrf.mxu0
    %v4819 = vadd.f32 %v4033, %v4818
    %v4820 = vpop.f32.mrf.mxu0
    %v4821 = vadd.f32 %v4037, %v4820
    %4822 = vmatprep.mubr.bf16.mxu0 %v3877
    %4823 = vmatmul.mubr.bf16.gmra.mxu0 %v3876
    %v4824 = vpop.f32.mrf.mxu0
    %v4825 = vadd.f32 %v4033, %v4824
    %v4826 = vpop.f32.mrf.mxu0
    %v4827 = vadd.f32 %v4037, %v4826
    %v4828 = vpop.f32.mrf.mxu0
    %v4829 = vadd.f32 %v4033, %v4828
    %v4830 = vpop.f32.mrf.mxu0
    %v4831 = vadd.f32 %v4037, %v4830
    %4832 = vmatprep.mubr.bf16.mxu0 %v3881
    %4833 = vmatmul.mubr.bf16.gmra.mxu0 %v3880
    %v4834 = vpop.f32.mrf.mxu0
    %v4835 = vadd.f32 %v4033, %v4834
    %v4836 = vpop.f32.mrf.mxu0
    %v4837 = vadd.f32 %v4037, %v4836
    %v4838 = vpop.f32.mrf.mxu0
    %v4839 = vadd.f32 %v4033, %v4838
    %v4840 = vpop.f32.mrf.mxu0
    %v4841 = vadd.f32 %v4037, %v4840
    %4842 = vmatprep.mubr.bf16.mxu0 %v3885
    %4843 = vmatmul.mubr.bf16.gmra.mxu0 %v3884
    %v4844 = vpop.f32.mrf.mxu0
    %v4845 = vadd.f32 %v4033, %v4844
    %v4846 = vpop.f32.mrf.mxu0
    %v4847 = vadd.f32 %v4037, %v4846
    %v4848 = vpop.f32.mrf.mxu0
    %v4849 = vadd.f32 %v4033, %v4848
    %v4850 = vpop.f32.mrf.mxu0
    %v4851 = vadd.f32 %v4037, %v4850
    %4852 = vmatprep.mubr.bf16.mxu0 %v3889
    %4853 = vmatmul.mubr.bf16.gmra.mxu0 %v3888
    %v4854 = vpop.f32.mrf.mxu0
    %v4855 = vadd.f32 %v4033, %v4854
    %v4856 = vpop.f32.mrf.mxu0
    %v4857 = vadd.f32 %v4037, %v4856
    %v4858 = vpop.f32.mrf.mxu0
    %v4859 = vadd.f32 %v4033, %v4858
    %v4860 = vpop.f32.mrf.mxu0
    %v4861 = vadd.f32 %v4037, %v4860
    %4862 = vmatprep.mubr.bf16.mxu0 %v3893
    %4863 = vmatmul.mubr.bf16.gmra.mxu0 %v3892
    %v4864 = vpop.f32.mrf.mxu0
    %v4865 = vadd.f32 %v4033, %v4864
    %v4866 = vpop.f32.mrf.mxu0
    %v4867 = vadd.f32 %v4037, %v4866
    %v4868 = vpop.f32.mrf.mxu0
    %v4869 = vadd.f32 %v4033, %v4868
    %v4870 = vpop.f32.mrf.mxu0
    %v4871 = vadd.f32 %v4037, %v4870
    %4872 = vmatprep.mubr.bf16.mxu0 %v3897
    %4873 = vmatmul.mubr.bf16.gmra.mxu0 %v3896
    %v4874 = vpop.f32.mrf.mxu0
    %v4875 = vadd.f32 %v4033, %v4874
    %v4876 = vpop.f32.mrf.mxu0
    %v4877 = vadd.f32 %v4037, %v4876
    %v4878 = vpop.f32.mrf.mxu0
    %v4879 = vadd.f32 %v4033, %v4878
    %v4880 = vpop.f32.mrf.mxu0
    %v4881 = vadd.f32 %v4037, %v4880
    %4882 = vdwg.mxu0
    %4883 = vmatprep.subr.bf16.mxu0 %v4527
    %4884 = vmatpush1.bf16.msra.mxu0 %v4526
    %4885 = vmatprep.subr.bf16.mxu0 %v4523
    %4886 = vmatpush1.bf16.msra.mxu0 %v4522
    %4887 = vmatprep.subr.bf16.mxu0 %v4519
    %4888 = vmatpush1.bf16.msra.mxu0 %v4518
    %4889 = vmatprep.subr.bf16.mxu0 %v4515
    %4890 = vmatpush1.bf16.msra.mxu0 %v4514
    %4891 = vmatprep.subr.bf16.mxu0 %v4511
    %4892 = vmatpush1.bf16.msra.mxu0 %v4510
    %4893 = vmatprep.subr.bf16.mxu0 %v4507
    %4894 = vmatpush1.bf16.msra.mxu0 %v4506
    %4895 = vmatprep.subr.bf16.mxu0 %v4503
    %4896 = vmatpush1.bf16.msra.mxu0 %v4502
    %4897 = vmatprep.subr.bf16.mxu0 %v4499
    %4898 = vmatpush1.bf16.msra.mxu0 %v4498
    %4899 = vmatprep.subr.bf16.mxu0 %v4559
    %4900 = vmatpush2.bf16.msra.mxu0 %v4558
    %4901 = vmatprep.subr.bf16.mxu0 %v4555
    %4902 = vmatpush2.bf16.msra.mxu0 %v4554
    %4903 = vmatprep.subr.bf16.mxu0 %v4551
    %4904 = vmatpush2.bf16.msra.mxu0 %v4550
    %4905 = vmatprep.subr.bf16.mxu0 %v4547
    %4906 = vmatpush2.bf16.msra.mxu0 %v4546
    %4907 = vmatprep.subr.bf16.mxu0 %v4543
    %4908 = vmatpush2.bf16.msra.mxu0 %v4542
    %4909 = vmatprep.subr.bf16.mxu0 %v4539
    %4910 = vmatpush2.bf16.msra.mxu0 %v4538
    %4911 = vmatprep.subr.bf16.mxu0 %v4535
    %4912 = vmatpush2.bf16.msra.mxu0 %v4534
    %4913 = vmatprep.subr.bf16.mxu0 %v4531
    %4914 = vmatpush2.bf16.msra.mxu0 %v4530
    %4915 = vmatprep.mubr.bf16.mxu0 %v3839
    %4916 = vmatmul.mubr.bf16.gmra.mxu0 %v3838
    %v4917 = vpop.f32.mrf.mxu0
    %v4918 = vadd.f32 %v4725, %v4917
    %v4919 = vpop.f32.mrf.mxu0
    %v4920 = vadd.f32 %v4727, %v4919
    %v4921 = vpop.f32.mrf.mxu0
    %v4922 = vadd.f32 %v4729, %v4921
    %v4923 = vpop.f32.mrf.mxu0
    %v4924 = vadd.f32 %v4731, %v4923
    %4925 = vmatprep.mubr.bf16.mxu0 %v3843
    %4926 = vmatmul.mubr.bf16.gmra.mxu0 %v3842
    %v4927 = vpop.f32.mrf.mxu0
    %v4928 = vadd.f32 %v4735, %v4927
    %v4929 = vpop.f32.mrf.mxu0
    %v4930 = vadd.f32 %v4737, %v4929
    %v4931 = vpop.f32.mrf.mxu0
    %v4932 = vadd.f32 %v4739, %v4931
    %v4933 = vpop.f32.mrf.mxu0
    %v4934 = vadd.f32 %v4741, %v4933
    %4935 = vmatprep.mubr.bf16.mxu0 %v3847
    %4936 = vmatmul.mubr.bf16.gmra.mxu0 %v3846
    %v4937 = vpop.f32.mrf.mxu0
    %v4938 = vadd.f32 %v4745, %v4937
    %v4939 = vpop.f32.mrf.mxu0
    %v4940 = vadd.f32 %v4747, %v4939
    %v4941 = vpop.f32.mrf.mxu0
    %v4942 = vadd.f32 %v4749, %v4941
    %v4943 = vpop.f32.mrf.mxu0
    %v4944 = vadd.f32 %v4751, %v4943
    %4945 = vmatprep.mubr.bf16.mxu0 %v3851
    %4946 = vmatmul.mubr.bf16.gmra.mxu0 %v3850
    %v4947 = vpop.f32.mrf.mxu0
    %v4948 = vadd.f32 %v4755, %v4947
    %v4949 = vpop.f32.mrf.mxu0
    %v4950 = vadd.f32 %v4757, %v4949
    %v4951 = vpop.f32.mrf.mxu0
    %v4952 = vadd.f32 %v4759, %v4951
    %v4953 = vpop.f32.mrf.mxu0
    %v4954 = vadd.f32 %v4761, %v4953
    %4955 = vmatprep.mubr.bf16.mxu0 %v3855
    %4956 = vmatmul.mubr.bf16.gmra.mxu0 %v3854
    %v4957 = vpop.f32.mrf.mxu0
    %v4958 = vadd.f32 %v4765, %v4957
    %v4959 = vpop.f32.mrf.mxu0
    %v4960 = vadd.f32 %v4767, %v4959
    %v4961 = vpop.f32.mrf.mxu0
    %v4962 = vadd.f32 %v4769, %v4961
    %v4963 = vpop.f32.mrf.mxu0
    %v4964 = vadd.f32 %v4771, %v4963
    %4965 = vmatprep.mubr.bf16.mxu0 %v3859
    %4966 = vmatmul.mubr.bf16.gmra.mxu0 %v3858
    %v4967 = vpop.f32.mrf.mxu0
    %v4968 = vadd.f32 %v4775, %v4967
    %v4969 = vpop.f32.mrf.mxu0
    %v4970 = vadd.f32 %v4777, %v4969
    %v4971 = vpop.f32.mrf.mxu0
    %v4972 = vadd.f32 %v4779, %v4971
    %v4973 = vpop.f32.mrf.mxu0
    %v4974 = vadd.f32 %v4781, %v4973
    %4975 = vmatprep.mubr.bf16.mxu0 %v3863
    %4976 = vmatmul.mubr.bf16.gmra.mxu0 %v3862
    %v4977 = vpop.f32.mrf.mxu0
    %v4978 = vadd.f32 %v4785, %v4977
    %v4979 = vpop.f32.mrf.mxu0
    %v4980 = vadd.f32 %v4787, %v4979
    %v4981 = vpop.f32.mrf.mxu0
    %v4982 = vadd.f32 %v4789, %v4981
    %v4983 = vpop.f32.mrf.mxu0
    %v4984 = vadd.f32 %v4791, %v4983
    %4985 = vmatprep.mubr.bf16.mxu0 %v3867
    %4986 = vmatmul.mubr.bf16.gmra.mxu0 %v3866
    %v4987 = vpop.f32.mrf.mxu0
    %v4988 = vadd.f32 %v4795, %v4987
    %v4989 = vpop.f32.mrf.mxu0
    %v4990 = vadd.f32 %v4797, %v4989
    %v4991 = vpop.f32.mrf.mxu0
    %v4992 = vadd.f32 %v4799, %v4991
    %v4993 = vpop.f32.mrf.mxu0
    %v4994 = vadd.f32 %v4801, %v4993
    %4995 = vmatprep.mubr.bf16.mxu0 %v3871
    %4996 = vmatmul.mubr.bf16.gmra.mxu0 %v3870
    %v4997 = vpop.f32.mrf.mxu0
    %v4998 = vadd.f32 %v4805, %v4997
    %v4999 = vpop.f32.mrf.mxu0
    %v5000 = vadd.f32 %v4807, %v4999
    %v5001 = vpop.f32.mrf.mxu0
    %v5002 = vadd.f32 %v4809, %v5001
    %v5003 = vpop.f32.mrf.mxu0
    %v5004 = vadd.f32 %v4811, %v5003
    %5005 = vmatprep.mubr.bf16.mxu0 %v3875
    %5006 = vmatmul.mubr.bf16.gmra.mxu0 %v3874
    %v5007 = vpop.f32.mrf.mxu0
    %v5008 = vadd.f32 %v4815, %v5007
    %v5009 = vpop.f32.mrf.mxu0
    %v5010 = vadd.f32 %v4817, %v5009
    %v5011 = vpop.f32.mrf.mxu0
    %v5012 = vadd.f32 %v4819, %v5011
    %v5013 = vpop.f32.mrf.mxu0
    %v5014 = vadd.f32 %v4821, %v5013
    %5015 = vmatprep.mubr.bf16.mxu0 %v3879
    %5016 = vmatmul.mubr.bf16.gmra.mxu0 %v3878
    %v5017 = vpop.f32.mrf.mxu0
    %v5018 = vadd.f32 %v4825, %v5017
    %v5019 = vpop.f32.mrf.mxu0
    %v5020 = vadd.f32 %v4827, %v5019
    %v5021 = vpop.f32.mrf.mxu0
    %v5022 = vadd.f32 %v4829, %v5021
    %v5023 = vpop.f32.mrf.mxu0
    %v5024 = vadd.f32 %v4831, %v5023
    %5025 = vmatprep.mubr.bf16.mxu0 %v3883
    %5026 = vmatmul.mubr.bf16.gmra.mxu0 %v3882
    %v5027 = vpop.f32.mrf.mxu0
    %v5028 = vadd.f32 %v4835, %v5027
    %v5029 = vpop.f32.mrf.mxu0
    %v5030 = vadd.f32 %v4837, %v5029
    %v5031 = vpop.f32.mrf.mxu0
    %v5032 = vadd.f32 %v4839, %v5031
    %v5033 = vpop.f32.mrf.mxu0
    %v5034 = vadd.f32 %v4841, %v5033
    %5035 = vmatprep.mubr.bf16.mxu0 %v3887
    %5036 = vmatmul.mubr.bf16.gmra.mxu0 %v3886
    %v5037 = vpop.f32.mrf.mxu0
    %v5038 = vadd.f32 %v4845, %v5037
    %v5039 = vpop.f32.mrf.mxu0
    %v5040 = vadd.f32 %v4847, %v5039
    %v5041 = vpop.f32.mrf.mxu0
    %v5042 = vadd.f32 %v4849, %v5041
    %v5043 = vpop.f32.mrf.mxu0
    %v5044 = vadd.f32 %v4851, %v5043
    %5045 = vmatprep.mubr.bf16.mxu0 %v3891
    %5046 = vmatmul.mubr.bf16.gmra.mxu0 %v3890
    %v5047 = vpop.f32.mrf.mxu0
    %v5048 = vadd.f32 %v4855, %v5047
    %v5049 = vpop.f32.mrf.mxu0
    %v5050 = vadd.f32 %v4857, %v5049
    %v5051 = vpop.f32.mrf.mxu0
    %v5052 = vadd.f32 %v4859, %v5051
    %v5053 = vpop.f32.mrf.mxu0
    %v5054 = vadd.f32 %v4861, %v5053
    %5055 = vmatprep.mubr.bf16.mxu0 %v3895
    %5056 = vmatmul.mubr.bf16.gmra.mxu0 %v3894
    %v5057 = vpop.f32.mrf.mxu0
    %v5058 = vadd.f32 %v4865, %v5057
    %v5059 = vpop.f32.mrf.mxu0
    %v5060 = vadd.f32 %v4867, %v5059
    %v5061 = vpop.f32.mrf.mxu0
    %v5062 = vadd.f32 %v4869, %v5061
    %v5063 = vpop.f32.mrf.mxu0
    %v5064 = vadd.f32 %v4871, %v5063
    %5065 = vmatprep.mubr.bf16.mxu0 %v3899
    %5066 = vmatmul.mubr.bf16.gmra.mxu0 %v3898
    %v5067 = vpop.f32.mrf.mxu0
    %v5068 = vadd.f32 %v4875, %v5067
    %v5069 = vpop.f32.mrf.mxu0
    %v5070 = vadd.f32 %v4877, %v5069
    %v5071 = vpop.f32.mrf.mxu0
    %v5072 = vadd.f32 %v4879, %v5071
    %v5073 = vpop.f32.mrf.mxu0
    %v5074 = vadd.f32 %v4881, %v5073
    %5075 = vdwg.mxu0
    %5076 = vmatprep.subr.bf16.mxu0 %v4465
    %5077 = vmatpush1.bf16.msra.mxu0 %v4464
    %5078 = vmatprep.subr.bf16.mxu0 %v4461
    %5079 = vmatpush1.bf16.msra.mxu0 %v4460
    %5080 = vmatprep.subr.bf16.mxu0 %v4457
    %5081 = vmatpush1.bf16.msra.mxu0 %v4456
    %5082 = vmatprep.subr.bf16.mxu0 %v4453
    %5083 = vmatpush1.bf16.msra.mxu0 %v4452
    %5084 = vmatprep.subr.bf16.mxu0 %v4449
    %5085 = vmatpush1.bf16.msra.mxu0 %v4448
    %5086 = vmatprep.subr.bf16.mxu0 %v4445
    %5087 = vmatpush1.bf16.msra.mxu0 %v4444
    %5088 = vmatprep.subr.bf16.mxu0 %v4441
    %5089 = vmatpush1.bf16.msra.mxu0 %v4440
    %5090 = vmatprep.subr.bf16.mxu0 %v4437
    %5091 = vmatpush1.bf16.msra.mxu0 %v4436
    %5092 = vmatprep.subr.bf16.mxu0 %v4497
    %5093 = vmatpush2.bf16.msra.mxu0 %v4496
    %5094 = vmatprep.subr.bf16.mxu0 %v4493
    %5095 = vmatpush2.bf16.msra.mxu0 %v4492
    %5096 = vmatprep.subr.bf16.mxu0 %v4489
    %5097 = vmatpush2.bf16.msra.mxu0 %v4488
    %5098 = vmatprep.subr.bf16.mxu0 %v4485
    %5099 = vmatpush2.bf16.msra.mxu0 %v4484
    %5100 = vmatprep.subr.bf16.mxu0 %v4481
    %5101 = vmatpush2.bf16.msra.mxu0 %v4480
    %5102 = vmatprep.subr.bf16.mxu0 %v4477
    %5103 = vmatpush2.bf16.msra.mxu0 %v4476
    %5104 = vmatprep.subr.bf16.mxu0 %v4473
    %5105 = vmatpush2.bf16.msra.mxu0 %v4472
    %5106 = vmatprep.subr.bf16.mxu0 %v4469
    %5107 = vmatpush2.bf16.msra.mxu0 %v4468
    %5108 = vmatprep.mubr.bf16.mxu0 %v3837
    %5109 = vmatmul.mubr.bf16.gmra.mxu0 %v3836
    %v5110 = vpop.f32.mrf.mxu0
    %v5111 = vadd.f32 %v4041, %v5110
    %v5112 = vpop.f32.mrf.mxu0
    %v5113 = vadd.f32 %v4045, %v5112
    %v5114 = vpop.f32.mrf.mxu0
    %v5115 = vadd.f32 %v4041, %v5114
    %v5116 = vpop.f32.mrf.mxu0
    %v5117 = vadd.f32 %v4045, %v5116
    %5118 = vmatprep.mubr.bf16.mxu0 %v3841
    %5119 = vmatmul.mubr.bf16.gmra.mxu0 %v3840
    %v5120 = vpop.f32.mrf.mxu0
    %v5121 = vadd.f32 %v4041, %v5120
    %v5122 = vpop.f32.mrf.mxu0
    %v5123 = vadd.f32 %v4045, %v5122
    %v5124 = vpop.f32.mrf.mxu0
    %v5125 = vadd.f32 %v4041, %v5124
    %v5126 = vpop.f32.mrf.mxu0
    %v5127 = vadd.f32 %v4045, %v5126
    %5128 = vmatprep.mubr.bf16.mxu0 %v3845
    %5129 = vmatmul.mubr.bf16.gmra.mxu0 %v3844
    %v5130 = vpop.f32.mrf.mxu0
    %v5131 = vadd.f32 %v4041, %v5130
    %v5132 = vpop.f32.mrf.mxu0
    %v5133 = vadd.f32 %v4045, %v5132
    %v5134 = vpop.f32.mrf.mxu0
    %v5135 = vadd.f32 %v4041, %v5134
    %v5136 = vpop.f32.mrf.mxu0
    %v5137 = vadd.f32 %v4045, %v5136
    %5138 = vmatprep.mubr.bf16.mxu0 %v3849
    %5139 = vmatmul.mubr.bf16.gmra.mxu0 %v3848
    %v5140 = vpop.f32.mrf.mxu0
    %v5141 = vadd.f32 %v4041, %v5140
    %v5142 = vpop.f32.mrf.mxu0
    %v5143 = vadd.f32 %v4045, %v5142
    %v5144 = vpop.f32.mrf.mxu0
    %v5145 = vadd.f32 %v4041, %v5144
    %v5146 = vpop.f32.mrf.mxu0
    %v5147 = vadd.f32 %v4045, %v5146
    %5148 = vmatprep.mubr.bf16.mxu0 %v3853
    %5149 = vmatmul.mubr.bf16.gmra.mxu0 %v3852
    %v5150 = vpop.f32.mrf.mxu0
    %v5151 = vadd.f32 %v4041, %v5150
    %v5152 = vpop.f32.mrf.mxu0
    %v5153 = vadd.f32 %v4045, %v5152
    %v5154 = vpop.f32.mrf.mxu0
    %v5155 = vadd.f32 %v4041, %v5154
    %v5156 = vpop.f32.mrf.mxu0
    %v5157 = vadd.f32 %v4045, %v5156
    %5158 = vmatprep.mubr.bf16.mxu0 %v3857
    %5159 = vmatmul.mubr.bf16.gmra.mxu0 %v3856
    %v5160 = vpop.f32.mrf.mxu0
    %v5161 = vadd.f32 %v4041, %v5160
    %v5162 = vpop.f32.mrf.mxu0
    %v5163 = vadd.f32 %v4045, %v5162
    %v5164 = vpop.f32.mrf.mxu0
    %v5165 = vadd.f32 %v4041, %v5164
    %v5166 = vpop.f32.mrf.mxu0
    %v5167 = vadd.f32 %v4045, %v5166
    %5168 = vmatprep.mubr.bf16.mxu0 %v3861
    %5169 = vmatmul.mubr.bf16.gmra.mxu0 %v3860
    %v5170 = vpop.f32.mrf.mxu0
    %v5171 = vadd.f32 %v4041, %v5170
    %v5172 = vpop.f32.mrf.mxu0
    %v5173 = vadd.f32 %v4045, %v5172
    %v5174 = vpop.f32.mrf.mxu0
    %v5175 = vadd.f32 %v4041, %v5174
    %v5176 = vpop.f32.mrf.mxu0
    %v5177 = vadd.f32 %v4045, %v5176
    %5178 = vmatprep.mubr.bf16.mxu0 %v3865
    %5179 = vmatmul.mubr.bf16.gmra.mxu0 %v3864
    %v5180 = vpop.f32.mrf.mxu0
    %v5181 = vadd.f32 %v4041, %v5180
    %v5182 = vpop.f32.mrf.mxu0
    %v5183 = vadd.f32 %v4045, %v5182
    %v5184 = vpop.f32.mrf.mxu0
    %v5185 = vadd.f32 %v4041, %v5184
    %v5186 = vpop.f32.mrf.mxu0
    %v5187 = vadd.f32 %v4045, %v5186
    %5188 = vmatprep.mubr.bf16.mxu0 %v3869
    %5189 = vmatmul.mubr.bf16.gmra.mxu0 %v3868
    %v5190 = vpop.f32.mrf.mxu0
    %v5191 = vadd.f32 %v4041, %v5190
    %v5192 = vpop.f32.mrf.mxu0
    %v5193 = vadd.f32 %v4045, %v5192
    %v5194 = vpop.f32.mrf.mxu0
    %v5195 = vadd.f32 %v4041, %v5194
    %v5196 = vpop.f32.mrf.mxu0
    %v5197 = vadd.f32 %v4045, %v5196
    %5198 = vmatprep.mubr.bf16.mxu0 %v3873
    %5199 = vmatmul.mubr.bf16.gmra.mxu0 %v3872
    %v5200 = vpop.f32.mrf.mxu0
    %v5201 = vadd.f32 %v4041, %v5200
    %v5202 = vpop.f32.mrf.mxu0
    %v5203 = vadd.f32 %v4045, %v5202
    %v5204 = vpop.f32.mrf.mxu0
    %v5205 = vadd.f32 %v4041, %v5204
    %v5206 = vpop.f32.mrf.mxu0
    %v5207 = vadd.f32 %v4045, %v5206
    %5208 = vmatprep.mubr.bf16.mxu0 %v3877
    %5209 = vmatmul.mubr.bf16.gmra.mxu0 %v3876
    %v5210 = vpop.f32.mrf.mxu0
    %v5211 = vadd.f32 %v4041, %v5210
    %v5212 = vpop.f32.mrf.mxu0
    %v5213 = vadd.f32 %v4045, %v5212
    %v5214 = vpop.f32.mrf.mxu0
    %v5215 = vadd.f32 %v4041, %v5214
    %v5216 = vpop.f32.mrf.mxu0
    %v5217 = vadd.f32 %v4045, %v5216
    %5218 = vmatprep.mubr.bf16.mxu0 %v3881
    %5219 = vmatmul.mubr.bf16.gmra.mxu0 %v3880
    %v5220 = vpop.f32.mrf.mxu0
    %v5221 = vadd.f32 %v4041, %v5220
    %v5222 = vpop.f32.mrf.mxu0
    %v5223 = vadd.f32 %v4045, %v5222
    %v5224 = vpop.f32.mrf.mxu0
    %v5225 = vadd.f32 %v4041, %v5224
    %v5226 = vpop.f32.mrf.mxu0
    %v5227 = vadd.f32 %v4045, %v5226
    %5228 = vmatprep.mubr.bf16.mxu0 %v3885
    %5229 = vmatmul.mubr.bf16.gmra.mxu0 %v3884
    %v5230 = vpop.f32.mrf.mxu0
    %v5231 = vadd.f32 %v4041, %v5230
    %v5232 = vpop.f32.mrf.mxu0
    %v5233 = vadd.f32 %v4045, %v5232
    %v5234 = vpop.f32.mrf.mxu0
    %v5235 = vadd.f32 %v4041, %v5234
    %v5236 = vpop.f32.mrf.mxu0
    %v5237 = vadd.f32 %v4045, %v5236
    %5238 = vmatprep.mubr.bf16.mxu0 %v3889
    %5239 = vmatmul.mubr.bf16.gmra.mxu0 %v3888
    %v5240 = vpop.f32.mrf.mxu0
    %v5241 = vadd.f32 %v4041, %v5240
    %v5242 = vpop.f32.mrf.mxu0
    %v5243 = vadd.f32 %v4045, %v5242
    %v5244 = vpop.f32.mrf.mxu0
    %v5245 = vadd.f32 %v4041, %v5244
    %v5246 = vpop.f32.mrf.mxu0
    %v5247 = vadd.f32 %v4045, %v5246
    %5248 = vmatprep.mubr.bf16.mxu0 %v3893
    %5249 = vmatmul.mubr.bf16.gmra.mxu0 %v3892
    %v5250 = vpop.f32.mrf.mxu0
    %v5251 = vadd.f32 %v4041, %v5250
    %v5252 = vpop.f32.mrf.mxu0
    %v5253 = vadd.f32 %v4045, %v5252
    %v5254 = vpop.f32.mrf.mxu0
    %v5255 = vadd.f32 %v4041, %v5254
    %v5256 = vpop.f32.mrf.mxu0
    %v5257 = vadd.f32 %v4045, %v5256
    %5258 = vmatprep.mubr.bf16.mxu0 %v3897
    %5259 = vmatmul.mubr.bf16.gmra.mxu0 %v3896
    %v5260 = vpop.f32.mrf.mxu0
    %v5261 = vadd.f32 %v4041, %v5260
    %v5262 = vpop.f32.mrf.mxu0
    %v5263 = vadd.f32 %v4045, %v5262
    %v5264 = vpop.f32.mrf.mxu0
    %v5265 = vadd.f32 %v4041, %v5264
    %v5266 = vpop.f32.mrf.mxu0
    %v5267 = vadd.f32 %v4045, %v5266
    %5268 = vdwg.mxu0
    %5269 = vmatprep.subr.bf16.mxu0 %v4529
    %5270 = vmatpush1.bf16.msra.mxu0 %v4528
    %5271 = vmatprep.subr.bf16.mxu0 %v4525
    %5272 = vmatpush1.bf16.msra.mxu0 %v4524
    %5273 = vmatprep.subr.bf16.mxu0 %v4521
    %5274 = vmatpush1.bf16.msra.mxu0 %v4520
    %5275 = vmatprep.subr.bf16.mxu0 %v4517
    %5276 = vmatpush1.bf16.msra.mxu0 %v4516
    %5277 = vmatprep.subr.bf16.mxu0 %v4513
    %5278 = vmatpush1.bf16.msra.mxu0 %v4512
    %5279 = vmatprep.subr.bf16.mxu0 %v4509
    %5280 = vmatpush1.bf16.msra.mxu0 %v4508
    %5281 = vmatprep.subr.bf16.mxu0 %v4505
    %5282 = vmatpush1.bf16.msra.mxu0 %v4504
    %5283 = vmatprep.subr.bf16.mxu0 %v4501
    %5284 = vmatpush1.bf16.msra.mxu0 %v4500
    %5285 = vmatprep.subr.bf16.mxu0 %v4561
    %5286 = vmatpush2.bf16.msra.mxu0 %v4560
    %5287 = vmatprep.subr.bf16.mxu0 %v4557
    %5288 = vmatpush2.bf16.msra.mxu0 %v4556
    %5289 = vmatprep.subr.bf16.mxu0 %v4553
    %5290 = vmatpush2.bf16.msra.mxu0 %v4552
    %5291 = vmatprep.subr.bf16.mxu0 %v4549
    %5292 = vmatpush2.bf16.msra.mxu0 %v4548
    %5293 = vmatprep.subr.bf16.mxu0 %v4545
    %5294 = vmatpush2.bf16.msra.mxu0 %v4544
    %5295 = vmatprep.subr.bf16.mxu0 %v4541
    %5296 = vmatpush2.bf16.msra.mxu0 %v4540
    %5297 = vmatprep.subr.bf16.mxu0 %v4537
    %5298 = vmatpush2.bf16.msra.mxu0 %v4536
    %5299 = vmatprep.subr.bf16.mxu0 %v4533
    %5300 = vmatpush2.bf16.msra.mxu0 %v4532
    %5301 = vmatprep.mubr.bf16.mxu0 %v3839
    %5302 = vmatmul.mubr.bf16.gmra.mxu0 %v3838
    %v5303 = vpop.f32.mrf.mxu0
    %v5304 = vadd.f32 %v5111, %v5303
    %v5305 = vpop.f32.mrf.mxu0
    %v5306 = vadd.f32 %v5113, %v5305
    %v5307 = vpop.f32.mrf.mxu0
    %v5308 = vadd.f32 %v5115, %v5307
    %v5309 = vpop.f32.mrf.mxu0
    %v5310 = vadd.f32 %v5117, %v5309
    %5311 = vmatprep.mubr.bf16.mxu0 %v3843
    %5312 = vmatmul.mubr.bf16.gmra.mxu0 %v3842
    %v5313 = vpop.f32.mrf.mxu0
    %v5314 = vadd.f32 %v5121, %v5313
    %v5315 = vpop.f32.mrf.mxu0
    %v5316 = vadd.f32 %v5123, %v5315
    %v5317 = vpop.f32.mrf.mxu0
    %v5318 = vadd.f32 %v5125, %v5317
    %v5319 = vpop.f32.mrf.mxu0
    %v5320 = vadd.f32 %v5127, %v5319
    %5321 = vmatprep.mubr.bf16.mxu0 %v3847
    %5322 = vmatmul.mubr.bf16.gmra.mxu0 %v3846
    %v5323 = vpop.f32.mrf.mxu0
    %v5324 = vadd.f32 %v5131, %v5323
    %v5325 = vpop.f32.mrf.mxu0
    %v5326 = vadd.f32 %v5133, %v5325
    %v5327 = vpop.f32.mrf.mxu0
    %v5328 = vadd.f32 %v5135, %v5327
    %v5329 = vpop.f32.mrf.mxu0
    %v5330 = vadd.f32 %v5137, %v5329
    %5331 = vmatprep.mubr.bf16.mxu0 %v3851
    %5332 = vmatmul.mubr.bf16.gmra.mxu0 %v3850
    %v5333 = vpop.f32.mrf.mxu0
    %v5334 = vadd.f32 %v5141, %v5333
    %v5335 = vpop.f32.mrf.mxu0
    %v5336 = vadd.f32 %v5143, %v5335
    %v5337 = vpop.f32.mrf.mxu0
    %v5338 = vadd.f32 %v5145, %v5337
    %v5339 = vpop.f32.mrf.mxu0
    %v5340 = vadd.f32 %v5147, %v5339
    %5341 = vmatprep.mubr.bf16.mxu0 %v3855
    %5342 = vmatmul.mubr.bf16.gmra.mxu0 %v3854
    %v5343 = vpop.f32.mrf.mxu0
    %v5344 = vadd.f32 %v5151, %v5343
    %v5345 = vpop.f32.mrf.mxu0
    %v5346 = vadd.f32 %v5153, %v5345
    %v5347 = vpop.f32.mrf.mxu0
    %v5348 = vadd.f32 %v5155, %v5347
    %v5349 = vpop.f32.mrf.mxu0
    %v5350 = vadd.f32 %v5157, %v5349
    %5351 = vmatprep.mubr.bf16.mxu0 %v3859
    %5352 = vmatmul.mubr.bf16.gmra.mxu0 %v3858
    %v5353 = vpop.f32.mrf.mxu0
    %v5354 = vadd.f32 %v5161, %v5353
    %v5355 = vpop.f32.mrf.mxu0
    %v5356 = vadd.f32 %v5163, %v5355
    %v5357 = vpop.f32.mrf.mxu0
    %v5358 = vadd.f32 %v5165, %v5357
    %v5359 = vpop.f32.mrf.mxu0
    %v5360 = vadd.f32 %v5167, %v5359
    %5361 = vmatprep.mubr.bf16.mxu0 %v3863
    %5362 = vmatmul.mubr.bf16.gmra.mxu0 %v3862
    %v5363 = vpop.f32.mrf.mxu0
    %v5364 = vadd.f32 %v5171, %v5363
    %v5365 = vpop.f32.mrf.mxu0
    %v5366 = vadd.f32 %v5173, %v5365
    %v5367 = vpop.f32.mrf.mxu0
    %v5368 = vadd.f32 %v5175, %v5367
    %v5369 = vpop.f32.mrf.mxu0
    %v5370 = vadd.f32 %v5177, %v5369
    %5371 = vmatprep.mubr.bf16.mxu0 %v3867
    %5372 = vmatmul.mubr.bf16.gmra.mxu0 %v3866
    %v5373 = vpop.f32.mrf.mxu0
    %v5374 = vadd.f32 %v5181, %v5373
    %v5375 = vpop.f32.mrf.mxu0
    %v5376 = vadd.f32 %v5183, %v5375
    %v5377 = vpop.f32.mrf.mxu0
    %v5378 = vadd.f32 %v5185, %v5377
    %v5379 = vpop.f32.mrf.mxu0
    %v5380 = vadd.f32 %v5187, %v5379
    %5381 = vmatprep.mubr.bf16.mxu0 %v3871
    %5382 = vmatmul.mubr.bf16.gmra.mxu0 %v3870
    %v5383 = vpop.f32.mrf.mxu0
    %v5384 = vadd.f32 %v5191, %v5383
    %v5385 = vpop.f32.mrf.mxu0
    %v5386 = vadd.f32 %v5193, %v5385
    %v5387 = vpop.f32.mrf.mxu0
    %v5388 = vadd.f32 %v5195, %v5387
    %v5389 = vpop.f32.mrf.mxu0
    %v5390 = vadd.f32 %v5197, %v5389
    %5391 = vmatprep.mubr.bf16.mxu0 %v3875
    %5392 = vmatmul.mubr.bf16.gmra.mxu0 %v3874
    %v5393 = vpop.f32.mrf.mxu0
    %v5394 = vadd.f32 %v5201, %v5393
    %v5395 = vpop.f32.mrf.mxu0
    %v5396 = vadd.f32 %v5203, %v5395
    %v5397 = vpop.f32.mrf.mxu0
    %v5398 = vadd.f32 %v5205, %v5397
    %v5399 = vpop.f32.mrf.mxu0
    %v5400 = vadd.f32 %v5207, %v5399
    %5401 = vmatprep.mubr.bf16.mxu0 %v3879
    %5402 = vmatmul.mubr.bf16.gmra.mxu0 %v3878
    %v5403 = vpop.f32.mrf.mxu0
    %v5404 = vadd.f32 %v5211, %v5403
    %v5405 = vpop.f32.mrf.mxu0
    %v5406 = vadd.f32 %v5213, %v5405
    %v5407 = vpop.f32.mrf.mxu0
    %v5408 = vadd.f32 %v5215, %v5407
    %v5409 = vpop.f32.mrf.mxu0
    %v5410 = vadd.f32 %v5217, %v5409
    %5411 = vmatprep.mubr.bf16.mxu0 %v3883
    %5412 = vmatmul.mubr.bf16.gmra.mxu0 %v3882
    %v5413 = vpop.f32.mrf.mxu0
    %v5414 = vadd.f32 %v5221, %v5413
    %v5415 = vpop.f32.mrf.mxu0
    %v5416 = vadd.f32 %v5223, %v5415
    %v5417 = vpop.f32.mrf.mxu0
    %v5418 = vadd.f32 %v5225, %v5417
    %v5419 = vpop.f32.mrf.mxu0
    %v5420 = vadd.f32 %v5227, %v5419
    %5421 = vmatprep.mubr.bf16.mxu0 %v3887
    %5422 = vmatmul.mubr.bf16.gmra.mxu0 %v3886
    %v5423 = vpop.f32.mrf.mxu0
    %v5424 = vadd.f32 %v5231, %v5423
    %v5425 = vpop.f32.mrf.mxu0
    %v5426 = vadd.f32 %v5233, %v5425
    %v5427 = vpop.f32.mrf.mxu0
    %v5428 = vadd.f32 %v5235, %v5427
    %v5429 = vpop.f32.mrf.mxu0
    %v5430 = vadd.f32 %v5237, %v5429
    %5431 = vmatprep.mubr.bf16.mxu0 %v3891
    %5432 = vmatmul.mubr.bf16.gmra.mxu0 %v3890
    %v5433 = vpop.f32.mrf.mxu0
    %v5434 = vadd.f32 %v5241, %v5433
    %v5435 = vpop.f32.mrf.mxu0
    %v5436 = vadd.f32 %v5243, %v5435
    %v5437 = vpop.f32.mrf.mxu0
    %v5438 = vadd.f32 %v5245, %v5437
    %v5439 = vpop.f32.mrf.mxu0
    %v5440 = vadd.f32 %v5247, %v5439
    %5441 = vmatprep.mubr.bf16.mxu0 %v3895
    %5442 = vmatmul.mubr.bf16.gmra.mxu0 %v3894
    %v5443 = vpop.f32.mrf.mxu0
    %v5444 = vadd.f32 %v5251, %v5443
    %v5445 = vpop.f32.mrf.mxu0
    %v5446 = vadd.f32 %v5253, %v5445
    %v5447 = vpop.f32.mrf.mxu0
    %v5448 = vadd.f32 %v5255, %v5447
    %v5449 = vpop.f32.mrf.mxu0
    %v5450 = vadd.f32 %v5257, %v5449
    %5451 = vmatprep.mubr.bf16.mxu0 %v3899
    %5452 = vmatmul.mubr.bf16.gmra.mxu0 %v3898
    %v5453 = vpop.f32.mrf.mxu0
    %v5454 = vadd.f32 %v5261, %v5453
    %v5455 = vpop.f32.mrf.mxu0
    %v5456 = vadd.f32 %v5263, %v5455
    %v5457 = vpop.f32.mrf.mxu0
    %v5458 = vadd.f32 %v5265, %v5457
    %v5459 = vpop.f32.mrf.mxu0
    %v5460 = vadd.f32 %v5267, %v5459
    %5461 = vdwg.mxu0
    %v5462 = vmax.f32 %v4918, 0.0
    %v5463 = vmax.f32 %v4920, 0.0
    %v5464 = vmax.f32 %v5304, 0.0
    %v5465 = vmax.f32 %v5306, 0.0
    %v5466 = vmax.f32 %v4922, 0.0
    %v5467 = vmax.f32 %v4924, 0.0
    %v5468 = vmax.f32 %v5308, 0.0
    %v5469 = vmax.f32 %v5310, 0.0
    %v5470 = vmax.f32 %v4928, 0.0
    %v5471 = vmax.f32 %v4930, 0.0
    %v5472 = vmax.f32 %v5314, 0.0
    %v5473 = vmax.f32 %v5316, 0.0
    %v5474 = vmax.f32 %v4932, 0.0
    %v5475 = vmax.f32 %v4934, 0.0
    %v5476 = vmax.f32 %v5318, 0.0
    %v5477 = vmax.f32 %v5320, 0.0
    %v5478 = vmax.f32 %v4938, 0.0
    %v5479 = vmax.f32 %v4940, 0.0
    %v5480 = vmax.f32 %v5324, 0.0
    %v5481 = vmax.f32 %v5326, 0.0
    %v5482 = vmax.f32 %v4942, 0.0
    %v5483 = vmax.f32 %v4944, 0.0
    %v5484 = vmax.f32 %v5328, 0.0
    %v5485 = vmax.f32 %v5330, 0.0
    %v5486 = vmax.f32 %v4948, 0.0
    %v5487 = vmax.f32 %v4950, 0.0
    %v5488 = vmax.f32 %v5334, 0.0
    %v5489 = vmax.f32 %v5336, 0.0
    %v5490 = vmax.f32 %v4952, 0.0
    %v5491 = vmax.f32 %v4954, 0.0
    %v5492 = vmax.f32 %v5338, 0.0
    %v5493 = vmax.f32 %v5340, 0.0
    %v5494 = vmax.f32 %v4958, 0.0
    %v5495 = vmax.f32 %v4960, 0.0
    %v5496 = vmax.f32 %v5344, 0.0
    %v5497 = vmax.f32 %v5346, 0.0
    %v5498 = vmax.f32 %v4962, 0.0
    %v5499 = vmax.f32 %v4964, 0.0
    %v5500 = vmax.f32 %v5348, 0.0
    %v5501 = vmax.f32 %v5350, 0.0
    %v5502 = vmax.f32 %v4968, 0.0
    %v5503 = vmax.f32 %v4970, 0.0
    %v5504 = vmax.f32 %v5354, 0.0
    %v5505 = vmax.f32 %v5356, 0.0
    %v5506 = vmax.f32 %v4972, 0.0
    %v5507 = vmax.f32 %v4974, 0.0
    %v5508 = vmax.f32 %v5358, 0.0
    %v5509 = vmax.f32 %v5360, 0.0
    %v5510 = vmax.f32 %v4978, 0.0
    %v5511 = vmax.f32 %v4980, 0.0
    %v5512 = vmax.f32 %v5364, 0.0
    %v5513 = vmax.f32 %v5366, 0.0
    %v5514 = vmax.f32 %v4982, 0.0
    %v5515 = vmax.f32 %v4984, 0.0
    %v5516 = vmax.f32 %v5368, 0.0
    %v5517 = vmax.f32 %v5370, 0.0
    %v5518 = vmax.f32 %v4988, 0.0
    %v5519 = vmax.f32 %v4990, 0.0
    %v5520 = vmax.f32 %v5374, 0.0
    %v5521 = vmax.f32 %v5376, 0.0
    %v5522 = vmax.f32 %v4992, 0.0
    %v5523 = vmax.f32 %v4994, 0.0
    %v5524 = vmax.f32 %v5378, 0.0
    %v5525 = vmax.f32 %v5380, 0.0
    %v5526 = vmax.f32 %v4998, 0.0
    %v5527 = vmax.f32 %v5000, 0.0
    %v5528 = vmax.f32 %v5384, 0.0
    %v5529 = vmax.f32 %v5386, 0.0
    %v5530 = vmax.f32 %v5002, 0.0
    %v5531 = vmax.f32 %v5004, 0.0
    %v5532 = vmax.f32 %v5388, 0.0
    %v5533 = vmax.f32 %v5390, 0.0
    %v5534 = vmax.f32 %v5008, 0.0
    %v5535 = vmax.f32 %v5010, 0.0
    %v5536 = vmax.f32 %v5394, 0.0
    %v5537 = vmax.f32 %v5396, 0.0
    %v5538 = vmax.f32 %v5012, 0.0
    %v5539 = vmax.f32 %v5014, 0.0
    %v5540 = vmax.f32 %v5398, 0.0
    %v5541 = vmax.f32 %v5400, 0.0
    %v5542 = vmax.f32 %v5018, 0.0
    %v5543 = vmax.f32 %v5020, 0.0
    %v5544 = vmax.f32 %v5404, 0.0
    %v5545 = vmax.f32 %v5406, 0.0
    %v5546 = vmax.f32 %v5022, 0.0
    %v5547 = vmax.f32 %v5024, 0.0
    %v5548 = vmax.f32 %v5408, 0.0
    %v5549 = vmax.f32 %v5410, 0.0
    %v5550 = vmax.f32 %v5028, 0.0
    %v5551 = vmax.f32 %v5030, 0.0
    %v5552 = vmax.f32 %v5414, 0.0
    %v5553 = vmax.f32 %v5416, 0.0
    %v5554 = vmax.f32 %v5032, 0.0
    %v5555 = vmax.f32 %v5034, 0.0
    %v5556 = vmax.f32 %v5418, 0.0
    %v5557 = vmax.f32 %v5420, 0.0
    %v5558 = vmax.f32 %v5038, 0.0
    %v5559 = vmax.f32 %v5040, 0.0
    %v5560 = vmax.f32 %v5424, 0.0
    %v5561 = vmax.f32 %v5426, 0.0
    %v5562 = vmax.f32 %v5042, 0.0
    %v5563 = vmax.f32 %v5044, 0.0
    %v5564 = vmax.f32 %v5428, 0.0
    %v5565 = vmax.f32 %v5430, 0.0
    %v5566 = vmax.f32 %v5048, 0.0
    %v5567 = vmax.f32 %v5050, 0.0
    %v5568 = vmax.f32 %v5434, 0.0
    %v5569 = vmax.f32 %v5436, 0.0
    %v5570 = vmax.f32 %v5052, 0.0
    %v5571 = vmax.f32 %v5054, 0.0
    %v5572 = vmax.f32 %v5438, 0.0
    %v5573 = vmax.f32 %v5440, 0.0
    %v5574 = vmax.f32 %v5058, 0.0
    %v5575 = vmax.f32 %v5060, 0.0
    %v5576 = vmax.f32 %v5444, 0.0
    %v5577 = vmax.f32 %v5446, 0.0
    %v5578 = vmax.f32 %v5062, 0.0
    %v5579 = vmax.f32 %v5064, 0.0
    %v5580 = vmax.f32 %v5448, 0.0
    %v5581 = vmax.f32 %v5450, 0.0
    %v5582 = vmax.f32 %v5068, 0.0
    %v5583 = vmax.f32 %v5070, 0.0
    %v5584 = vmax.f32 %v5454, 0.0
    %v5585 = vmax.f32 %v5456, 0.0
    %v5586 = vmax.f32 %v5072, 0.0
    %v5587 = vmax.f32 %v5074, 0.0
    %v5588 = vmax.f32 %v5458, 0.0
    %v5589 = vmax.f32 %v5460, 0.0
    %v5590 = vpack.c.bf16 %v5466, %v5462
    %v5591 = vpack.c.bf16 %v5467, %v5463
    %v5592 = vpack.c.bf16 %v5468, %v5464
    %v5593 = vpack.c.bf16 %v5469, %v5465
    %v5594 = vpack.c.bf16 %v5474, %v5470
    %v5595 = vpack.c.bf16 %v5475, %v5471
    %v5596 = vpack.c.bf16 %v5476, %v5472
    %v5597 = vpack.c.bf16 %v5477, %v5473
    %v5598 = vpack.c.bf16 %v5482, %v5478
    %v5599 = vpack.c.bf16 %v5483, %v5479
    %v5600 = vpack.c.bf16 %v5484, %v5480
    %v5601 = vpack.c.bf16 %v5485, %v5481
    %v5602 = vpack.c.bf16 %v5490, %v5486
    %v5603 = vpack.c.bf16 %v5491, %v5487
    %v5604 = vpack.c.bf16 %v5492, %v5488
    %v5605 = vpack.c.bf16 %v5493, %v5489
    %v5606 = vpack.c.bf16 %v5498, %v5494
    %v5607 = vpack.c.bf16 %v5499, %v5495
    %v5608 = vpack.c.bf16 %v5500, %v5496
    %v5609 = vpack.c.bf16 %v5501, %v5497
    %v5610 = vpack.c.bf16 %v5506, %v5502
    %v5611 = vpack.c.bf16 %v5507, %v5503
    %v5612 = vpack.c.bf16 %v5508, %v5504
    %v5613 = vpack.c.bf16 %v5509, %v5505
    %v5614 = vpack.c.bf16 %v5514, %v5510
    %v5615 = vpack.c.bf16 %v5515, %v5511
    %v5616 = vpack.c.bf16 %v5516, %v5512
    %v5617 = vpack.c.bf16 %v5517, %v5513
    %v5618 = vpack.c.bf16 %v5522, %v5518
    %v5619 = vpack.c.bf16 %v5523, %v5519
    %v5620 = vpack.c.bf16 %v5524, %v5520
    %v5621 = vpack.c.bf16 %v5525, %v5521
    %v5622 = vpack.c.bf16 %v5530, %v5526
    %v5623 = vpack.c.bf16 %v5531, %v5527
    %v5624 = vpack.c.bf16 %v5532, %v5528
    %v5625 = vpack.c.bf16 %v5533, %v5529
    %v5626 = vpack.c.bf16 %v5538, %v5534
    %v5627 = vpack.c.bf16 %v5539, %v5535
    %v5628 = vpack.c.bf16 %v5540, %v5536
    %v5629 = vpack.c.bf16 %v5541, %v5537
    %v5630 = vpack.c.bf16 %v5546, %v5542
    %v5631 = vpack.c.bf16 %v5547, %v5543
    %v5632 = vpack.c.bf16 %v5548, %v5544
    %v5633 = vpack.c.bf16 %v5549, %v5545
    %v5634 = vpack.c.bf16 %v5554, %v5550
    %v5635 = vpack.c.bf16 %v5555, %v5551
    %v5636 = vpack.c.bf16 %v5556, %v5552
    %v5637 = vpack.c.bf16 %v5557, %v5553
    %v5638 = vpack.c.bf16 %v5562, %v5558
    %v5639 = vpack.c.bf16 %v5563, %v5559
    %v5640 = vpack.c.bf16 %v5564, %v5560
    %v5641 = vpack.c.bf16 %v5565, %v5561
    %v5642 = vpack.c.bf16 %v5570, %v5566
    %v5643 = vpack.c.bf16 %v5571, %v5567
    %v5644 = vpack.c.bf16 %v5572, %v5568
    %v5645 = vpack.c.bf16 %v5573, %v5569
    %v5646 = vpack.c.bf16 %v5578, %v5574
    %v5647 = vpack.c.bf16 %v5579, %v5575
    %v5648 = vpack.c.bf16 %v5580, %v5576
    %v5649 = vpack.c.bf16 %v5581, %v5577
    %v5650 = vpack.c.bf16 %v5586, %v5582
    %v5651 = vpack.c.bf16 %v5587, %v5583
    %v5652 = vpack.c.bf16 %v5588, %v5584
    %v5653 = vpack.c.bf16 %v5589, %v5585
    %v5654 = vld [vmem:[#allocation10] sm:$0xf]
    %v5655 = vld [vmem:[#allocation10 + $0x4] sm:$0xf]
    %v5656 = vld [vmem:[#allocation10 + $0x8] sm:$0xf]
    %v5657 = vld [vmem:[#allocation10 + $0xc] sm:$0xf]
    %v5658 = vld [vmem:[#allocation10 + $0x10] sm:$0xf]
    %v5659 = vld [vmem:[#allocation10 + $0x14] sm:$0xf]
    %v5660 = vld [vmem:[#allocation10 + $0x18] sm:$0xf]
    %v5661 = vld [vmem:[#allocation10 + $0x1c] sm:$0xf]
    %v5662 = vld [vmem:[#allocation10 + $0x20] sm:$0xf]
    %v5663 = vld [vmem:[#allocation10 + $0x24] sm:$0xf]
    %v5664 = vld [vmem:[#allocation10 + $0x28] sm:$0xf]
    %v5665 = vld [vmem:[#allocation10 + $0x2c] sm:$0xf]
    %v5666 = vld [vmem:[#allocation10 + $0x30] sm:$0xf]
    %v5667 = vld [vmem:[#allocation10 + $0x34] sm:$0xf]
    %v5668 = vld [vmem:[#allocation10 + $0x38] sm:$0xf]
    %v5669 = vld [vmem:[#allocation10 + $0x3c] sm:$0xf]
    %v5670 = vld [vmem:[#allocation10 + $0x40] sm:$0xf]
    %v5671 = vld [vmem:[#allocation10 + $0x44] sm:$0xf]
    %v5672 = vld [vmem:[#allocation10 + $0x48] sm:$0xf]
    %v5673 = vld [vmem:[#allocation10 + $0x4c] sm:$0xf]
    %v5674 = vld [vmem:[#allocation10 + $0x50] sm:$0xf]
    %v5675 = vld [vmem:[#allocation10 + $0x54] sm:$0xf]
    %v5676 = vld [vmem:[#allocation10 + $0x58] sm:$0xf]
    %v5677 = vld [vmem:[#allocation10 + $0x5c] sm:$0xf]
    %v5678 = vld [vmem:[#allocation10 + $0x60] sm:$0xf]
    %v5679 = vld [vmem:[#allocation10 + $0x64] sm:$0xf]
    %v5680 = vld [vmem:[#allocation10 + $0x68] sm:$0xf]
    %v5681 = vld [vmem:[#allocation10 + $0x6c] sm:$0xf]
    %v5682 = vld [vmem:[#allocation10 + $0x70] sm:$0xf]
    %v5683 = vld [vmem:[#allocation10 + $0x74] sm:$0xf]
    %v5684 = vld [vmem:[#allocation10 + $0x78] sm:$0xf]
    %v5685 = vld [vmem:[#allocation10 + $0x7c] sm:$0xf]
    %v5686 = vld [vmem:[#allocation10 + $0x80] sm:$0xf]
    %v5687 = vld [vmem:[#allocation10 + $0x84] sm:$0xf]
    %v5688 = vld [vmem:[#allocation10 + $0x88] sm:$0xf]
    %v5689 = vld [vmem:[#allocation10 + $0x8c] sm:$0xf]
    %v5690 = vld [vmem:[#allocation10 + $0x90] sm:$0xf]
    %v5691 = vld [vmem:[#allocation10 + $0x94] sm:$0xf]
    %v5692 = vld [vmem:[#allocation10 + $0x98] sm:$0xf]
    %v5693 = vld [vmem:[#allocation10 + $0x9c] sm:$0xf]
    %v5694 = vld [vmem:[#allocation10 + $0xa0] sm:$0xf]
    %v5695 = vld [vmem:[#allocation10 + $0xa4] sm:$0xf]
    %v5696 = vld [vmem:[#allocation10 + $0xa8] sm:$0xf]
    %v5697 = vld [vmem:[#allocation10 + $0xac] sm:$0xf]
    %v5698 = vld [vmem:[#allocation10 + $0xb0] sm:$0xf]
    %v5699 = vld [vmem:[#allocation10 + $0xb4] sm:$0xf]
    %v5700 = vld [vmem:[#allocation10 + $0xb8] sm:$0xf]
    %v5701 = vld [vmem:[#allocation10 + $0xbc] sm:$0xf]
    %v5702 = vld [vmem:[#allocation10 + $0xc0] sm:$0xf]
    %v5703 = vld [vmem:[#allocation10 + $0xc4] sm:$0xf]
    %v5704 = vld [vmem:[#allocation10 + $0xc8] sm:$0xf]
    %v5705 = vld [vmem:[#allocation10 + $0xcc] sm:$0xf]
    %v5706 = vld [vmem:[#allocation10 + $0xd0] sm:$0xf]
    %v5707 = vld [vmem:[#allocation10 + $0xd4] sm:$0xf]
    %v5708 = vld [vmem:[#allocation10 + $0xd8] sm:$0xf]
    %v5709 = vld [vmem:[#allocation10 + $0xdc] sm:$0xf]
    %v5710 = vld [vmem:[#allocation10 + $0xe0] sm:$0xf]
    %v5711 = vld [vmem:[#allocation10 + $0xe4] sm:$0xf]
    %v5712 = vld [vmem:[#allocation10 + $0xe8] sm:$0xf]
    %v5713 = vld [vmem:[#allocation10 + $0xec] sm:$0xf]
    %v5714 = vld [vmem:[#allocation10 + $0xf0] sm:$0xf]
    %v5715 = vld [vmem:[#allocation10 + $0xf4] sm:$0xf]
    %v5716 = vld [vmem:[#allocation10 + $0xf8] sm:$0xf]
    %v5717 = vld [vmem:[#allocation10 + $0xfc] sm:$0xf]
    %v5718 = vld [vmem:[%s6] sm:$0x1]
    %v5720 = vlaneseq
    %v5721 = vshrl.u32 %v5720, 7
    %v5722 = vsub.s32 0, %v5721
    %v5723 = vrot.slane %v5718, %v5722
    %v5789 = vunpack.c.l.b16 %v5654
    %v5790 = vunpack.c.l.b16 %v5655
    %v5791 = vunpack.c.l.b16 %v5656
    %v5792 = vunpack.c.l.b16 %v5657
    %v5793 = vunpack.c.l.b16 %v5658
    %v5794 = vunpack.c.l.b16 %v5659
    %v5795 = vunpack.c.l.b16 %v5660
    %v5796 = vunpack.c.l.b16 %v5661
    %v5797 = vunpack.c.l.b16 %v5662
    %v5798 = vunpack.c.l.b16 %v5663
    %v5799 = vunpack.c.l.b16 %v5664
    %v5800 = vunpack.c.l.b16 %v5665
    %v5801 = vunpack.c.l.b16 %v5666
    %v5802 = vunpack.c.l.b16 %v5667
    %v5803 = vunpack.c.l.b16 %v5668
    %v5804 = vunpack.c.l.b16 %v5669
    %v5805 = vunpack.c.l.b16 %v5670
    %v5806 = vunpack.c.l.b16 %v5671
    %v5807 = vunpack.c.l.b16 %v5672
    %v5808 = vunpack.c.l.b16 %v5673
    %v5809 = vunpack.c.l.b16 %v5674
    %v5810 = vunpack.c.l.b16 %v5675
    %v5811 = vunpack.c.l.b16 %v5676
    %v5812 = vunpack.c.l.b16 %v5677
    %v5813 = vunpack.c.l.b16 %v5678
    %v5814 = vunpack.c.l.b16 %v5679
    %v5815 = vunpack.c.l.b16 %v5680
    %v5816 = vunpack.c.l.b16 %v5681
    %v5817 = vunpack.c.l.b16 %v5682
    %v5818 = vunpack.c.l.b16 %v5683
    %v5819 = vunpack.c.l.b16 %v5684
    %v5820 = vunpack.c.l.b16 %v5685
    %v5821 = vunpack.c.l.b16 %v5686
    %v5822 = vunpack.c.l.b16 %v5687
    %v5823 = vunpack.c.l.b16 %v5688
    %v5824 = vunpack.c.l.b16 %v5689
    %v5825 = vunpack.c.l.b16 %v5690
    %v5826 = vunpack.c.l.b16 %v5691
    %v5827 = vunpack.c.l.b16 %v5692
    %v5828 = vunpack.c.l.b16 %v5693
    %v5829 = vunpack.c.l.b16 %v5694
    %v5830 = vunpack.c.l.b16 %v5695
    %v5831 = vunpack.c.l.b16 %v5696
    %v5832 = vunpack.c.l.b16 %v5697
    %v5833 = vunpack.c.l.b16 %v5698
    %v5834 = vunpack.c.l.b16 %v5699
    %v5835 = vunpack.c.l.b16 %v5700
    %v5836 = vunpack.c.l.b16 %v5701
    %v5837 = vunpack.c.l.b16 %v5702
    %v5838 = vunpack.c.l.b16 %v5703
    %v5839 = vunpack.c.l.b16 %v5704
    %v5840 = vunpack.c.l.b16 %v5705
    %v5841 = vunpack.c.l.b16 %v5706
    %v5842 = vunpack.c.l.b16 %v5707
    %v5843 = vunpack.c.l.b16 %v5708
    %v5844 = vunpack.c.l.b16 %v5709
    %v5845 = vunpack.c.l.b16 %v5710
    %v5846 = vunpack.c.l.b16 %v5711
    %v5847 = vunpack.c.l.b16 %v5712
    %v5848 = vunpack.c.l.b16 %v5713
    %v5849 = vunpack.c.l.b16 %v5714
    %v5850 = vunpack.c.l.b16 %v5715
    %v5851 = vunpack.c.l.b16 %v5716
    %v5852 = vunpack.c.l.b16 %v5717
    %v5853 = vpack.c.b16 %v5790, %v5789
    %v5854 = vpack.c.b16 %v5792, %v5791
    %v5855 = vpack.c.b16 %v5794, %v5793
    %v5856 = vpack.c.b16 %v5796, %v5795
    %v5857 = vpack.c.b16 %v5798, %v5797
    %v5858 = vpack.c.b16 %v5800, %v5799
    %v5859 = vpack.c.b16 %v5802, %v5801
    %v5860 = vpack.c.b16 %v5804, %v5803
    %v5861 = vpack.c.b16 %v5806, %v5805
    %v5862 = vpack.c.b16 %v5808, %v5807
    %v5863 = vpack.c.b16 %v5810, %v5809
    %v5864 = vpack.c.b16 %v5812, %v5811
    %v5865 = vpack.c.b16 %v5814, %v5813
    %v5866 = vpack.c.b16 %v5816, %v5815
    %v5867 = vpack.c.b16 %v5818, %v5817
    %v5868 = vpack.c.b16 %v5820, %v5819
    %v5869 = vpack.c.b16 %v5822, %v5821
    %v5870 = vpack.c.b16 %v5824, %v5823
    %v5871 = vpack.c.b16 %v5826, %v5825
    %v5872 = vpack.c.b16 %v5828, %v5827
    %v5873 = vpack.c.b16 %v5830, %v5829
    %v5874 = vpack.c.b16 %v5832, %v5831
    %v5875 = vpack.c.b16 %v5834, %v5833
    %v5876 = vpack.c.b16 %v5836, %v5835
    %v5877 = vpack.c.b16 %v5838, %v5837
    %v5878 = vpack.c.b16 %v5840, %v5839
    %v5879 = vpack.c.b16 %v5842, %v5841
    %v5880 = vpack.c.b16 %v5844, %v5843
    %v5881 = vpack.c.b16 %v5846, %v5845
    %v5882 = vpack.c.b16 %v5848, %v5847
    %v5883 = vpack.c.b16 %v5850, %v5849
    %v5884 = vpack.c.b16 %v5852, %v5851
    %5917 = vmatprep.subr.bf16.mxu0 0
    %5918 = vmatpush1.bf16.msra.mxu0 %v5860
    %5919 = vmatprep.subr.bf16.mxu0 0
    %5920 = vmatpush1.bf16.msra.mxu0 %v5859
    %5921 = vmatprep.subr.bf16.mxu0 0
    %5922 = vmatpush1.bf16.msra.mxu0 %v5858
    %5923 = vmatprep.subr.bf16.mxu0 0
    %5924 = vmatpush1.bf16.msra.mxu0 %v5857
    %5925 = vmatprep.subr.bf16.mxu0 0
    %5926 = vmatpush1.bf16.msra.mxu0 %v5856
    %5927 = vmatprep.subr.bf16.mxu0 0
    %5928 = vmatpush1.bf16.msra.mxu0 %v5855
    %5929 = vmatprep.subr.bf16.mxu0 0
    %5930 = vmatpush1.bf16.msra.mxu0 %v5854
    %5931 = vmatprep.subr.bf16.mxu0 0
    %5932 = vmatpush1.bf16.msra.mxu0 %v5853
    %5933 = vmatprep.subr.bf16.mxu0 0
    %5934 = vmatpush2.bf16.msra.mxu0 %v5868
    %5935 = vmatprep.subr.bf16.mxu0 0
    %5936 = vmatpush2.bf16.msra.mxu0 %v5867
    %5937 = vmatprep.subr.bf16.mxu0 0
    %5938 = vmatpush2.bf16.msra.mxu0 %v5866
    %5939 = vmatprep.subr.bf16.mxu0 0
    %5940 = vmatpush2.bf16.msra.mxu0 %v5865
    %5941 = vmatprep.subr.bf16.mxu0 0
    %5942 = vmatpush2.bf16.msra.mxu0 %v5864
    %5943 = vmatprep.subr.bf16.mxu0 0
    %5944 = vmatpush2.bf16.msra.mxu0 %v5863
    %5945 = vmatprep.subr.bf16.mxu0 0
    %5946 = vmatpush2.bf16.msra.mxu0 %v5862
    %5947 = vmatprep.subr.bf16.mxu0 0
    %5948 = vmatpush2.bf16.msra.mxu0 %v5861
    %5949 = vmatprep.mubr.bf16.mxu0 %v5591
    %5950 = vmatmul.mubr.bf16.gmra.mxu0 %v5590
    %v5951 = vpop.f32.mrf.mxu0
    %v5952 = vadd.f32 %v5723, %v5951
    %v5953 = vpop.f32.mrf.mxu0
    %v5954 = vpop.f32.mrf.mxu0
    %v5955 = vadd.f32 %v5723, %v5954
    %v5956 = vpop.f32.mrf.mxu0
    %5957 = vmatprep.mubr.bf16.mxu0 %v5595
    %5958 = vmatmul.mubr.bf16.gmra.mxu0 %v5594
    %v5959 = vpop.f32.mrf.mxu0
    %v5960 = vadd.f32 %v5723, %v5959
    %v5961 = vpop.f32.mrf.mxu0
    %v5962 = vpop.f32.mrf.mxu0
    %v5963 = vadd.f32 %v5723, %v5962
    %v5964 = vpop.f32.mrf.mxu0
    %5965 = vmatprep.mubr.bf16.mxu0 %v5599
    %5966 = vmatmul.mubr.bf16.gmra.mxu0 %v5598
    %v5967 = vpop.f32.mrf.mxu0
    %v5968 = vadd.f32 %v5723, %v5967
    %v5969 = vpop.f32.mrf.mxu0
    %v5970 = vpop.f32.mrf.mxu0
    %v5971 = vadd.f32 %v5723, %v5970
    %v5972 = vpop.f32.mrf.mxu0
    %5973 = vmatprep.mubr.bf16.mxu0 %v5603
    %5974 = vmatmul.mubr.bf16.gmra.mxu0 %v5602
    %v5975 = vpop.f32.mrf.mxu0
    %v5976 = vadd.f32 %v5723, %v5975
    %v5977 = vpop.f32.mrf.mxu0
    %v5978 = vpop.f32.mrf.mxu0
    %v5979 = vadd.f32 %v5723, %v5978
    %v5980 = vpop.f32.mrf.mxu0
    %5981 = vmatprep.mubr.bf16.mxu0 %v5607
    %5982 = vmatmul.mubr.bf16.gmra.mxu0 %v5606
    %v5983 = vpop.f32.mrf.mxu0
    %v5984 = vadd.f32 %v5723, %v5983
    %v5985 = vpop.f32.mrf.mxu0
    %v5986 = vpop.f32.mrf.mxu0
    %v5987 = vadd.f32 %v5723, %v5986
    %v5988 = vpop.f32.mrf.mxu0
    %5989 = vmatprep.mubr.bf16.mxu0 %v5611
    %5990 = vmatmul.mubr.bf16.gmra.mxu0 %v5610
    %v5991 = vpop.f32.mrf.mxu0
    %v5992 = vadd.f32 %v5723, %v5991
    %v5993 = vpop.f32.mrf.mxu0
    %v5994 = vpop.f32.mrf.mxu0
    %v5995 = vadd.f32 %v5723, %v5994
    %v5996 = vpop.f32.mrf.mxu0
    %5997 = vmatprep.mubr.bf16.mxu0 %v5615
    %5998 = vmatmul.mubr.bf16.gmra.mxu0 %v5614
    %v5999 = vpop.f32.mrf.mxu0
    %v6000 = vadd.f32 %v5723, %v5999
    %v6001 = vpop.f32.mrf.mxu0
    %v6002 = vpop.f32.mrf.mxu0
    %v6003 = vadd.f32 %v5723, %v6002
    %v6004 = vpop.f32.mrf.mxu0
    %6005 = vmatprep.mubr.bf16.mxu0 %v5619
    %6006 = vmatmul.mubr.bf16.gmra.mxu0 %v5618
    %v6007 = vpop.f32.mrf.mxu0
    %v6008 = vadd.f32 %v5723, %v6007
    %v6009 = vpop.f32.mrf.mxu0
    %v6010 = vpop.f32.mrf.mxu0
    %v6011 = vadd.f32 %v5723, %v6010
    %v6012 = vpop.f32.mrf.mxu0
    %6013 = vmatprep.mubr.bf16.mxu0 %v5623
    %6014 = vmatmul.mubr.bf16.gmra.mxu0 %v5622
    %v6015 = vpop.f32.mrf.mxu0
    %v6016 = vadd.f32 %v5723, %v6015
    %v6017 = vpop.f32.mrf.mxu0
    %v6018 = vpop.f32.mrf.mxu0
    %v6019 = vadd.f32 %v5723, %v6018
    %v6020 = vpop.f32.mrf.mxu0
    %6021 = vmatprep.mubr.bf16.mxu0 %v5627
    %6022 = vmatmul.mubr.bf16.gmra.mxu0 %v5626
    %v6023 = vpop.f32.mrf.mxu0
    %v6024 = vadd.f32 %v5723, %v6023
    %v6025 = vpop.f32.mrf.mxu0
    %v6026 = vpop.f32.mrf.mxu0
    %v6027 = vadd.f32 %v5723, %v6026
    %v6028 = vpop.f32.mrf.mxu0
    %6029 = vmatprep.mubr.bf16.mxu0 %v5631
    %6030 = vmatmul.mubr.bf16.gmra.mxu0 %v5630
    %v6031 = vpop.f32.mrf.mxu0
    %v6032 = vadd.f32 %v5723, %v6031
    %v6033 = vpop.f32.mrf.mxu0
    %v6034 = vpop.f32.mrf.mxu0
    %v6035 = vadd.f32 %v5723, %v6034
    %v6036 = vpop.f32.mrf.mxu0
    %6037 = vmatprep.mubr.bf16.mxu0 %v5635
    %6038 = vmatmul.mubr.bf16.gmra.mxu0 %v5634
    %v6039 = vpop.f32.mrf.mxu0
    %v6040 = vadd.f32 %v5723, %v6039
    %v6041 = vpop.f32.mrf.mxu0
    %v6042 = vpop.f32.mrf.mxu0
    %v6043 = vadd.f32 %v5723, %v6042
    %v6044 = vpop.f32.mrf.mxu0
    %6045 = vmatprep.mubr.bf16.mxu0 %v5639
    %6046 = vmatmul.mubr.bf16.gmra.mxu0 %v5638
    %v6047 = vpop.f32.mrf.mxu0
    %v6048 = vadd.f32 %v5723, %v6047
    %v6049 = vpop.f32.mrf.mxu0
    %v6050 = vpop.f32.mrf.mxu0
    %v6051 = vadd.f32 %v5723, %v6050
    %v6052 = vpop.f32.mrf.mxu0
    %6053 = vmatprep.mubr.bf16.mxu0 %v5643
    %6054 = vmatmul.mubr.bf16.gmra.mxu0 %v5642
    %v6055 = vpop.f32.mrf.mxu0
    %v6056 = vadd.f32 %v5723, %v6055
    %v6057 = vpop.f32.mrf.mxu0
    %v6058 = vpop.f32.mrf.mxu0
    %v6059 = vadd.f32 %v5723, %v6058
    %v6060 = vpop.f32.mrf.mxu0
    %6061 = vmatprep.mubr.bf16.mxu0 %v5647
    %6062 = vmatmul.mubr.bf16.gmra.mxu0 %v5646
    %v6063 = vpop.f32.mrf.mxu0
    %v6064 = vadd.f32 %v5723, %v6063
    %v6065 = vpop.f32.mrf.mxu0
    %v6066 = vpop.f32.mrf.mxu0
    %v6067 = vadd.f32 %v5723, %v6066
    %v6068 = vpop.f32.mrf.mxu0
    %6069 = vmatprep.mubr.bf16.mxu0 %v5651
    %6070 = vmatmul.mubr.bf16.gmra.mxu0 %v5650
    %v6071 = vpop.f32.mrf.mxu0
    %v6072 = vadd.f32 %v5723, %v6071
    %v6073 = vpop.f32.mrf.mxu0
    %v6074 = vpop.f32.mrf.mxu0
    %v6075 = vadd.f32 %v5723, %v6074
    %v6076 = vpop.f32.mrf.mxu0
    %6077 = vdwg.mxu0
    %6078 = vmatprep.subr.bf16.mxu0 0
    %6079 = vmatpush1.bf16.msra.mxu0 %v5876
    %6080 = vmatprep.subr.bf16.mxu0 0
    %6081 = vmatpush1.bf16.msra.mxu0 %v5875
    %6082 = vmatprep.subr.bf16.mxu0 0
    %6083 = vmatpush1.bf16.msra.mxu0 %v5874
    %6084 = vmatprep.subr.bf16.mxu0 0
    %6085 = vmatpush1.bf16.msra.mxu0 %v5873
    %6086 = vmatprep.subr.bf16.mxu0 0
    %6087 = vmatpush1.bf16.msra.mxu0 %v5872
    %6088 = vmatprep.subr.bf16.mxu0 0
    %6089 = vmatpush1.bf16.msra.mxu0 %v5871
    %6090 = vmatprep.subr.bf16.mxu0 0
    %6091 = vmatpush1.bf16.msra.mxu0 %v5870
    %6092 = vmatprep.subr.bf16.mxu0 0
    %6093 = vmatpush1.bf16.msra.mxu0 %v5869
    %6094 = vmatprep.subr.bf16.mxu0 0
    %6095 = vmatpush2.bf16.msra.mxu0 %v5884
    %6096 = vmatprep.subr.bf16.mxu0 0
    %6097 = vmatpush2.bf16.msra.mxu0 %v5883
    %6098 = vmatprep.subr.bf16.mxu0 0
    %6099 = vmatpush2.bf16.msra.mxu0 %v5882
    %6100 = vmatprep.subr.bf16.mxu0 0
    %6101 = vmatpush2.bf16.msra.mxu0 %v5881
    %6102 = vmatprep.subr.bf16.mxu0 0
    %6103 = vmatpush2.bf16.msra.mxu0 %v5880
    %6104 = vmatprep.subr.bf16.mxu0 0
    %6105 = vmatpush2.bf16.msra.mxu0 %v5879
    %6106 = vmatprep.subr.bf16.mxu0 0
    %6107 = vmatpush2.bf16.msra.mxu0 %v5878
    %6108 = vmatprep.subr.bf16.mxu0 0
    %6109 = vmatpush2.bf16.msra.mxu0 %v5877
    %6110 = vmatprep.mubr.bf16.mxu0 %v5593
    %6111 = vmatmul.mubr.bf16.gmra.mxu0 %v5592
    %v6112 = vpop.f32.mrf.mxu0
    %v6113 = vadd.f32 %v5952, %v6112
    %v6114 = vpop.f32.mrf.mxu0
    %v6115 = vpop.f32.mrf.mxu0
    %v6116 = vadd.f32 %v5955, %v6115
    %v6117 = vpop.f32.mrf.mxu0
    %6118 = vmatprep.mubr.bf16.mxu0 %v5597
    %6119 = vmatmul.mubr.bf16.gmra.mxu0 %v5596
    %v6120 = vpop.f32.mrf.mxu0
    %v6121 = vadd.f32 %v5960, %v6120
    %v6122 = vpop.f32.mrf.mxu0
    %v6123 = vpop.f32.mrf.mxu0
    %v6124 = vadd.f32 %v5963, %v6123
    %v6125 = vpop.f32.mrf.mxu0
    %6126 = vmatprep.mubr.bf16.mxu0 %v5601
    %6127 = vmatmul.mubr.bf16.gmra.mxu0 %v5600
    %v6128 = vpop.f32.mrf.mxu0
    %v6129 = vadd.f32 %v5968, %v6128
    %v6130 = vpop.f32.mrf.mxu0
    %v6131 = vpop.f32.mrf.mxu0
    %v6132 = vadd.f32 %v5971, %v6131
    %v6133 = vpop.f32.mrf.mxu0
    %6134 = vmatprep.mubr.bf16.mxu0 %v5605
    %6135 = vmatmul.mubr.bf16.gmra.mxu0 %v5604
    %v6136 = vpop.f32.mrf.mxu0
    %v6137 = vadd.f32 %v5976, %v6136
    %v6138 = vpop.f32.mrf.mxu0
    %v6139 = vpop.f32.mrf.mxu0
    %v6140 = vadd.f32 %v5979, %v6139
    %v6141 = vpop.f32.mrf.mxu0
    %6142 = vmatprep.mubr.bf16.mxu0 %v5609
    %6143 = vmatmul.mubr.bf16.gmra.mxu0 %v5608
    %v6144 = vpop.f32.mrf.mxu0
    %v6145 = vadd.f32 %v5984, %v6144
    %v6146 = vpop.f32.mrf.mxu0
    %v6147 = vpop.f32.mrf.mxu0
    %v6148 = vadd.f32 %v5987, %v6147
    %v6149 = vpop.f32.mrf.mxu0
    %6150 = vmatprep.mubr.bf16.mxu0 %v5613
    %6151 = vmatmul.mubr.bf16.gmra.mxu0 %v5612
    %v6152 = vpop.f32.mrf.mxu0
    %v6153 = vadd.f32 %v5992, %v6152
    %v6154 = vpop.f32.mrf.mxu0
    %v6155 = vpop.f32.mrf.mxu0
    %v6156 = vadd.f32 %v5995, %v6155
    %v6157 = vpop.f32.mrf.mxu0
    %6158 = vmatprep.mubr.bf16.mxu0 %v5617
    %6159 = vmatmul.mubr.bf16.gmra.mxu0 %v5616
    %v6160 = vpop.f32.mrf.mxu0
    %v6161 = vadd.f32 %v6000, %v6160
    %v6162 = vpop.f32.mrf.mxu0
    %v6163 = vpop.f32.mrf.mxu0
    %v6164 = vadd.f32 %v6003, %v6163
    %v6165 = vpop.f32.mrf.mxu0
    %6166 = vmatprep.mubr.bf16.mxu0 %v5621
    %6167 = vmatmul.mubr.bf16.gmra.mxu0 %v5620
    %v6168 = vpop.f32.mrf.mxu0
    %v6169 = vadd.f32 %v6008, %v6168
    %v6170 = vpop.f32.mrf.mxu0
    %v6171 = vpop.f32.mrf.mxu0
    %v6172 = vadd.f32 %v6011, %v6171
    %v6173 = vpop.f32.mrf.mxu0
    %6174 = vmatprep.mubr.bf16.mxu0 %v5625
    %6175 = vmatmul.mubr.bf16.gmra.mxu0 %v5624
    %v6176 = vpop.f32.mrf.mxu0
    %v6177 = vadd.f32 %v6016, %v6176
    %v6178 = vpop.f32.mrf.mxu0
    %v6179 = vpop.f32.mrf.mxu0
    %v6180 = vadd.f32 %v6019, %v6179
    %v6181 = vpop.f32.mrf.mxu0
    %6182 = vmatprep.mubr.bf16.mxu0 %v5629
    %6183 = vmatmul.mubr.bf16.gmra.mxu0 %v5628
    %v6184 = vpop.f32.mrf.mxu0
    %v6185 = vadd.f32 %v6024, %v6184
    %v6186 = vpop.f32.mrf.mxu0
    %v6187 = vpop.f32.mrf.mxu0
    %v6188 = vadd.f32 %v6027, %v6187
    %v6189 = vpop.f32.mrf.mxu0
    %6190 = vmatprep.mubr.bf16.mxu0 %v5633
    %6191 = vmatmul.mubr.bf16.gmra.mxu0 %v5632
    %v6192 = vpop.f32.mrf.mxu0
    %v6193 = vadd.f32 %v6032, %v6192
    %v6194 = vpop.f32.mrf.mxu0
    %v6195 = vpop.f32.mrf.mxu0
    %v6196 = vadd.f32 %v6035, %v6195
    %v6197 = vpop.f32.mrf.mxu0
    %6198 = vmatprep.mubr.bf16.mxu0 %v5637
    %6199 = vmatmul.mubr.bf16.gmra.mxu0 %v5636
    %v6200 = vpop.f32.mrf.mxu0
    %v6201 = vadd.f32 %v6040, %v6200
    %v6202 = vpop.f32.mrf.mxu0
    %v6203 = vpop.f32.mrf.mxu0
    %v6204 = vadd.f32 %v6043, %v6203
    %v6205 = vpop.f32.mrf.mxu0
    %6206 = vmatprep.mubr.bf16.mxu0 %v5641
    %6207 = vmatmul.mubr.bf16.gmra.mxu0 %v5640
    %v6208 = vpop.f32.mrf.mxu0
    %v6209 = vadd.f32 %v6048, %v6208
    %v6210 = vpop.f32.mrf.mxu0
    %v6211 = vpop.f32.mrf.mxu0
    %v6212 = vadd.f32 %v6051, %v6211
    %v6213 = vpop.f32.mrf.mxu0
    %6214 = vmatprep.mubr.bf16.mxu0 %v5645
    %6215 = vmatmul.mubr.bf16.gmra.mxu0 %v5644
    %v6216 = vpop.f32.mrf.mxu0
    %v6217 = vadd.f32 %v6056, %v6216
    %v6218 = vpop.f32.mrf.mxu0
    %v6219 = vpop.f32.mrf.mxu0
    %v6220 = vadd.f32 %v6059, %v6219
    %v6221 = vpop.f32.mrf.mxu0
    %6222 = vmatprep.mubr.bf16.mxu0 %v5649
    %6223 = vmatmul.mubr.bf16.gmra.mxu0 %v5648
    %v6224 = vpop.f32.mrf.mxu0
    %v6225 = vadd.f32 %v6064, %v6224
    %v6226 = vpop.f32.mrf.mxu0
    %v6227 = vpop.f32.mrf.mxu0
    %v6228 = vadd.f32 %v6067, %v6227
    %v6229 = vpop.f32.mrf.mxu0
    %6230 = vmatprep.mubr.bf16.mxu0 %v5653
    %6231 = vmatmul.mubr.bf16.gmra.mxu0 %v5652
    %v6232 = vpop.f32.mrf.mxu0
    %v6233 = vadd.f32 %v6072, %v6232
    %v6234 = vpop.f32.mrf.mxu0
    %v6235 = vpop.f32.mrf.mxu0
    %v6236 = vadd.f32 %v6075, %v6235
    %v6237 = vpop.f32.mrf.mxu0
    %6238 = vdwg.mxu0
    %6239 = vst [vmem:[#allocation11] sm:$0xff] %v6113
    %6240 = vst [vmem:[#allocation11 + $0x8] sm:$0xff] %v6116
    %6241 = vst [vmem:[#allocation11 + $0x10] sm:$0xff] %v6121
    %6242 = vst [vmem:[#allocation11 + $0x18] sm:$0xff] %v6124
    %6243 = vst [vmem:[#allocation11 + $0x20] sm:$0xff] %v6129
    %6244 = vst [vmem:[#allocation11 + $0x28] sm:$0xff] %v6132
    %6245 = vst [vmem:[#allocation11 + $0x30] sm:$0xff] %v6137
    %6246 = vst [vmem:[#allocation11 + $0x38] sm:$0xff] %v6140
    %6247 = vst [vmem:[#allocation11 + $0x40] sm:$0xff] %v6145
    %6248 = vst [vmem:[#allocation11 + $0x48] sm:$0xff] %v6148
    %6249 = vst [vmem:[#allocation11 + $0x50] sm:$0xff] %v6153
    %6250 = vst [vmem:[#allocation11 + $0x58] sm:$0xff] %v6156
    %6251 = vst [vmem:[#allocation11 + $0x60] sm:$0xff] %v6161
    %6252 = vst [vmem:[#allocation11 + $0x68] sm:$0xff] %v6164
    %6253 = vst [vmem:[#allocation11 + $0x70] sm:$0xff] %v6169
    %6254 = vst [vmem:[#allocation11 + $0x78] sm:$0xff] %v6172
    %6255 = vst [vmem:[#allocation11 + $0x80] sm:$0xff] %v6177
    %6256 = vst [vmem:[#allocation11 + $0x88] sm:$0xff] %v6180
    %6257 = vst [vmem:[#allocation11 + $0x90] sm:$0xff] %v6185
    %6258 = vst [vmem:[#allocation11 + $0x98] sm:$0xff] %v6188
    %6259 = vst [vmem:[#allocation11 + $0xa0] sm:$0xff] %v6193
    %6260 = vst [vmem:[#allocation11 + $0xa8] sm:$0xff] %v6196
    %6261 = vst [vmem:[#allocation11 + $0xb0] sm:$0xff] %v6201
    %6262 = vst [vmem:[#allocation11 + $0xb8] sm:$0xff] %v6204
    %6263 = vst [vmem:[#allocation11 + $0xc0] sm:$0xff] %v6209
    %6264 = vst [vmem:[#allocation11 + $0xc8] sm:$0xff] %v6212
    %6265 = vst [vmem:[#allocation11 + $0xd0] sm:$0xff] %v6217
    %6266 = vst [vmem:[#allocation11 + $0xd8] sm:$0xff] %v6220
    %6267 = vst [vmem:[#allocation11 + $0xe0] sm:$0xff] %v6225
    %6268 = vst [vmem:[#allocation11 + $0xe8] sm:$0xff] %v6228
    %6269 = vst [vmem:[#allocation11 + $0xf0] sm:$0xff] %v6233
    %6270 = vst [vmem:[#allocation11 + $0xf8] sm:$0xff] %v6236
    // Predicated region
    $region50: #{tpu_custom_call.1} parent=1 // pred_check
      _
    $region51: #{tpu_custom_call.1} parent=1 // pred_check_branch
      %6272 = sbr.rel (0) target = $region53
    $region52: #{tpu_custom_call.1} parent=1 // pred_region
      %s6274 = ssub.s32 4096, 4096
      %6275 = vsyncadd [#allocation4], %s6274
      %s6276 = sshll.u32 [#allocation11], 4
      %s6277 = int_to_ptr.vmem [resolvable:$true] %s6276
      %6282 = dma.vmem_to_hbm [thread:$0]  %s6277, 4096, %s7, [#allocation4], 128, 128, 8
    $region53: #{tpu_custom_call.1} parent=1 // pred_fallthru
      _
    // Predicated region
    $region54: #{tpu_custom_call.1} parent=1 // pred_check
      _
    $region55: #{tpu_custom_call.1} parent=1 // pred_check_branch
      %6284 = sbr.rel (0) target = $region57
    $region56: #{tpu_custom_call.1} parent=1 // pred_region
      %6285 = dma.done [#allocation4], 4096
    $region57: #{tpu_custom_call.1} parent=1 // pred_fallthru
      _
    %6286 = vsyncpa [#allocation3], 1
    %6287 = vsyncpa [#allocation6], 1
    %6288 = vsyncpa [#allocation9], 1
    %6289 = vsyncpa [#allocation4], 1

</llo_original>
